<compile_context>
chip_gen: v7x
topology: tpu7x:2x2x1
jax: 0.10.0
libtpu: 0.0.40
codegen_flags: <defaults>
</compile_context>

<pallas_src>
import functools

import jax
import jax.numpy as jnp
from jax.experimental import pallas as pl
from jax.experimental.pallas import tpu as pltpu


def _input_proj_kernel(x_ref, wih_ref, bias_ref, gi_ref):
    """gi[t, g] = x[t] @ W_ih[g] + (b_i[g] + folded b_h[g]) for all t in the block.

    x_ref   : (T_BLK, B, V) bf16
    wih_ref : (3, V, H)     bf16   (resident, constant index_map)
    bias_ref: (3, 1, H)     f32    (b_ir+b_hr, b_iz+b_hz, b_in)
    gi_ref  : (T_BLK, 3, B, H) f32
    """
    t_blk = x_ref.shape[0]
    # Hoist per-gate weight/bias loads out of the timestep loop.
    w_gates = [wih_ref[g] for g in range(3)]
    b_gates = [bias_ref[g] for g in range(3)]
    for t in range(t_blk):                      # static, fully unrolled
        x_t = x_ref[t]                          # (B, V) bf16
        for g in range(3):
            gi_ref[t, g] = (
                jnp.dot(x_t, w_gates[g], preferred_element_type=jnp.float32)
                + b_gates[g]
            )


def _gru_recurrent_kernel(gi_ref, whh_ref, bhn_ref, out_ref, h_scratch):
    """Sequential GRU recurrence over one block of T_BLK timesteps.

    gi_ref   : (T_BLK, 3, B, H) f32  precomputed input projections (+ folded biases)
    whh_ref  : (3, H, H)        bf16 recurrent weights, resident across the grid
    bhn_ref  : (1, H)           f32  hidden-side bias of the n gate
    out_ref  : (T_BLK, B, H)    f32  hidden state at every timestep of the block
    h_scratch: (B, H)           f32  carried hidden state (VMEM, persists over grid)
    """
    blk = pl.program_id(0)

    @pl.when(blk == 0)
    def _():
        h_scratch[...] = jnp.zeros_like(h_scratch)

    # Hoisted loads / broadcasts (kept off the serialized per-step path).
    w_r = whh_ref[0]
    w_z = whh_ref[1]
    w_n = whh_ref[2]
    b_hn = jnp.broadcast_to(bhn_ref[...], h_scratch.shape)   # (B, H)

    t_blk = out_ref.shape[0]

    def step(t, h):
        gi_t = gi_ref[t]                                     # (3, B, H) f32
        h_bf = h.astype(jnp.bfloat16)
        gh_r = jnp.dot(h_bf, w_r, preferred_element_type=jnp.float32)
        gh_z = jnp.dot(h_bf, w_z, preferred_element_type=jnp.float32)
        gh_n = jnp.dot(h_bf, w_n, preferred_element_type=jnp.float32)
        r = jax.nn.sigmoid(gi_t[0] + gh_r)
        z = jax.nn.sigmoid(gi_t[1] + gh_z)
        n = jnp.tanh(gi_t[2] + r * (gh_n + b_hn))
        h_new = n + z * (h - n)                              # == (1 - z)*n + z*h
        out_ref[t] = h_new
        return h_new

    h_scratch[...] = jax.lax.fori_loop(0, t_blk, step, h_scratch[...], unroll=True)


@functools.partial(jax.jit, static_argnames=("t_blk",))
def encoder_forward(vid_feats, params, t_blk=8):
    """vid_feats: (B, N, V) float32.  Returns ((B, N, H), (1, B, H))."""
    B, N, V = vid_feats.shape
    w_ih, w_hh, b_ih, b_hh = params          # (V,3H), (H,3H), (1,3H), (1,3H)
    H = w_hh.shape[0]

    # --- per-gate layout (gate axis leading), bf16 weights (f32 accumulate) ---
    w_ih_g = jnp.transpose(w_ih.reshape(V, 3, H), (1, 0, 2)).astype(jnp.bfloat16)  # (3,V,H)
    w_hh_g = jnp.transpose(w_hh.reshape(H, 3, H), (1, 0, 2)).astype(jnp.bfloat16)  # (3,H,H)
    b_i = b_ih.reshape(1, 3, H)
    b_h = b_hh.reshape(1, 3, H)
    # r / z hidden biases fold into the (time-parallel) input projection;
    # b_hn must stay inside r * (.) so it is passed to the recurrent kernel.
    b_proj = jnp.stack(
        [b_i[:, 0] + b_h[:, 0], b_i[:, 1] + b_h[:, 1], b_i[:, 2]], axis=0
    ).astype(jnp.float32)                                                          # (3,1,H)
    b_hn = b_h[:, 2].astype(jnp.float32)                                           # (1,H)

    # --- time-major bf16 activations, pad time axis to a multiple of t_blk ---
    t_blk = max(1, min(t_blk, N))
    x_tm = jnp.transpose(vid_feats, (1, 0, 2)).astype(jnp.bfloat16)                # (N,B,V)
    pad = (-N) % t_blk
    if pad:
        x_tm = jnp.pad(x_tm, ((0, pad), (0, 0), (0, 0)))
    n_pad = N + pad
    n_blocks = n_pad // t_blk

    # Explicit VMEM headroom (above the 32 MiB default scoped limit); for very
    # large V on v7x, W_ih should additionally be tiled over a K grid axis.
    vmem_limit = 64 * 1024 * 1024

    # ---------------- Stage 1: time-parallel input projection -----------------
    gi = pl.pallas_call(
        _input_proj_kernel,
        out_shape=jax.ShapeDtypeStruct((n_pad, 3, B, H), jnp.float32),
        grid_spec=pltpu.PrefetchScalarGridSpec(
            num_scalar_prefetch=0,
            grid=(n_blocks,),
            in_specs=[
                pl.BlockSpec((t_blk, B, V), lambda i: (i, 0, 0)),     # x block
                pl.BlockSpec((3, V, H), lambda i: (0, 0, 0)),         # W_ih (resident)
                pl.BlockSpec((3, 1, H), lambda i: (0, 0, 0)),         # folded bias
            ],
            out_specs=pl.BlockSpec((t_blk, 3, B, H), lambda i: (i, 0, 0, 0)),
        ),
        compiler_params=pltpu.CompilerParams(
            dimension_semantics=("parallel",),
            vmem_limit_bytes=vmem_limit,
        ),
    )(x_tm, w_ih_g, b_proj)

    # ---------------- Stage 2: sequential GRU recurrence ----------------------
    outs_tm = pl.pallas_call(
        _gru_recurrent_kernel,
        out_shape=jax.ShapeDtypeStruct((n_pad, B, H), jnp.float32),
        grid_spec=pltpu.PrefetchScalarGridSpec(
            num_scalar_prefetch=0,
            grid=(n_blocks,),
            in_specs=[
                pl.BlockSpec((t_blk, 3, B, H), lambda i: (i, 0, 0, 0)),  # gi block
                pl.BlockSpec((3, H, H), lambda i: (0, 0, 0)),            # W_hh (resident)
                pl.BlockSpec((1, H), lambda i: (0, 0)),                  # b_hn
            ],
            out_specs=pl.BlockSpec((t_blk, B, H), lambda i: (i, 0, 0)),
            scratch_shapes=[pltpu.VMEM((B, H), jnp.float32)],            # carried h
        ),
        compiler_params=pltpu.CompilerParams(
            dimension_semantics=("arbitrary",),   # recurrence: strictly sequential
            vmem_limit_bytes=vmem_limit,
        ),
    )(gi, w_hh_g, b_hn)

    encoder_final = outs_tm[N - 1:N]                        # (1, B, H)
    encoder_outs = jnp.transpose(outs_tm[:N], (1, 0, 2))    # (B, N, H)
    return encoder_outs, encoder_final


def _reference_gru(vid_feats, params):
    """Pure-JAX f32 reference (lax.scan) with identical PyTorch GRU semantics."""
    w_ih, w_hh, b_ih, b_hh = params
    H = w_hh.shape[0]
    x_tm = jnp.transpose(vid_feats, (1, 0, 2))
    B = x_tm.shape[1]

    def step(h, x):
        gi = x @ w_ih + b_ih
        gh = h @ w_hh + b_hh
        i_r, i_z, i_n = gi[:, :H], gi[:, H:2 * H], gi[:, 2 * H:]
        h_r, h_z, h_n = gh[:, :H], gh[:, H:2 * H], gh[:, 2 * H:]
        r = jax.nn.sigmoid(i_r + h_r)
        z = jax.nn.sigmoid(i_z + h_z)
        n = jnp.tanh(i_n + r * h_n)
        h_new = (1.0 - z) * n + z * h
        return h_new, h_new

    h0 = jnp.zeros((B, H), jnp.float32)
    h_last, outs = jax.lax.scan(step, h0, x_tm)
    return jnp.transpose(outs, (1, 0, 2)), h_last[None]


def init_params(key, input_size, hidden_size):
    """Deterministic init matching PyTorch GRU param shapes (gate order r,z,n)."""
    k = 1.0 / jnp.sqrt(hidden_size)
    k1, k2, k3, k4 = jax.random.split(key, 4)
    # PyTorch stores (3H, V)/(3H, H); we pre-transpose for x @ W in the kernel.
    w_ih = jax.random.uniform(k1, (input_size, 3 * hidden_size), jnp.float32, -k, k)
    w_hh = jax.random.uniform(k2, (hidden_size, 3 * hidden_size), jnp.float32, -k, k)
    b_ih = jax.random.uniform(k3, (1, 3 * hidden_size), jnp.float32, -k, k)
    b_hh = jax.random.uniform(k4, (1, 3 * hidden_size), jnp.float32, -k, k)
    return w_ih, w_hh, b_ih, b_hh


if __name__ == "__main__":
    B, N, V, H = 2, 8, 16, 32
    key = jax.random.PRNGKey(0)
    k_x, k_p = jax.random.split(key)
    vid_feats = jax.random.normal(k_x, (B, N, V), jnp.float32)
    params = init_params(k_p, V, H)

    encoder_outs, encoder_final = jax.block_until_ready(
        encoder_forward(vid_feats, params))

    ref_outs, ref_final = _reference_gru(vid_feats, params)
    assert encoder_outs.shape == (B, N, H)
    assert encoder_final.shape == (1, B, H)
    # bf16 weights/activations on the MXU (f32 accumulate) vs pure-f32 reference.
    assert jnp.allclose(encoder_outs, ref_outs, atol=2e-2, rtol=2e-2)
    assert jnp.allclose(encoder_final, ref_final, atol=2e-2, rtol=2e-2)
    print("KERNEL_OK")
</pallas_src>

<mosaic_0001>
module attributes {stable_mosaic.version = 11 : i64} {
  func.func @_input_proj_kernel(%arg0: i32, %arg1: memref<8x2x16xbf16, #tpu.memory_space<vmem>>, %arg2: memref<3x16x32xbf16, #tpu.memory_space<vmem>>, %arg3: memref<3x1x32xf32, #tpu.memory_space<vmem>>, %arg4: memref<8x3x2x32xf32, #tpu.memory_space<vmem>>) attributes {dimension_semantics = [#tpu.dimension_semantics<parallel>], iteration_bounds = array<i64: 1>, scalar_prefetch = 0 : i64, scratch_operands = 0 : i64, tpu.core_type = #tpu.core_type<tc>, window_params = [{transform_indices = @transform_0, window_bounds = array<i64: 8, 2, 16>}, {pipeline_mode = #tpu.pipeline_mode<synchronous>, transform_indices = @transform_1, window_bounds = array<i64: 3, 16, 32>}, {pipeline_mode = #tpu.pipeline_mode<synchronous>, transform_indices = @transform_2, window_bounds = array<i64: 3, 1, 32>}, {transform_indices = @transform_3, window_bounds = array<i64: 8, 3, 2, 32>}]} {
    %c0 = arith.constant 0 : index
    %c0_0 = arith.constant 0 : index
    %c0_1 = arith.constant 0 : index
    %0 = vector.load %arg2[%c0, %c0_0, %c0_1] : memref<3x16x32xbf16, #tpu.memory_space<vmem>>, vector<1x16x32xbf16>
    %1 = vector.shape_cast %0 : vector<1x16x32xbf16> to vector<16x32xbf16>
    %c1 = arith.constant 1 : index
    %c0_2 = arith.constant 0 : index
    %c0_3 = arith.constant 0 : index
    %2 = vector.load %arg2[%c1, %c0_2, %c0_3] : memref<3x16x32xbf16, #tpu.memory_space<vmem>>, vector<1x16x32xbf16>
    %3 = vector.shape_cast %2 : vector<1x16x32xbf16> to vector<16x32xbf16>
    %c2 = arith.constant 2 : index
    %c0_4 = arith.constant 0 : index
    %c0_5 = arith.constant 0 : index
    %4 = vector.load %arg2[%c2, %c0_4, %c0_5] : memref<3x16x32xbf16, #tpu.memory_space<vmem>>, vector<1x16x32xbf16>
    %5 = vector.shape_cast %4 : vector<1x16x32xbf16> to vector<16x32xbf16>
    %c0_6 = arith.constant 0 : index
    %c0_7 = arith.constant 0 : index
    %c0_8 = arith.constant 0 : index
    %6 = vector.load %arg3[%c0_6, %c0_7, %c0_8] : memref<3x1x32xf32, #tpu.memory_space<vmem>>, vector<1x1x32xf32>
    %7 = vector.shape_cast %6 : vector<1x1x32xf32> to vector<1x32xf32>
    %c1_9 = arith.constant 1 : index
    %c0_10 = arith.constant 0 : index
    %c0_11 = arith.constant 0 : index
    %8 = vector.load %arg3[%c1_9, %c0_10, %c0_11] : memref<3x1x32xf32, #tpu.memory_space<vmem>>, vector<1x1x32xf32>
    %9 = vector.shape_cast %8 : vector<1x1x32xf32> to vector<1x32xf32>
    %c2_12 = arith.constant 2 : index
    %c0_13 = arith.constant 0 : index
    %c0_14 = arith.constant 0 : index
    %10 = vector.load %arg3[%c2_12, %c0_13, %c0_14] : memref<3x1x32xf32, #tpu.memory_space<vmem>>, vector<1x1x32xf32>
    %11 = vector.shape_cast %10 : vector<1x1x32xf32> to vector<1x32xf32>
    %c0_15 = arith.constant 0 : index
    %c0_16 = arith.constant 0 : index
    %c0_17 = arith.constant 0 : index
    %12 = vector.load %arg1[%c0_15, %c0_16, %c0_17] : memref<8x2x16xbf16, #tpu.memory_space<vmem>>, vector<1x2x16xbf16>
    %13 = vector.shape_cast %12 : vector<1x2x16xbf16> to vector<2x16xbf16>
    %cst = arith.constant dense<0.000000e+00> : vector<2x32xf32>
    %14 = tpu.matmul %13, %1, %cst {dimension_numbers = #tpu.dot_dimension_numbers<[1], [0], [0], [1], [0, 0, 1, 1], [], []>} : vector<2x16xbf16>, vector<16x32xbf16>, vector<2x32xf32> -> vector<2x32xf32>
    %15 = vector.broadcast %7 : vector<1x32xf32> to vector<2x32xf32>
    %16 = arith.addf %14, %15 : vector<2x32xf32>
    %c0_18 = arith.constant 0 : index
    %c0_19 = arith.constant 0 : index
    %c0_20 = arith.constant 0 : index
    %c0_21 = arith.constant 0 : index
    %17 = vector.load %arg4[%c0_18, %c0_19, %c0_20, %c0_21] : memref<8x3x2x32xf32, #tpu.memory_space<vmem>>, vector<1x1x2x32xf32>
    %18 = vector.shape_cast %17 : vector<1x1x2x32xf32> to vector<2x32xf32>
    %19 = vector.shape_cast %16 : vector<2x32xf32> to vector<1x1x2x32xf32>
    tpu.vector_store %arg4[%c0_18, %c0_19, %c0_20, %c0_21], %19 {strides = array<i32>} : memref<8x3x2x32xf32, #tpu.memory_space<vmem>>, vector<1x1x2x32xf32>,
    %cst_22 = arith.constant dense<0.000000e+00> : vector<2x32xf32>
    %20 = tpu.matmul %13, %3, %cst_22 {dimension_numbers = #tpu.dot_dimension_numbers<[1], [0], [0], [1], [0, 0, 1, 1], [], []>} : vector<2x16xbf16>, vector<16x32xbf16>, vector<2x32xf32> -> vector<2x32xf32>
    %21 = vector.broadcast %9 : vector<1x32xf32> to vector<2x32xf32>
    %22 = arith.addf %20, %21 : vector<2x32xf32>
    %c0_23 = arith.constant 0 : index
    %c1_24 = arith.constant 1 : index
    %c0_25 = arith.constant 0 : index
    %c0_26 = arith.constant 0 : index
    %23 = vector.load %arg4[%c0_23, %c1_24, %c0_25, %c0_26] : memref<8x3x2x32xf32, #tpu.memory_space<vmem>>, vector<1x1x2x32xf32>
    %24 = vector.shape_cast %23 : vector<1x1x2x32xf32> to vector<2x32xf32>
    %25 = vector.shape_cast %22 : vector<2x32xf32> to vector<1x1x2x32xf32>
    tpu.vector_store %arg4[%c0_23, %c1_24, %c0_25, %c0_26], %25 {strides = array<i32>} : memref<8x3x2x32xf32, #tpu.memory_space<vmem>>, vector<1x1x2x32xf32>,
    %cst_27 = arith.constant dense<0.000000e+00> : vector<2x32xf32>
    %26 = tpu.matmul %13, %5, %cst_27 {dimension_numbers = #tpu.dot_dimension_numbers<[1], [0], [0], [1], [0, 0, 1, 1], [], []>} : vector<2x16xbf16>, vector<16x32xbf16>, vector<2x32xf32> -> vector<2x32xf32>
    %27 = vector.broadcast %11 : vector<1x32xf32> to vector<2x32xf32>
    %28 = arith.addf %26, %27 : vector<2x32xf32>
    %c0_28 = arith.constant 0 : index
    %c2_29 = arith.constant 2 : index
    %c0_30 = arith.constant 0 : index
    %c0_31 = arith.constant 0 : index
    %29 = vector.load %arg4[%c0_28, %c2_29, %c0_30, %c0_31] : memref<8x3x2x32xf32, #tpu.memory_space<vmem>>, vector<1x1x2x32xf32>
    %30 = vector.shape_cast %29 : vector<1x1x2x32xf32> to vector<2x32xf32>
    %31 = vector.shape_cast %28 : vector<2x32xf32> to vector<1x1x2x32xf32>
    tpu.vector_store %arg4[%c0_28, %c2_29, %c0_30, %c0_31], %31 {strides = array<i32>} : memref<8x3x2x32xf32, #tpu.memory_space<vmem>>, vector<1x1x2x32xf32>,
    %c1_32 = arith.constant 1 : index
    %c0_33 = arith.constant 0 : index
    %c0_34 = arith.constant 0 : index
    %32 = vector.load %arg1[%c1_32, %c0_33, %c0_34] : memref<8x2x16xbf16, #tpu.memory_space<vmem>>, vector<1x2x16xbf16>
    %33 = vector.shape_cast %32 : vector<1x2x16xbf16> to vector<2x16xbf16>
    %cst_35 = arith.constant dense<0.000000e+00> : vector<2x32xf32>
    %34 = tpu.matmul %33, %1, %cst_35 {dimension_numbers = #tpu.dot_dimension_numbers<[1], [0], [0], [1], [0, 0, 1, 1], [], []>} : vector<2x16xbf16>, vector<16x32xbf16>, vector<2x32xf32> -> vector<2x32xf32>
    %35 = vector.broadcast %7 : vector<1x32xf32> to vector<2x32xf32>
    %36 = arith.addf %34, %35 : vector<2x32xf32>
    %c1_36 = arith.constant 1 : index
    %c0_37 = arith.constant 0 : index
    %c0_38 = arith.constant 0 : index
    %c0_39 = arith.constant 0 : index
    %37 = vector.load %arg4[%c1_36, %c0_37, %c0_38, %c0_39] : memref<8x3x2x32xf32, #tpu.memory_space<vmem>>, vector<1x1x2x32xf32>
    %38 = vector.shape_cast %37 : vector<1x1x2x32xf32> to vector<2x32xf32>
    %39 = vector.shape_cast %36 : vector<2x32xf32> to vector<1x1x2x32xf32>
    tpu.vector_store %arg4[%c1_36, %c0_37, %c0_38, %c0_39], %39 {strides = array<i32>} : memref<8x3x2x32xf32, #tpu.memory_space<vmem>>, vector<1x1x2x32xf32>,
    %cst_40 = arith.constant dense<0.000000e+00> : vector<2x32xf32>
    %40 = tpu.matmul %33, %3, %cst_40 {dimension_numbers = #tpu.dot_dimension_numbers<[1], [0], [0], [1], [0, 0, 1, 1], [], []>} : vector<2x16xbf16>, vector<16x32xbf16>, vector<2x32xf32> -> vector<2x32xf32>
    %41 = vector.broadcast %9 : vector<1x32xf32> to vector<2x32xf32>
    %42 = arith.addf %40, %41 : vector<2x32xf32>
    %c1_41 = arith.constant 1 : index
    %c1_42 = arith.constant 1 : index
    %c0_43 = arith.constant 0 : index
    %c0_44 = arith.constant 0 : index
    %43 = vector.load %arg4[%c1_41, %c1_42, %c0_43, %c0_44] : memref<8x3x2x32xf32, #tpu.memory_space<vmem>>, vector<1x1x2x32xf32>
    %44 = vector.shape_cast %43 : vector<1x1x2x32xf32> to vector<2x32xf32>
    %45 = vector.shape_cast %42 : vector<2x32xf32> to vector<1x1x2x32xf32>
    tpu.vector_store %arg4[%c1_41, %c1_42, %c0_43, %c0_44], %45 {strides = array<i32>} : memref<8x3x2x32xf32, #tpu.memory_space<vmem>>, vector<1x1x2x32xf32>,
    %cst_45 = arith.constant dense<0.000000e+00> : vector<2x32xf32>
    %46 = tpu.matmul %33, %5, %cst_45 {dimension_numbers = #tpu.dot_dimension_numbers<[1], [0], [0], [1], [0, 0, 1, 1], [], []>} : vector<2x16xbf16>, vector<16x32xbf16>, vector<2x32xf32> -> vector<2x32xf32>
    %47 = vector.broadcast %11 : vector<1x32xf32> to vector<2x32xf32>
    %48 = arith.addf %46, %47 : vector<2x32xf32>
    %c1_46 = arith.constant 1 : index
    %c2_47 = arith.constant 2 : index
    %c0_48 = arith.constant 0 : index
    %c0_49 = arith.constant 0 : index
    %49 = vector.load %arg4[%c1_46, %c2_47, %c0_48, %c0_49] : memref<8x3x2x32xf32, #tpu.memory_space<vmem>>, vector<1x1x2x32xf32>
    %50 = vector.shape_cast %49 : vector<1x1x2x32xf32> to vector<2x32xf32>
    %51 = vector.shape_cast %48 : vector<2x32xf32> to vector<1x1x2x32xf32>
    tpu.vector_store %arg4[%c1_46, %c2_47, %c0_48, %c0_49], %51 {strides = array<i32>} : memref<8x3x2x32xf32, #tpu.memory_space<vmem>>, vector<1x1x2x32xf32>,
    %c2_50 = arith.constant 2 : index
    %c0_51 = arith.constant 0 : index
    %c0_52 = arith.constant 0 : index
    %52 = vector.load %arg1[%c2_50, %c0_51, %c0_52] : memref<8x2x16xbf16, #tpu.memory_space<vmem>>, vector<1x2x16xbf16>
    %53 = vector.shape_cast %52 : vector<1x2x16xbf16> to vector<2x16xbf16>
    %cst_53 = arith.constant dense<0.000000e+00> : vector<2x32xf32>
    %54 = tpu.matmul %53, %1, %cst_53 {dimension_numbers = #tpu.dot_dimension_numbers<[1], [0], [0], [1], [0, 0, 1, 1], [], []>} : vector<2x16xbf16>, vector<16x32xbf16>, vector<2x32xf32> -> vector<2x32xf32>
    %55 = vector.broadcast %7 : vector<1x32xf32> to vector<2x32xf32>
    %56 = arith.addf %54, %55 : vector<2x32xf32>
    %c2_54 = arith.constant 2 : index
    %c0_55 = arith.constant 0 : index
    %c0_56 = arith.constant 0 : index
    %c0_57 = arith.constant 0 : index
    %57 = vector.load %arg4[%c2_54, %c0_55, %c0_56, %c0_57] : memref<8x3x2x32xf32, #tpu.memory_space<vmem>>, vector<1x1x2x32xf32>
    %58 = vector.shape_cast %57 : vector<1x1x2x32xf32> to vector<2x32xf32>
    %59 = vector.shape_cast %56 : vector<2x32xf32> to vector<1x1x2x32xf32>
    tpu.vector_store %arg4[%c2_54, %c0_55, %c0_56, %c0_57], %59 {strides = array<i32>} : memref<8x3x2x32xf32, #tpu.memory_space<vmem>>, vector<1x1x2x32xf32>,
    %cst_58 = arith.constant dense<0.000000e+00> : vector<2x32xf32>
    %60 = tpu.matmul %53, %3, %cst_58 {dimension_numbers = #tpu.dot_dimension_numbers<[1], [0], [0], [1], [0, 0, 1, 1], [], []>} : vector<2x16xbf16>, vector<16x32xbf16>, vector<2x32xf32> -> vector<2x32xf32>
    %61 = vector.broadcast %9 : vector<1x32xf32> to vector<2x32xf32>
    %62 = arith.addf %60, %61 : vector<2x32xf32>
    %c2_59 = arith.constant 2 : index
    %c1_60 = arith.constant 1 : index
    %c0_61 = arith.constant 0 : index
    %c0_62 = arith.constant 0 : index
    %63 = vector.load %arg4[%c2_59, %c1_60, %c0_61, %c0_62] : memref<8x3x2x32xf32, #tpu.memory_space<vmem>>, vector<1x1x2x32xf32>
    %64 = vector.shape_cast %63 : vector<1x1x2x32xf32> to vector<2x32xf32>
    %65 = vector.shape_cast %62 : vector<2x32xf32> to vector<1x1x2x32xf32>
    tpu.vector_store %arg4[%c2_59, %c1_60, %c0_61, %c0_62], %65 {strides = array<i32>} : memref<8x3x2x32xf32, #tpu.memory_space<vmem>>, vector<1x1x2x32xf32>,
    %cst_63 = arith.constant dense<0.000000e+00> : vector<2x32xf32>
    %66 = tpu.matmul %53, %5, %cst_63 {dimension_numbers = #tpu.dot_dimension_numbers<[1], [0], [0], [1], [0, 0, 1, 1], [], []>} : vector<2x16xbf16>, vector<16x32xbf16>, vector<2x32xf32> -> vector<2x32xf32>
    %67 = vector.broadcast %11 : vector<1x32xf32> to vector<2x32xf32>
    %68 = arith.addf %66, %67 : vector<2x32xf32>
    %c2_64 = arith.constant 2 : index
    %c2_65 = arith.constant 2 : index
    %c0_66 = arith.constant 0 : index
    %c0_67 = arith.constant 0 : index
    %69 = vector.load %arg4[%c2_64, %c2_65, %c0_66, %c0_67] : memref<8x3x2x32xf32, #tpu.memory_space<vmem>>, vector<1x1x2x32xf32>
    %70 = vector.shape_cast %69 : vector<1x1x2x32xf32> to vector<2x32xf32>
    %71 = vector.shape_cast %68 : vector<2x32xf32> to vector<1x1x2x32xf32>
    tpu.vector_store %arg4[%c2_64, %c2_65, %c0_66, %c0_67], %71 {strides = array<i32>} : memref<8x3x2x32xf32, #tpu.memory_space<vmem>>, vector<1x1x2x32xf32>,
    %c3 = arith.constant 3 : index
    %c0_68 = arith.constant 0 : index
    %c0_69 = arith.constant 0 : index
    %72 = vector.load %arg1[%c3, %c0_68, %c0_69] : memref<8x2x16xbf16, #tpu.memory_space<vmem>>, vector<1x2x16xbf16>
    %73 = vector.shape_cast %72 : vector<1x2x16xbf16> to vector<2x16xbf16>
    %cst_70 = arith.constant dense<0.000000e+00> : vector<2x32xf32>
    %74 = tpu.matmul %73, %1, %cst_70 {dimension_numbers = #tpu.dot_dimension_numbers<[1], [0], [0], [1], [0, 0, 1, 1], [], []>} : vector<2x16xbf16>, vector<16x32xbf16>, vector<2x32xf32> -> vector<2x32xf32>
    %75 = vector.broadcast %7 : vector<1x32xf32> to vector<2x32xf32>
    %76 = arith.addf %74, %75 : vector<2x32xf32>
    %c3_71 = arith.constant 3 : index
    %c0_72 = arith.constant 0 : index
    %c0_73 = arith.constant 0 : index
    %c0_74 = arith.constant 0 : index
    %77 = vector.load %arg4[%c3_71, %c0_72, %c0_73, %c0_74] : memref<8x3x2x32xf32, #tpu.memory_space<vmem>>, vector<1x1x2x32xf32>
    %78 = vector.shape_cast %77 : vector<1x1x2x32xf32> to vector<2x32xf32>
    %79 = vector.shape_cast %76 : vector<2x32xf32> to vector<1x1x2x32xf32>
    tpu.vector_store %arg4[%c3_71, %c0_72, %c0_73, %c0_74], %79 {strides = array<i32>} : memref<8x3x2x32xf32, #tpu.memory_space<vmem>>, vector<1x1x2x32xf32>,
    %cst_75 = arith.constant dense<0.000000e+00> : vector<2x32xf32>
    %80 = tpu.matmul %73, %3, %cst_75 {dimension_numbers = #tpu.dot_dimension_numbers<[1], [0], [0], [1], [0, 0, 1, 1], [], []>} : vector<2x16xbf16>, vector<16x32xbf16>, vector<2x32xf32> -> vector<2x32xf32>
    %81 = vector.broadcast %9 : vector<1x32xf32> to vector<2x32xf32>
    %82 = arith.addf %80, %81 : vector<2x32xf32>
    %c3_76 = arith.constant 3 : index
    %c1_77 = arith.constant 1 : index
    %c0_78 = arith.constant 0 : index
    %c0_79 = arith.constant 0 : index
    %83 = vector.load %arg4[%c3_76, %c1_77, %c0_78, %c0_79] : memref<8x3x2x32xf32, #tpu.memory_space<vmem>>, vector<1x1x2x32xf32>
    %84 = vector.shape_cast %83 : vector<1x1x2x32xf32> to vector<2x32xf32>
    %85 = vector.shape_cast %82 : vector<2x32xf32> to vector<1x1x2x32xf32>
    tpu.vector_store %arg4[%c3_76, %c1_77, %c0_78, %c0_79], %85 {strides = array<i32>} : memref<8x3x2x32xf32, #tpu.memory_space<vmem>>, vector<1x1x2x32xf32>,
    %cst_80 = arith.constant dense<0.000000e+00> : vector<2x32xf32>
    %86 = tpu.matmul %73, %5, %cst_80 {dimension_numbers = #tpu.dot_dimension_numbers<[1], [0], [0], [1], [0, 0, 1, 1], [], []>} : vector<2x16xbf16>, vector<16x32xbf16>, vector<2x32xf32> -> vector<2x32xf32>
    %87 = vector.broadcast %11 : vector<1x32xf32> to vector<2x32xf32>
    %88 = arith.addf %86, %87 : vector<2x32xf32>
    %c3_81 = arith.constant 3 : index
    %c2_82 = arith.constant 2 : index
    %c0_83 = arith.constant 0 : index
    %c0_84 = arith.constant 0 : index
    %89 = vector.load %arg4[%c3_81, %c2_82, %c0_83, %c0_84] : memref<8x3x2x32xf32, #tpu.memory_space<vmem>>, vector<1x1x2x32xf32>
    %90 = vector.shape_cast %89 : vector<1x1x2x32xf32> to vector<2x32xf32>
    %91 = vector.shape_cast %88 : vector<2x32xf32> to vector<1x1x2x32xf32>
    tpu.vector_store %arg4[%c3_81, %c2_82, %c0_83, %c0_84], %91 {strides = array<i32>} : memref<8x3x2x32xf32, #tpu.memory_space<vmem>>, vector<1x1x2x32xf32>,
    %c4 = arith.constant 4 : index
    %c0_85 = arith.constant 0 : index
    %c0_86 = arith.constant 0 : index
    %92 = vector.load %arg1[%c4, %c0_85, %c0_86] : memref<8x2x16xbf16, #tpu.memory_space<vmem>>, vector<1x2x16xbf16>
    %93 = vector.shape_cast %92 : vector<1x2x16xbf16> to vector<2x16xbf16>
    %cst_87 = arith.constant dense<0.000000e+00> : vector<2x32xf32>
    %94 = tpu.matmul %93, %1, %cst_87 {dimension_numbers = #tpu.dot_dimension_numbers<[1], [0], [0], [1], [0, 0, 1, 1], [], []>} : vector<2x16xbf16>, vector<16x32xbf16>, vector<2x32xf32> -> vector<2x32xf32>
    %95 = vector.broadcast %7 : vector<1x32xf32> to vector<2x32xf32>
    %96 = arith.addf %94, %95 : vector<2x32xf32>
    %c4_88 = arith.constant 4 : index
    %c0_89 = arith.constant 0 : index
    %c0_90 = arith.constant 0 : index
    %c0_91 = arith.constant 0 : index
    %97 = vector.load %arg4[%c4_88, %c0_89, %c0_90, %c0_91] : memref<8x3x2x32xf32, #tpu.memory_space<vmem>>, vector<1x1x2x32xf32>
    %98 = vector.shape_cast %97 : vector<1x1x2x32xf32> to vector<2x32xf32>
    %99 = vector.shape_cast %96 : vector<2x32xf32> to vector<1x1x2x32xf32>
    tpu.vector_store %arg4[%c4_88, %c0_89, %c0_90, %c0_91], %99 {strides = array<i32>} : memref<8x3x2x32xf32, #tpu.memory_space<vmem>>, vector<1x1x2x32xf32>,
    %cst_92 = arith.constant dense<0.000000e+00> : vector<2x32xf32>
    %100 = tpu.matmul %93, %3, %cst_92 {dimension_numbers = #tpu.dot_dimension_numbers<[1], [0], [0], [1], [0, 0, 1, 1], [], []>} : vector<2x16xbf16>, vector<16x32xbf16>, vector<2x32xf32> -> vector<2x32xf32>
    %101 = vector.broadcast %9 : vector<1x32xf32> to vector<2x32xf32>
    %102 = arith.addf %100, %101 : vector<2x32xf32>
    %c4_93 = arith.constant 4 : index
    %c1_94 = arith.constant 1 : index
    %c0_95 = arith.constant 0 : index
    %c0_96 = arith.constant 0 : index
    %103 = vector.load %arg4[%c4_93, %c1_94, %c0_95, %c0_96] : memref<8x3x2x32xf32, #tpu.memory_space<vmem>>, vector<1x1x2x32xf32>
    %104 = vector.shape_cast %103 : vector<1x1x2x32xf32> to vector<2x32xf32>
    %105 = vector.shape_cast %102 : vector<2x32xf32> to vector<1x1x2x32xf32>
    tpu.vector_store %arg4[%c4_93, %c1_94, %c0_95, %c0_96], %105 {strides = array<i32>} : memref<8x3x2x32xf32, #tpu.memory_space<vmem>>, vector<1x1x2x32xf32>,
    %cst_97 = arith.constant dense<0.000000e+00> : vector<2x32xf32>
    %106 = tpu.matmul %93, %5, %cst_97 {dimension_numbers = #tpu.dot_dimension_numbers<[1], [0], [0], [1], [0, 0, 1, 1], [], []>} : vector<2x16xbf16>, vector<16x32xbf16>, vector<2x32xf32> -> vector<2x32xf32>
    %107 = vector.broadcast %11 : vector<1x32xf32> to vector<2x32xf32>
    %108 = arith.addf %106, %107 : vector<2x32xf32>
    %c4_98 = arith.constant 4 : index
    %c2_99 = arith.constant 2 : index
    %c0_100 = arith.constant 0 : index
    %c0_101 = arith.constant 0 : index
    %109 = vector.load %arg4[%c4_98, %c2_99, %c0_100, %c0_101] : memref<8x3x2x32xf32, #tpu.memory_space<vmem>>, vector<1x1x2x32xf32>
    %110 = vector.shape_cast %109 : vector<1x1x2x32xf32> to vector<2x32xf32>
    %111 = vector.shape_cast %108 : vector<2x32xf32> to vector<1x1x2x32xf32>
    tpu.vector_store %arg4[%c4_98, %c2_99, %c0_100, %c0_101], %111 {strides = array<i32>} : memref<8x3x2x32xf32, #tpu.memory_space<vmem>>, vector<1x1x2x32xf32>,
    %c5 = arith.constant 5 : index
    %c0_102 = arith.constant 0 : index
    %c0_103 = arith.constant 0 : index
    %112 = vector.load %arg1[%c5, %c0_102, %c0_103] : memref<8x2x16xbf16, #tpu.memory_space<vmem>>, vector<1x2x16xbf16>
    %113 = vector.shape_cast %112 : vector<1x2x16xbf16> to vector<2x16xbf16>
    %cst_104 = arith.constant dense<0.000000e+00> : vector<2x32xf32>
    %114 = tpu.matmul %113, %1, %cst_104 {dimension_numbers = #tpu.dot_dimension_numbers<[1], [0], [0], [1], [0, 0, 1, 1], [], []>} : vector<2x16xbf16>, vector<16x32xbf16>, vector<2x32xf32> -> vector<2x32xf32>
    %115 = vector.broadcast %7 : vector<1x32xf32> to vector<2x32xf32>
    %116 = arith.addf %114, %115 : vector<2x32xf32>
    %c5_105 = arith.constant 5 : index
    %c0_106 = arith.constant 0 : index
    %c0_107 = arith.constant 0 : index
    %c0_108 = arith.constant 0 : index
    %117 = vector.load %arg4[%c5_105, %c0_106, %c0_107, %c0_108] : memref<8x3x2x32xf32, #tpu.memory_space<vmem>>, vector<1x1x2x32xf32>
    %118 = vector.shape_cast %117 : vector<1x1x2x32xf32> to vector<2x32xf32>
    %119 = vector.shape_cast %116 : vector<2x32xf32> to vector<1x1x2x32xf32>
    tpu.vector_store %arg4[%c5_105, %c0_106, %c0_107, %c0_108], %119 {strides = array<i32>} : memref<8x3x2x32xf32, #tpu.memory_space<vmem>>, vector<1x1x2x32xf32>,
    %cst_109 = arith.constant dense<0.000000e+00> : vector<2x32xf32>
    %120 = tpu.matmul %113, %3, %cst_109 {dimension_numbers = #tpu.dot_dimension_numbers<[1], [0], [0], [1], [0, 0, 1, 1], [], []>} : vector<2x16xbf16>, vector<16x32xbf16>, vector<2x32xf32> -> vector<2x32xf32>
    %121 = vector.broadcast %9 : vector<1x32xf32> to vector<2x32xf32>
    %122 = arith.addf %120, %121 : vector<2x32xf32>
    %c5_110 = arith.constant 5 : index
    %c1_111 = arith.constant 1 : index
    %c0_112 = arith.constant 0 : index
    %c0_113 = arith.constant 0 : index
    %123 = vector.load %arg4[%c5_110, %c1_111, %c0_112, %c0_113] : memref<8x3x2x32xf32, #tpu.memory_space<vmem>>, vector<1x1x2x32xf32>
    %124 = vector.shape_cast %123 : vector<1x1x2x32xf32> to vector<2x32xf32>
    %125 = vector.shape_cast %122 : vector<2x32xf32> to vector<1x1x2x32xf32>
    tpu.vector_store %arg4[%c5_110, %c1_111, %c0_112, %c0_113], %125 {strides = array<i32>} : memref<8x3x2x32xf32, #tpu.memory_space<vmem>>, vector<1x1x2x32xf32>,
    %cst_114 = arith.constant dense<0.000000e+00> : vector<2x32xf32>
    %126 = tpu.matmul %113, %5, %cst_114 {dimension_numbers = #tpu.dot_dimension_numbers<[1], [0], [0], [1], [0, 0, 1, 1], [], []>} : vector<2x16xbf16>, vector<16x32xbf16>, vector<2x32xf32> -> vector<2x32xf32>
    %127 = vector.broadcast %11 : vector<1x32xf32> to vector<2x32xf32>
    %128 = arith.addf %126, %127 : vector<2x32xf32>
    %c5_115 = arith.constant 5 : index
    %c2_116 = arith.constant 2 : index
    %c0_117 = arith.constant 0 : index
    %c0_118 = arith.constant 0 : index
    %129 = vector.load %arg4[%c5_115, %c2_116, %c0_117, %c0_118] : memref<8x3x2x32xf32, #tpu.memory_space<vmem>>, vector<1x1x2x32xf32>
    %130 = vector.shape_cast %129 : vector<1x1x2x32xf32> to vector<2x32xf32>
    %131 = vector.shape_cast %128 : vector<2x32xf32> to vector<1x1x2x32xf32>
    tpu.vector_store %arg4[%c5_115, %c2_116, %c0_117, %c0_118], %131 {strides = array<i32>} : memref<8x3x2x32xf32, #tpu.memory_space<vmem>>, vector<1x1x2x32xf32>,
    %c6 = arith.constant 6 : index
    %c0_119 = arith.constant 0 : index
    %c0_120 = arith.constant 0 : index
    %132 = vector.load %arg1[%c6, %c0_119, %c0_120] : memref<8x2x16xbf16, #tpu.memory_space<vmem>>, vector<1x2x16xbf16>
    %133 = vector.shape_cast %132 : vector<1x2x16xbf16> to vector<2x16xbf16>
    %cst_121 = arith.constant dense<0.000000e+00> : vector<2x32xf32>
    %134 = tpu.matmul %133, %1, %cst_121 {dimension_numbers = #tpu.dot_dimension_numbers<[1], [0], [0], [1], [0, 0, 1, 1], [], []>} : vector<2x16xbf16>, vector<16x32xbf16>, vector<2x32xf32> -> vector<2x32xf32>
    %135 = vector.broadcast %7 : vector<1x32xf32> to vector<2x32xf32>
    %136 = arith.addf %134, %135 : vector<2x32xf32>
    %c6_122 = arith.constant 6 : index
    %c0_123 = arith.constant 0 : index
    %c0_124 = arith.constant 0 : index
    %c0_125 = arith.constant 0 : index
    %137 = vector.load %arg4[%c6_122, %c0_123, %c0_124, %c0_125] : memref<8x3x2x32xf32, #tpu.memory_space<vmem>>, vector<1x1x2x32xf32>
    %138 = vector.shape_cast %137 : vector<1x1x2x32xf32> to vector<2x32xf32>
    %139 = vector.shape_cast %136 : vector<2x32xf32> to vector<1x1x2x32xf32>
    tpu.vector_store %arg4[%c6_122, %c0_123, %c0_124, %c0_125], %139 {strides = array<i32>} : memref<8x3x2x32xf32, #tpu.memory_space<vmem>>, vector<1x1x2x32xf32>,
    %cst_126 = arith.constant dense<0.000000e+00> : vector<2x32xf32>
    %140 = tpu.matmul %133, %3, %cst_126 {dimension_numbers = #tpu.dot_dimension_numbers<[1], [0], [0], [1], [0, 0, 1, 1], [], []>} : vector<2x16xbf16>, vector<16x32xbf16>, vector<2x32xf32> -> vector<2x32xf32>
    %141 = vector.broadcast %9 : vector<1x32xf32> to vector<2x32xf32>
    %142 = arith.addf %140, %141 : vector<2x32xf32>
    %c6_127 = arith.constant 6 : index
    %c1_128 = arith.constant 1 : index
    %c0_129 = arith.constant 0 : index
    %c0_130 = arith.constant 0 : index
    %143 = vector.load %arg4[%c6_127, %c1_128, %c0_129, %c0_130] : memref<8x3x2x32xf32, #tpu.memory_space<vmem>>, vector<1x1x2x32xf32>
    %144 = vector.shape_cast %143 : vector<1x1x2x32xf32> to vector<2x32xf32>
    %145 = vector.shape_cast %142 : vector<2x32xf32> to vector<1x1x2x32xf32>
    tpu.vector_store %arg4[%c6_127, %c1_128, %c0_129, %c0_130], %145 {strides = array<i32>} : memref<8x3x2x32xf32, #tpu.memory_space<vmem>>, vector<1x1x2x32xf32>,
    %cst_131 = arith.constant dense<0.000000e+00> : vector<2x32xf32>
    %146 = tpu.matmul %133, %5, %cst_131 {dimension_numbers = #tpu.dot_dimension_numbers<[1], [0], [0], [1], [0, 0, 1, 1], [], []>} : vector<2x16xbf16>, vector<16x32xbf16>, vector<2x32xf32> -> vector<2x32xf32>
    %147 = vector.broadcast %11 : vector<1x32xf32> to vector<2x32xf32>
    %148 = arith.addf %146, %147 : vector<2x32xf32>
    %c6_132 = arith.constant 6 : index
    %c2_133 = arith.constant 2 : index
    %c0_134 = arith.constant 0 : index
    %c0_135 = arith.constant 0 : index
    %149 = vector.load %arg4[%c6_132, %c2_133, %c0_134, %c0_135] : memref<8x3x2x32xf32, #tpu.memory_space<vmem>>, vector<1x1x2x32xf32>
    %150 = vector.shape_cast %149 : vector<1x1x2x32xf32> to vector<2x32xf32>
    %151 = vector.shape_cast %148 : vector<2x32xf32> to vector<1x1x2x32xf32>
    tpu.vector_store %arg4[%c6_132, %c2_133, %c0_134, %c0_135], %151 {strides = array<i32>} : memref<8x3x2x32xf32, #tpu.memory_space<vmem>>, vector<1x1x2x32xf32>,
    %c7 = arith.constant 7 : index
    %c0_136 = arith.constant 0 : index
    %c0_137 = arith.constant 0 : index
    %152 = vector.load %arg1[%c7, %c0_136, %c0_137] : memref<8x2x16xbf16, #tpu.memory_space<vmem>>, vector<1x2x16xbf16>
    %153 = vector.shape_cast %152 : vector<1x2x16xbf16> to vector<2x16xbf16>
    %cst_138 = arith.constant dense<0.000000e+00> : vector<2x32xf32>
    %154 = tpu.matmul %153, %1, %cst_138 {dimension_numbers = #tpu.dot_dimension_numbers<[1], [0], [0], [1], [0, 0, 1, 1], [], []>} : vector<2x16xbf16>, vector<16x32xbf16>, vector<2x32xf32> -> vector<2x32xf32>
    %155 = vector.broadcast %7 : vector<1x32xf32> to vector<2x32xf32>
    %156 = arith.addf %154, %155 : vector<2x32xf32>
    %c7_139 = arith.constant 7 : index
    %c0_140 = arith.constant 0 : index
    %c0_141 = arith.constant 0 : index
    %c0_142 = arith.constant 0 : index
    %157 = vector.load %arg4[%c7_139, %c0_140, %c0_141, %c0_142] : memref<8x3x2x32xf32, #tpu.memory_space<vmem>>, vector<1x1x2x32xf32>
    %158 = vector.shape_cast %157 : vector<1x1x2x32xf32> to vector<2x32xf32>
    %159 = vector.shape_cast %156 : vector<2x32xf32> to vector<1x1x2x32xf32>
    tpu.vector_store %arg4[%c7_139, %c0_140, %c0_141, %c0_142], %159 {strides = array<i32>} : memref<8x3x2x32xf32, #tpu.memory_space<vmem>>, vector<1x1x2x32xf32>,
    %cst_143 = arith.constant dense<0.000000e+00> : vector<2x32xf32>
    %160 = tpu.matmul %153, %3, %cst_143 {dimension_numbers = #tpu.dot_dimension_numbers<[1], [0], [0], [1], [0, 0, 1, 1], [], []>} : vector<2x16xbf16>, vector<16x32xbf16>, vector<2x32xf32> -> vector<2x32xf32>
    %161 = vector.broadcast %9 : vector<1x32xf32> to vector<2x32xf32>
    %162 = arith.addf %160, %161 : vector<2x32xf32>
    %c7_144 = arith.constant 7 : index
    %c1_145 = arith.constant 1 : index
    %c0_146 = arith.constant 0 : index
    %c0_147 = arith.constant 0 : index
    %163 = vector.load %arg4[%c7_144, %c1_145, %c0_146, %c0_147] : memref<8x3x2x32xf32, #tpu.memory_space<vmem>>, vector<1x1x2x32xf32>
    %164 = vector.shape_cast %163 : vector<1x1x2x32xf32> to vector<2x32xf32>
    %165 = vector.shape_cast %162 : vector<2x32xf32> to vector<1x1x2x32xf32>
    tpu.vector_store %arg4[%c7_144, %c1_145, %c0_146, %c0_147], %165 {strides = array<i32>} : memref<8x3x2x32xf32, #tpu.memory_space<vmem>>, vector<1x1x2x32xf32>,
    %cst_148 = arith.constant dense<0.000000e+00> : vector<2x32xf32>
    %166 = tpu.matmul %153, %5, %cst_148 {dimension_numbers = #tpu.dot_dimension_numbers<[1], [0], [0], [1], [0, 0, 1, 1], [], []>} : vector<2x16xbf16>, vector<16x32xbf16>, vector<2x32xf32> -> vector<2x32xf32>
    %167 = vector.broadcast %11 : vector<1x32xf32> to vector<2x32xf32>
    %168 = arith.addf %166, %167 : vector<2x32xf32>
    %c7_149 = arith.constant 7 : index
    %c2_150 = arith.constant 2 : index
    %c0_151 = arith.constant 0 : index
    %c0_152 = arith.constant 0 : index
    %169 = vector.load %arg4[%c7_149, %c2_150, %c0_151, %c0_152] : memref<8x3x2x32xf32, #tpu.memory_space<vmem>>, vector<1x1x2x32xf32>
    %170 = vector.shape_cast %169 : vector<1x1x2x32xf32> to vector<2x32xf32>
    %171 = vector.shape_cast %168 : vector<2x32xf32> to vector<1x1x2x32xf32>
    tpu.vector_store %arg4[%c7_149, %c2_150, %c0_151, %c0_152], %171 {strides = array<i32>} : memref<8x3x2x32xf32, #tpu.memory_space<vmem>>, vector<1x1x2x32xf32>,
    return
  }
  func.func @transform_0(%arg0: i32) -> (i32, i32, i32) {
    %c0_i32 = arith.constant 0 : i32
    %c0_i32_0 = arith.constant 0 : i32
    %c0_i32_1 = arith.constant 0 : i32
    return %arg0, %c0_i32, %c0_i32_0 : i32, i32, i32
  }
  func.func @transform_1(%arg0: i32) -> (i32, i32, i32) {
    %c0_i32 = arith.constant 0 : i32
    %c0_i32_0 = arith.constant 0 : i32
    %c0_i32_1 = arith.constant 0 : i32
    %c0_i32_2 = arith.constant 0 : i32
    return %c0_i32, %c0_i32_0, %c0_i32_1 : i32, i32, i32
  }
  func.func @transform_2(%arg0: i32) -> (i32, i32, i32) {
    %c0_i32 = arith.constant 0 : i32
    %c0_i32_0 = arith.constant 0 : i32
    %c0_i32_1 = arith.constant 0 : i32
    %c0_i32_2 = arith.constant 0 : i32
    return %c0_i32, %c0_i32_0, %c0_i32_1 : i32, i32, i32
  }
  func.func @transform_3(%arg0: i32) -> (i32, i32, i32, i32) {
    %c0_i32 = arith.constant 0 : i32
    %c0_i32_0 = arith.constant 0 : i32
    %c0_i32_1 = arith.constant 0 : i32
    %c0_i32_2 = arith.constant 0 : i32
    return %arg0, %c0_i32, %c0_i32_0, %c0_i32_1 : i32, i32, i32, i32
  }
}

module attributes {stable_mosaic.version = 11 : i64} {
  func.func @_gru_recurrent_kernel(%arg0: i32, %arg1: memref<8x3x2x32xf32, #tpu.memory_space<vmem>>, %arg2: memref<3x32x32xbf16, #tpu.memory_space<vmem>>, %arg3: memref<1x32xf32, #tpu.memory_space<vmem>>, %arg4: memref<8x2x32xf32, #tpu.memory_space<vmem>>, %arg5: memref<2x32xf32, #tpu.memory_space<vmem>>) attributes {dimension_semantics = [#tpu.dimension_semantics<arbitrary>], iteration_bounds = array<i64: 1>, scalar_prefetch = 0 : i64, scratch_operands = 1 : i64, tpu.core_type = #tpu.core_type<tc>, window_params = [{transform_indices = @transform_0, window_bounds = array<i64: 8, 3, 2, 32>}, {pipeline_mode = #tpu.pipeline_mode<synchronous>, transform_indices = @transform_1, window_bounds = array<i64: 3, 32, 32>}, {pipeline_mode = #tpu.pipeline_mode<synchronous>, transform_indices = @transform_2, window_bounds = array<i64: 1, 32>}, {transform_indices = @transform_3, window_bounds = array<i64: 8, 2, 32>}]} {
    %c0_i32 = arith.constant 0 : i32
    %0 = arith.cmpi eq, %arg0, %c0_i32 : i32
    %1 = arith.extui %0 : i1 to i32
    %c0_i32_0 = arith.constant 0 : i32
    %2 = arith.cmpi ne, %1, %c0_i32_0 : i32
    scf.if %2 {
      %cst_93 = arith.constant 0.000000e+00 : f32
      %302 = vector.broadcast %cst_93 : f32 to vector<2x32xf32>
      %c0_94 = arith.constant 0 : index
      %c0_95 = arith.constant 0 : index
      %303 = vector.load %arg5[%c0_94, %c0_95] : memref<2x32xf32, #tpu.memory_space<vmem>>, vector<2x32xf32>
      tpu.vector_store %arg5[%c0_94, %c0_95], %302 {strides = array<i32>} : memref<2x32xf32, #tpu.memory_space<vmem>>, vector<2x32xf32>,
    } else {
    }
    %c0 = arith.constant 0 : index
    %c0_1 = arith.constant 0 : index
    %c0_2 = arith.constant 0 : index
    %3 = vector.load %arg2[%c0, %c0_1, %c0_2] : memref<3x32x32xbf16, #tpu.memory_space<vmem>>, vector<1x32x32xbf16>
    %4 = vector.shape_cast %3 : vector<1x32x32xbf16> to vector<32x32xbf16>
    %c1 = arith.constant 1 : index
    %c0_3 = arith.constant 0 : index
    %c0_4 = arith.constant 0 : index
    %5 = vector.load %arg2[%c1, %c0_3, %c0_4] : memref<3x32x32xbf16, #tpu.memory_space<vmem>>, vector<1x32x32xbf16>
    %6 = vector.shape_cast %5 : vector<1x32x32xbf16> to vector<32x32xbf16>
    %c2 = arith.constant 2 : index
    %c0_5 = arith.constant 0 : index
    %c0_6 = arith.constant 0 : index
    %7 = vector.load %arg2[%c2, %c0_5, %c0_6] : memref<3x32x32xbf16, #tpu.memory_space<vmem>>, vector<1x32x32xbf16>
    %8 = vector.shape_cast %7 : vector<1x32x32xbf16> to vector<32x32xbf16>
    %c0_7 = arith.constant 0 : index
    %c0_8 = arith.constant 0 : index
    %9 = vector.load %arg3[%c0_7, %c0_8] : memref<1x32xf32, #tpu.memory_space<vmem>>, vector<1x32xf32>
    %10 = vector.shape_cast %9 : vector<1x32xf32> to vector<1x32xf32>
    %11 = vector.broadcast %10 : vector<1x32xf32> to vector<2x32xf32>
    %c0_9 = arith.constant 0 : index
    %c0_10 = arith.constant 0 : index
    %12 = vector.load %arg5[%c0_9, %c0_10] : memref<2x32xf32, #tpu.memory_space<vmem>>, vector<2x32xf32>
    %c0_i32_11 = arith.constant 0 : i32
    %13 = arith.index_cast %c0_i32_11 : i32 to index
    %c0_12 = arith.constant 0 : index
    %c0_13 = arith.constant 0 : index
    %c0_14 = arith.constant 0 : index
    %14 = vector.load %arg1[%13, %c0_12, %c0_13, %c0_14] : memref<8x3x2x32xf32, #tpu.memory_space<vmem>>, vector<1x3x2x32xf32>
    %15 = vector.shape_cast %14 : vector<1x3x2x32xf32> to vector<3x2x32xf32>
    %16 = arith.truncf %12 : vector<2x32xf32> to vector<2x32xbf16>
    %cst = arith.constant dense<0.000000e+00> : vector<2x32xf32>
    %17 = tpu.matmul %16, %4, %cst {dimension_numbers = #tpu.dot_dimension_numbers<[1], [0], [0], [1], [0, 0, 1, 1], [], []>} : vector<2x32xbf16>, vector<32x32xbf16>, vector<2x32xf32> -> vector<2x32xf32>
    %cst_15 = arith.constant dense<0.000000e+00> : vector<2x32xf32>
    %18 = tpu.matmul %16, %6, %cst_15 {dimension_numbers = #tpu.dot_dimension_numbers<[1], [0], [0], [1], [0, 0, 1, 1], [], []>} : vector<2x32xbf16>, vector<32x32xbf16>, vector<2x32xf32> -> vector<2x32xf32>
    %cst_16 = arith.constant dense<0.000000e+00> : vector<2x32xf32>
    %19 = tpu.matmul %16, %8, %cst_16 {dimension_numbers = #tpu.dot_dimension_numbers<[1], [0], [0], [1], [0, 0, 1, 1], [], []>} : vector<2x32xbf16>, vector<32x32xbf16>, vector<2x32xf32> -> vector<2x32xf32>
    %20 = vector.extract_strided_slice %15 {offsets = [0, 0, 0], sizes = [1, 2, 32], strides = [1, 1, 1]} : vector<3x2x32xf32> to vector<1x2x32xf32>
    %21 = vector.shape_cast %20 : vector<1x2x32xf32> to vector<2x32xf32>
    %22 = arith.addf %21, %17 : vector<2x32xf32>
    %23 = arith.negf %22 : vector<2x32xf32>
    %24 = math.exp %23 : vector<2x32xf32>
    %cst_17 = arith.constant 1.000000e+00 : f32
    %25 = vector.broadcast %cst_17 : f32 to vector<2x32xf32>
    %26 = arith.addf %25, %24 : vector<2x32xf32>
    %27 = arith.divf %25, %26 : vector<2x32xf32>
    %28 = vector.extract_strided_slice %15 {offsets = [1, 0, 0], sizes = [1, 2, 32], strides = [1, 1, 1]} : vector<3x2x32xf32> to vector<1x2x32xf32>
    %29 = vector.shape_cast %28 : vector<1x2x32xf32> to vector<2x32xf32>
    %30 = arith.addf %29, %18 : vector<2x32xf32>
    %31 = arith.negf %30 : vector<2x32xf32>
    %32 = math.exp %31 : vector<2x32xf32>
    %cst_18 = arith.constant 1.000000e+00 : f32
    %33 = vector.broadcast %cst_18 : f32 to vector<2x32xf32>
    %34 = arith.addf %33, %32 : vector<2x32xf32>
    %35 = arith.divf %33, %34 : vector<2x32xf32>
    %36 = vector.extract_strided_slice %15 {offsets = [2, 0, 0], sizes = [1, 2, 32], strides = [1, 1, 1]} : vector<3x2x32xf32> to vector<1x2x32xf32>
    %37 = vector.shape_cast %36 : vector<1x2x32xf32> to vector<2x32xf32>
    %38 = arith.addf %19, %11 : vector<2x32xf32>
    %39 = arith.mulf %27, %38 : vector<2x32xf32>
    %40 = arith.addf %37, %39 : vector<2x32xf32>
    %41 = math.tanh %40 : vector<2x32xf32>
    %42 = arith.subf %12, %41 : vector<2x32xf32>
    %43 = arith.mulf %35, %42 : vector<2x32xf32>
    %44 = arith.addf %41, %43 : vector<2x32xf32>
    %45 = arith.index_cast %c0_i32_11 : i32 to index
    %c0_19 = arith.constant 0 : index
    %c0_20 = arith.constant 0 : index
    %46 = vector.load %arg4[%45, %c0_19, %c0_20] : memref<8x2x32xf32, #tpu.memory_space<vmem>>, vector<1x2x32xf32>
    %47 = vector.shape_cast %46 : vector<1x2x32xf32> to vector<2x32xf32>
    %48 = vector.shape_cast %44 : vector<2x32xf32> to vector<1x2x32xf32>
    tpu.vector_store %arg4[%45, %c0_19, %c0_20], %48 {strides = array<i32>} : memref<8x2x32xf32, #tpu.memory_space<vmem>>, vector<1x2x32xf32>,
    %c1_i32 = arith.constant 1 : i32
    %49 = arith.index_cast %c1_i32 : i32 to index
    %c0_21 = arith.constant 0 : index
    %c0_22 = arith.constant 0 : index
    %c0_23 = arith.constant 0 : index
    %50 = vector.load %arg1[%49, %c0_21, %c0_22, %c0_23] : memref<8x3x2x32xf32, #tpu.memory_space<vmem>>, vector<1x3x2x32xf32>
    %51 = vector.shape_cast %50 : vector<1x3x2x32xf32> to vector<3x2x32xf32>
    %52 = arith.truncf %44 : vector<2x32xf32> to vector<2x32xbf16>
    %cst_24 = arith.constant dense<0.000000e+00> : vector<2x32xf32>
    %53 = tpu.matmul %52, %4, %cst_24 {dimension_numbers = #tpu.dot_dimension_numbers<[1], [0], [0], [1], [0, 0, 1, 1], [], []>} : vector<2x32xbf16>, vector<32x32xbf16>, vector<2x32xf32> -> vector<2x32xf32>
    %cst_25 = arith.constant dense<0.000000e+00> : vector<2x32xf32>
    %54 = tpu.matmul %52, %6, %cst_25 {dimension_numbers = #tpu.dot_dimension_numbers<[1], [0], [0], [1], [0, 0, 1, 1], [], []>} : vector<2x32xbf16>, vector<32x32xbf16>, vector<2x32xf32> -> vector<2x32xf32>
    %cst_26 = arith.constant dense<0.000000e+00> : vector<2x32xf32>
    %55 = tpu.matmul %52, %8, %cst_26 {dimension_numbers = #tpu.dot_dimension_numbers<[1], [0], [0], [1], [0, 0, 1, 1], [], []>} : vector<2x32xbf16>, vector<32x32xbf16>, vector<2x32xf32> -> vector<2x32xf32>
    %56 = vector.extract_strided_slice %51 {offsets = [0, 0, 0], sizes = [1, 2, 32], strides = [1, 1, 1]} : vector<3x2x32xf32> to vector<1x2x32xf32>
    %57 = vector.shape_cast %56 : vector<1x2x32xf32> to vector<2x32xf32>
    %58 = arith.addf %57, %53 : vector<2x32xf32>
    %59 = arith.negf %58 : vector<2x32xf32>
    %60 = math.exp %59 : vector<2x32xf32>
    %cst_27 = arith.constant 1.000000e+00 : f32
    %61 = vector.broadcast %cst_27 : f32 to vector<2x32xf32>
    %62 = arith.addf %61, %60 : vector<2x32xf32>
    %63 = arith.divf %61, %62 : vector<2x32xf32>
    %64 = vector.extract_strided_slice %51 {offsets = [1, 0, 0], sizes = [1, 2, 32], strides = [1, 1, 1]} : vector<3x2x32xf32> to vector<1x2x32xf32>
    %65 = vector.shape_cast %64 : vector<1x2x32xf32> to vector<2x32xf32>
    %66 = arith.addf %65, %54 : vector<2x32xf32>
    %67 = arith.negf %66 : vector<2x32xf32>
    %68 = math.exp %67 : vector<2x32xf32>
    %cst_28 = arith.constant 1.000000e+00 : f32
    %69 = vector.broadcast %cst_28 : f32 to vector<2x32xf32>
    %70 = arith.addf %69, %68 : vector<2x32xf32>
    %71 = arith.divf %69, %70 : vector<2x32xf32>
    %72 = vector.extract_strided_slice %51 {offsets = [2, 0, 0], sizes = [1, 2, 32], strides = [1, 1, 1]} : vector<3x2x32xf32> to vector<1x2x32xf32>
    %73 = vector.shape_cast %72 : vector<1x2x32xf32> to vector<2x32xf32>
    %74 = arith.addf %55, %11 : vector<2x32xf32>
    %75 = arith.mulf %63, %74 : vector<2x32xf32>
    %76 = arith.addf %73, %75 : vector<2x32xf32>
    %77 = math.tanh %76 : vector<2x32xf32>
    %78 = arith.subf %44, %77 : vector<2x32xf32>
    %79 = arith.mulf %71, %78 : vector<2x32xf32>
    %80 = arith.addf %77, %79 : vector<2x32xf32>
    %81 = arith.index_cast %c1_i32 : i32 to index
    %c0_29 = arith.constant 0 : index
    %c0_30 = arith.constant 0 : index
    %82 = vector.load %arg4[%81, %c0_29, %c0_30] : memref<8x2x32xf32, #tpu.memory_space<vmem>>, vector<1x2x32xf32>
    %83 = vector.shape_cast %82 : vector<1x2x32xf32> to vector<2x32xf32>
    %84 = vector.shape_cast %80 : vector<2x32xf32> to vector<1x2x32xf32>
    tpu.vector_store %arg4[%81, %c0_29, %c0_30], %84 {strides = array<i32>} : memref<8x2x32xf32, #tpu.memory_space<vmem>>, vector<1x2x32xf32>,
    %c2_i32 = arith.constant 2 : i32
    %85 = arith.index_cast %c2_i32 : i32 to index
    %c0_31 = arith.constant 0 : index
    %c0_32 = arith.constant 0 : index
    %c0_33 = arith.constant 0 : index
    %86 = vector.load %arg1[%85, %c0_31, %c0_32, %c0_33] : memref<8x3x2x32xf32, #tpu.memory_space<vmem>>, vector<1x3x2x32xf32>
    %87 = vector.shape_cast %86 : vector<1x3x2x32xf32> to vector<3x2x32xf32>
    %88 = arith.truncf %80 : vector<2x32xf32> to vector<2x32xbf16>
    %cst_34 = arith.constant dense<0.000000e+00> : vector<2x32xf32>
    %89 = tpu.matmul %88, %4, %cst_34 {dimension_numbers = #tpu.dot_dimension_numbers<[1], [0], [0], [1], [0, 0, 1, 1], [], []>} : vector<2x32xbf16>, vector<32x32xbf16>, vector<2x32xf32> -> vector<2x32xf32>
    %cst_35 = arith.constant dense<0.000000e+00> : vector<2x32xf32>
    %90 = tpu.matmul %88, %6, %cst_35 {dimension_numbers = #tpu.dot_dimension_numbers<[1], [0], [0], [1], [0, 0, 1, 1], [], []>} : vector<2x32xbf16>, vector<32x32xbf16>, vector<2x32xf32> -> vector<2x32xf32>
    %cst_36 = arith.constant dense<0.000000e+00> : vector<2x32xf32>
    %91 = tpu.matmul %88, %8, %cst_36 {dimension_numbers = #tpu.dot_dimension_numbers<[1], [0], [0], [1], [0, 0, 1, 1], [], []>} : vector<2x32xbf16>, vector<32x32xbf16>, vector<2x32xf32> -> vector<2x32xf32>
    %92 = vector.extract_strided_slice %87 {offsets = [0, 0, 0], sizes = [1, 2, 32], strides = [1, 1, 1]} : vector<3x2x32xf32> to vector<1x2x32xf32>
    %93 = vector.shape_cast %92 : vector<1x2x32xf32> to vector<2x32xf32>
    %94 = arith.addf %93, %89 : vector<2x32xf32>
    %95 = arith.negf %94 : vector<2x32xf32>
    %96 = math.exp %95 : vector<2x32xf32>
    %cst_37 = arith.constant 1.000000e+00 : f32
    %97 = vector.broadcast %cst_37 : f32 to vector<2x32xf32>
    %98 = arith.addf %97, %96 : vector<2x32xf32>
    %99 = arith.divf %97, %98 : vector<2x32xf32>
    %100 = vector.extract_strided_slice %87 {offsets = [1, 0, 0], sizes = [1, 2, 32], strides = [1, 1, 1]} : vector<3x2x32xf32> to vector<1x2x32xf32>
    %101 = vector.shape_cast %100 : vector<1x2x32xf32> to vector<2x32xf32>
    %102 = arith.addf %101, %90 : vector<2x32xf32>
    %103 = arith.negf %102 : vector<2x32xf32>
    %104 = math.exp %103 : vector<2x32xf32>
    %cst_38 = arith.constant 1.000000e+00 : f32
    %105 = vector.broadcast %cst_38 : f32 to vector<2x32xf32>
    %106 = arith.addf %105, %104 : vector<2x32xf32>
    %107 = arith.divf %105, %106 : vector<2x32xf32>
    %108 = vector.extract_strided_slice %87 {offsets = [2, 0, 0], sizes = [1, 2, 32], strides = [1, 1, 1]} : vector<3x2x32xf32> to vector<1x2x32xf32>
    %109 = vector.shape_cast %108 : vector<1x2x32xf32> to vector<2x32xf32>
    %110 = arith.addf %91, %11 : vector<2x32xf32>
    %111 = arith.mulf %99, %110 : vector<2x32xf32>
    %112 = arith.addf %109, %111 : vector<2x32xf32>
    %113 = math.tanh %112 : vector<2x32xf32>
    %114 = arith.subf %80, %113 : vector<2x32xf32>
    %115 = arith.mulf %107, %114 : vector<2x32xf32>
    %116 = arith.addf %113, %115 : vector<2x32xf32>
    %117 = arith.index_cast %c2_i32 : i32 to index
    %c0_39 = arith.constant 0 : index
    %c0_40 = arith.constant 0 : index
    %118 = vector.load %arg4[%117, %c0_39, %c0_40] : memref<8x2x32xf32, #tpu.memory_space<vmem>>, vector<1x2x32xf32>
    %119 = vector.shape_cast %118 : vector<1x2x32xf32> to vector<2x32xf32>
    %120 = vector.shape_cast %116 : vector<2x32xf32> to vector<1x2x32xf32>
    tpu.vector_store %arg4[%117, %c0_39, %c0_40], %120 {strides = array<i32>} : memref<8x2x32xf32, #tpu.memory_space<vmem>>, vector<1x2x32xf32>,
    %c3_i32 = arith.constant 3 : i32
    %121 = arith.index_cast %c3_i32 : i32 to index
    %c0_41 = arith.constant 0 : index
    %c0_42 = arith.constant 0 : index
    %c0_43 = arith.constant 0 : index
    %122 = vector.load %arg1[%121, %c0_41, %c0_42, %c0_43] : memref<8x3x2x32xf32, #tpu.memory_space<vmem>>, vector<1x3x2x32xf32>
    %123 = vector.shape_cast %122 : vector<1x3x2x32xf32> to vector<3x2x32xf32>
    %124 = arith.truncf %116 : vector<2x32xf32> to vector<2x32xbf16>
    %cst_44 = arith.constant dense<0.000000e+00> : vector<2x32xf32>
    %125 = tpu.matmul %124, %4, %cst_44 {dimension_numbers = #tpu.dot_dimension_numbers<[1], [0], [0], [1], [0, 0, 1, 1], [], []>} : vector<2x32xbf16>, vector<32x32xbf16>, vector<2x32xf32> -> vector<2x32xf32>
    %cst_45 = arith.constant dense<0.000000e+00> : vector<2x32xf32>
    %126 = tpu.matmul %124, %6, %cst_45 {dimension_numbers = #tpu.dot_dimension_numbers<[1], [0], [0], [1], [0, 0, 1, 1], [], []>} : vector<2x32xbf16>, vector<32x32xbf16>, vector<2x32xf32> -> vector<2x32xf32>
    %cst_46 = arith.constant dense<0.000000e+00> : vector<2x32xf32>
    %127 = tpu.matmul %124, %8, %cst_46 {dimension_numbers = #tpu.dot_dimension_numbers<[1], [0], [0], [1], [0, 0, 1, 1], [], []>} : vector<2x32xbf16>, vector<32x32xbf16>, vector<2x32xf32> -> vector<2x32xf32>
    %128 = vector.extract_strided_slice %123 {offsets = [0, 0, 0], sizes = [1, 2, 32], strides = [1, 1, 1]} : vector<3x2x32xf32> to vector<1x2x32xf32>
    %129 = vector.shape_cast %128 : vector<1x2x32xf32> to vector<2x32xf32>
    %130 = arith.addf %129, %125 : vector<2x32xf32>
    %131 = arith.negf %130 : vector<2x32xf32>
    %132 = math.exp %131 : vector<2x32xf32>
    %cst_47 = arith.constant 1.000000e+00 : f32
    %133 = vector.broadcast %cst_47 : f32 to vector<2x32xf32>
    %134 = arith.addf %133, %132 : vector<2x32xf32>
    %135 = arith.divf %133, %134 : vector<2x32xf32>
    %136 = vector.extract_strided_slice %123 {offsets = [1, 0, 0], sizes = [1, 2, 32], strides = [1, 1, 1]} : vector<3x2x32xf32> to vector<1x2x32xf32>
    %137 = vector.shape_cast %136 : vector<1x2x32xf32> to vector<2x32xf32>
    %138 = arith.addf %137, %126 : vector<2x32xf32>
    %139 = arith.negf %138 : vector<2x32xf32>
    %140 = math.exp %139 : vector<2x32xf32>
    %cst_48 = arith.constant 1.000000e+00 : f32
    %141 = vector.broadcast %cst_48 : f32 to vector<2x32xf32>
    %142 = arith.addf %141, %140 : vector<2x32xf32>
    %143 = arith.divf %141, %142 : vector<2x32xf32>
    %144 = vector.extract_strided_slice %123 {offsets = [2, 0, 0], sizes = [1, 2, 32], strides = [1, 1, 1]} : vector<3x2x32xf32> to vector<1x2x32xf32>
    %145 = vector.shape_cast %144 : vector<1x2x32xf32> to vector<2x32xf32>
    %146 = arith.addf %127, %11 : vector<2x32xf32>
    %147 = arith.mulf %135, %146 : vector<2x32xf32>
    %148 = arith.addf %145, %147 : vector<2x32xf32>
    %149 = math.tanh %148 : vector<2x32xf32>
    %150 = arith.subf %116, %149 : vector<2x32xf32>
    %151 = arith.mulf %143, %150 : vector<2x32xf32>
    %152 = arith.addf %149, %151 : vector<2x32xf32>
    %153 = arith.index_cast %c3_i32 : i32 to index
    %c0_49 = arith.constant 0 : index
    %c0_50 = arith.constant 0 : index
    %154 = vector.load %arg4[%153, %c0_49, %c0_50] : memref<8x2x32xf32, #tpu.memory_space<vmem>>, vector<1x2x32xf32>
    %155 = vector.shape_cast %154 : vector<1x2x32xf32> to vector<2x32xf32>
    %156 = vector.shape_cast %152 : vector<2x32xf32> to vector<1x2x32xf32>
    tpu.vector_store %arg4[%153, %c0_49, %c0_50], %156 {strides = array<i32>} : memref<8x2x32xf32, #tpu.memory_space<vmem>>, vector<1x2x32xf32>,
    %c4_i32 = arith.constant 4 : i32
    %157 = arith.index_cast %c4_i32 : i32 to index
    %c0_51 = arith.constant 0 : index
    %c0_52 = arith.constant 0 : index
    %c0_53 = arith.constant 0 : index
    %158 = vector.load %arg1[%157, %c0_51, %c0_52, %c0_53] : memref<8x3x2x32xf32, #tpu.memory_space<vmem>>, vector<1x3x2x32xf32>
    %159 = vector.shape_cast %158 : vector<1x3x2x32xf32> to vector<3x2x32xf32>
    %160 = arith.truncf %152 : vector<2x32xf32> to vector<2x32xbf16>
    %cst_54 = arith.constant dense<0.000000e+00> : vector<2x32xf32>
    %161 = tpu.matmul %160, %4, %cst_54 {dimension_numbers = #tpu.dot_dimension_numbers<[1], [0], [0], [1], [0, 0, 1, 1], [], []>} : vector<2x32xbf16>, vector<32x32xbf16>, vector<2x32xf32> -> vector<2x32xf32>
    %cst_55 = arith.constant dense<0.000000e+00> : vector<2x32xf32>
    %162 = tpu.matmul %160, %6, %cst_55 {dimension_numbers = #tpu.dot_dimension_numbers<[1], [0], [0], [1], [0, 0, 1, 1], [], []>} : vector<2x32xbf16>, vector<32x32xbf16>, vector<2x32xf32> -> vector<2x32xf32>
    %cst_56 = arith.constant dense<0.000000e+00> : vector<2x32xf32>
    %163 = tpu.matmul %160, %8, %cst_56 {dimension_numbers = #tpu.dot_dimension_numbers<[1], [0], [0], [1], [0, 0, 1, 1], [], []>} : vector<2x32xbf16>, vector<32x32xbf16>, vector<2x32xf32> -> vector<2x32xf32>
    %164 = vector.extract_strided_slice %159 {offsets = [0, 0, 0], sizes = [1, 2, 32], strides = [1, 1, 1]} : vector<3x2x32xf32> to vector<1x2x32xf32>
    %165 = vector.shape_cast %164 : vector<1x2x32xf32> to vector<2x32xf32>
    %166 = arith.addf %165, %161 : vector<2x32xf32>
    %167 = arith.negf %166 : vector<2x32xf32>
    %168 = math.exp %167 : vector<2x32xf32>
    %cst_57 = arith.constant 1.000000e+00 : f32
    %169 = vector.broadcast %cst_57 : f32 to vector<2x32xf32>
    %170 = arith.addf %169, %168 : vector<2x32xf32>
    %171 = arith.divf %169, %170 : vector<2x32xf32>
    %172 = vector.extract_strided_slice %159 {offsets = [1, 0, 0], sizes = [1, 2, 32], strides = [1, 1, 1]} : vector<3x2x32xf32> to vector<1x2x32xf32>
    %173 = vector.shape_cast %172 : vector<1x2x32xf32> to vector<2x32xf32>
    %174 = arith.addf %173, %162 : vector<2x32xf32>
    %175 = arith.negf %174 : vector<2x32xf32>
    %176 = math.exp %175 : vector<2x32xf32>
    %cst_58 = arith.constant 1.000000e+00 : f32
    %177 = vector.broadcast %cst_58 : f32 to vector<2x32xf32>
    %178 = arith.addf %177, %176 : vector<2x32xf32>
    %179 = arith.divf %177, %178 : vector<2x32xf32>
    %180 = vector.extract_strided_slice %159 {offsets = [2, 0, 0], sizes = [1, 2, 32], strides = [1, 1, 1]} : vector<3x2x32xf32> to vector<1x2x32xf32>
    %181 = vector.shape_cast %180 : vector<1x2x32xf32> to vector<2x32xf32>
    %182 = arith.addf %163, %11 : vector<2x32xf32>
    %183 = arith.mulf %171, %182 : vector<2x32xf32>
    %184 = arith.addf %181, %183 : vector<2x32xf32>
    %185 = math.tanh %184 : vector<2x32xf32>
    %186 = arith.subf %152, %185 : vector<2x32xf32>
    %187 = arith.mulf %179, %186 : vector<2x32xf32>
    %188 = arith.addf %185, %187 : vector<2x32xf32>
    %189 = arith.index_cast %c4_i32 : i32 to index
    %c0_59 = arith.constant 0 : index
    %c0_60 = arith.constant 0 : index
    %190 = vector.load %arg4[%189, %c0_59, %c0_60] : memref<8x2x32xf32, #tpu.memory_space<vmem>>, vector<1x2x32xf32>
    %191 = vector.shape_cast %190 : vector<1x2x32xf32> to vector<2x32xf32>
    %192 = vector.shape_cast %188 : vector<2x32xf32> to vector<1x2x32xf32>
    tpu.vector_store %arg4[%189, %c0_59, %c0_60], %192 {strides = array<i32>} : memref<8x2x32xf32, #tpu.memory_space<vmem>>, vector<1x2x32xf32>,
    %c5_i32 = arith.constant 5 : i32
    %193 = arith.index_cast %c5_i32 : i32 to index
    %c0_61 = arith.constant 0 : index
    %c0_62 = arith.constant 0 : index
    %c0_63 = arith.constant 0 : index
    %194 = vector.load %arg1[%193, %c0_61, %c0_62, %c0_63] : memref<8x3x2x32xf32, #tpu.memory_space<vmem>>, vector<1x3x2x32xf32>
    %195 = vector.shape_cast %194 : vector<1x3x2x32xf32> to vector<3x2x32xf32>
    %196 = arith.truncf %188 : vector<2x32xf32> to vector<2x32xbf16>
    %cst_64 = arith.constant dense<0.000000e+00> : vector<2x32xf32>
    %197 = tpu.matmul %196, %4, %cst_64 {dimension_numbers = #tpu.dot_dimension_numbers<[1], [0], [0], [1], [0, 0, 1, 1], [], []>} : vector<2x32xbf16>, vector<32x32xbf16>, vector<2x32xf32> -> vector<2x32xf32>
    %cst_65 = arith.constant dense<0.000000e+00> : vector<2x32xf32>
    %198 = tpu.matmul %196, %6, %cst_65 {dimension_numbers = #tpu.dot_dimension_numbers<[1], [0], [0], [1], [0, 0, 1, 1], [], []>} : vector<2x32xbf16>, vector<32x32xbf16>, vector<2x32xf32> -> vector<2x32xf32>
    %cst_66 = arith.constant dense<0.000000e+00> : vector<2x32xf32>
    %199 = tpu.matmul %196, %8, %cst_66 {dimension_numbers = #tpu.dot_dimension_numbers<[1], [0], [0], [1], [0, 0, 1, 1], [], []>} : vector<2x32xbf16>, vector<32x32xbf16>, vector<2x32xf32> -> vector<2x32xf32>
    %200 = vector.extract_strided_slice %195 {offsets = [0, 0, 0], sizes = [1, 2, 32], strides = [1, 1, 1]} : vector<3x2x32xf32> to vector<1x2x32xf32>
    %201 = vector.shape_cast %200 : vector<1x2x32xf32> to vector<2x32xf32>
    %202 = arith.addf %201, %197 : vector<2x32xf32>
    %203 = arith.negf %202 : vector<2x32xf32>
    %204 = math.exp %203 : vector<2x32xf32>
    %cst_67 = arith.constant 1.000000e+00 : f32
    %205 = vector.broadcast %cst_67 : f32 to vector<2x32xf32>
    %206 = arith.addf %205, %204 : vector<2x32xf32>
    %207 = arith.divf %205, %206 : vector<2x32xf32>
    %208 = vector.extract_strided_slice %195 {offsets = [1, 0, 0], sizes = [1, 2, 32], strides = [1, 1, 1]} : vector<3x2x32xf32> to vector<1x2x32xf32>
    %209 = vector.shape_cast %208 : vector<1x2x32xf32> to vector<2x32xf32>
    %210 = arith.addf %209, %198 : vector<2x32xf32>
    %211 = arith.negf %210 : vector<2x32xf32>
    %212 = math.exp %211 : vector<2x32xf32>
    %cst_68 = arith.constant 1.000000e+00 : f32
    %213 = vector.broadcast %cst_68 : f32 to vector<2x32xf32>
    %214 = arith.addf %213, %212 : vector<2x32xf32>
    %215 = arith.divf %213, %214 : vector<2x32xf32>
    %216 = vector.extract_strided_slice %195 {offsets = [2, 0, 0], sizes = [1, 2, 32], strides = [1, 1, 1]} : vector<3x2x32xf32> to vector<1x2x32xf32>
    %217 = vector.shape_cast %216 : vector<1x2x32xf32> to vector<2x32xf32>
    %218 = arith.addf %199, %11 : vector<2x32xf32>
    %219 = arith.mulf %207, %218 : vector<2x32xf32>
    %220 = arith.addf %217, %219 : vector<2x32xf32>
    %221 = math.tanh %220 : vector<2x32xf32>
    %222 = arith.subf %188, %221 : vector<2x32xf32>
    %223 = arith.mulf %215, %222 : vector<2x32xf32>
    %224 = arith.addf %221, %223 : vector<2x32xf32>
    %225 = arith.index_cast %c5_i32 : i32 to index
    %c0_69 = arith.constant 0 : index
    %c0_70 = arith.constant 0 : index
    %226 = vector.load %arg4[%225, %c0_69, %c0_70] : memref<8x2x32xf32, #tpu.memory_space<vmem>>, vector<1x2x32xf32>
    %227 = vector.shape_cast %226 : vector<1x2x32xf32> to vector<2x32xf32>
    %228 = vector.shape_cast %224 : vector<2x32xf32> to vector<1x2x32xf32>
    tpu.vector_store %arg4[%225, %c0_69, %c0_70], %228 {strides = array<i32>} : memref<8x2x32xf32, #tpu.memory_space<vmem>>, vector<1x2x32xf32>,
    %c6_i32 = arith.constant 6 : i32
    %229 = arith.index_cast %c6_i32 : i32 to index
    %c0_71 = arith.constant 0 : index
    %c0_72 = arith.constant 0 : index
    %c0_73 = arith.constant 0 : index
    %230 = vector.load %arg1[%229, %c0_71, %c0_72, %c0_73] : memref<8x3x2x32xf32, #tpu.memory_space<vmem>>, vector<1x3x2x32xf32>
    %231 = vector.shape_cast %230 : vector<1x3x2x32xf32> to vector<3x2x32xf32>
    %232 = arith.truncf %224 : vector<2x32xf32> to vector<2x32xbf16>
    %cst_74 = arith.constant dense<0.000000e+00> : vector<2x32xf32>
    %233 = tpu.matmul %232, %4, %cst_74 {dimension_numbers = #tpu.dot_dimension_numbers<[1], [0], [0], [1], [0, 0, 1, 1], [], []>} : vector<2x32xbf16>, vector<32x32xbf16>, vector<2x32xf32> -> vector<2x32xf32>
    %cst_75 = arith.constant dense<0.000000e+00> : vector<2x32xf32>
    %234 = tpu.matmul %232, %6, %cst_75 {dimension_numbers = #tpu.dot_dimension_numbers<[1], [0], [0], [1], [0, 0, 1, 1], [], []>} : vector<2x32xbf16>, vector<32x32xbf16>, vector<2x32xf32> -> vector<2x32xf32>
    %cst_76 = arith.constant dense<0.000000e+00> : vector<2x32xf32>
    %235 = tpu.matmul %232, %8, %cst_76 {dimension_numbers = #tpu.dot_dimension_numbers<[1], [0], [0], [1], [0, 0, 1, 1], [], []>} : vector<2x32xbf16>, vector<32x32xbf16>, vector<2x32xf32> -> vector<2x32xf32>
    %236 = vector.extract_strided_slice %231 {offsets = [0, 0, 0], sizes = [1, 2, 32], strides = [1, 1, 1]} : vector<3x2x32xf32> to vector<1x2x32xf32>
    %237 = vector.shape_cast %236 : vector<1x2x32xf32> to vector<2x32xf32>
    %238 = arith.addf %237, %233 : vector<2x32xf32>
    %239 = arith.negf %238 : vector<2x32xf32>
    %240 = math.exp %239 : vector<2x32xf32>
    %cst_77 = arith.constant 1.000000e+00 : f32
    %241 = vector.broadcast %cst_77 : f32 to vector<2x32xf32>
    %242 = arith.addf %241, %240 : vector<2x32xf32>
    %243 = arith.divf %241, %242 : vector<2x32xf32>
    %244 = vector.extract_strided_slice %231 {offsets = [1, 0, 0], sizes = [1, 2, 32], strides = [1, 1, 1]} : vector<3x2x32xf32> to vector<1x2x32xf32>
    %245 = vector.shape_cast %244 : vector<1x2x32xf32> to vector<2x32xf32>
    %246 = arith.addf %245, %234 : vector<2x32xf32>
    %247 = arith.negf %246 : vector<2x32xf32>
    %248 = math.exp %247 : vector<2x32xf32>
    %cst_78 = arith.constant 1.000000e+00 : f32
    %249 = vector.broadcast %cst_78 : f32 to vector<2x32xf32>
    %250 = arith.addf %249, %248 : vector<2x32xf32>
    %251 = arith.divf %249, %250 : vector<2x32xf32>
    %252 = vector.extract_strided_slice %231 {offsets = [2, 0, 0], sizes = [1, 2, 32], strides = [1, 1, 1]} : vector<3x2x32xf32> to vector<1x2x32xf32>
    %253 = vector.shape_cast %252 : vector<1x2x32xf32> to vector<2x32xf32>
    %254 = arith.addf %235, %11 : vector<2x32xf32>
    %255 = arith.mulf %243, %254 : vector<2x32xf32>
    %256 = arith.addf %253, %255 : vector<2x32xf32>
    %257 = math.tanh %256 : vector<2x32xf32>
    %258 = arith.subf %224, %257 : vector<2x32xf32>
    %259 = arith.mulf %251, %258 : vector<2x32xf32>
    %260 = arith.addf %257, %259 : vector<2x32xf32>
    %261 = arith.index_cast %c6_i32 : i32 to index
    %c0_79 = arith.constant 0 : index
    %c0_80 = arith.constant 0 : index
    %262 = vector.load %arg4[%261, %c0_79, %c0_80] : memref<8x2x32xf32, #tpu.memory_space<vmem>>, vector<1x2x32xf32>
    %263 = vector.shape_cast %262 : vector<1x2x32xf32> to vector<2x32xf32>
    %264 = vector.shape_cast %260 : vector<2x32xf32> to vector<1x2x32xf32>
    tpu.vector_store %arg4[%261, %c0_79, %c0_80], %264 {strides = array<i32>} : memref<8x2x32xf32, #tpu.memory_space<vmem>>, vector<1x2x32xf32>,
    %c7_i32 = arith.constant 7 : i32
    %265 = arith.index_cast %c7_i32 : i32 to index
    %c0_81 = arith.constant 0 : index
    %c0_82 = arith.constant 0 : index
    %c0_83 = arith.constant 0 : index
    %266 = vector.load %arg1[%265, %c0_81, %c0_82, %c0_83] : memref<8x3x2x32xf32, #tpu.memory_space<vmem>>, vector<1x3x2x32xf32>
    %267 = vector.shape_cast %266 : vector<1x3x2x32xf32> to vector<3x2x32xf32>
    %268 = arith.truncf %260 : vector<2x32xf32> to vector<2x32xbf16>
    %cst_84 = arith.constant dense<0.000000e+00> : vector<2x32xf32>
    %269 = tpu.matmul %268, %4, %cst_84 {dimension_numbers = #tpu.dot_dimension_numbers<[1], [0], [0], [1], [0, 0, 1, 1], [], []>} : vector<2x32xbf16>, vector<32x32xbf16>, vector<2x32xf32> -> vector<2x32xf32>
    %cst_85 = arith.constant dense<0.000000e+00> : vector<2x32xf32>
    %270 = tpu.matmul %268, %6, %cst_85 {dimension_numbers = #tpu.dot_dimension_numbers<[1], [0], [0], [1], [0, 0, 1, 1], [], []>} : vector<2x32xbf16>, vector<32x32xbf16>, vector<2x32xf32> -> vector<2x32xf32>
    %cst_86 = arith.constant dense<0.000000e+00> : vector<2x32xf32>
    %271 = tpu.matmul %268, %8, %cst_86 {dimension_numbers = #tpu.dot_dimension_numbers<[1], [0], [0], [1], [0, 0, 1, 1], [], []>} : vector<2x32xbf16>, vector<32x32xbf16>, vector<2x32xf32> -> vector<2x32xf32>
    %272 = vector.extract_strided_slice %267 {offsets = [0, 0, 0], sizes = [1, 2, 32], strides = [1, 1, 1]} : vector<3x2x32xf32> to vector<1x2x32xf32>
    %273 = vector.shape_cast %272 : vector<1x2x32xf32> to vector<2x32xf32>
    %274 = arith.addf %273, %269 : vector<2x32xf32>
    %275 = arith.negf %274 : vector<2x32xf32>
    %276 = math.exp %275 : vector<2x32xf32>
    %cst_87 = arith.constant 1.000000e+00 : f32
    %277 = vector.broadcast %cst_87 : f32 to vector<2x32xf32>
    %278 = arith.addf %277, %276 : vector<2x32xf32>
    %279 = arith.divf %277, %278 : vector<2x32xf32>
    %280 = vector.extract_strided_slice %267 {offsets = [1, 0, 0], sizes = [1, 2, 32], strides = [1, 1, 1]} : vector<3x2x32xf32> to vector<1x2x32xf32>
    %281 = vector.shape_cast %280 : vector<1x2x32xf32> to vector<2x32xf32>
    %282 = arith.addf %281, %270 : vector<2x32xf32>
    %283 = arith.negf %282 : vector<2x32xf32>
    %284 = math.exp %283 : vector<2x32xf32>
    %cst_88 = arith.constant 1.000000e+00 : f32
    %285 = vector.broadcast %cst_88 : f32 to vector<2x32xf32>
    %286 = arith.addf %285, %284 : vector<2x32xf32>
    %287 = arith.divf %285, %286 : vector<2x32xf32>
    %288 = vector.extract_strided_slice %267 {offsets = [2, 0, 0], sizes = [1, 2, 32], strides = [1, 1, 1]} : vector<3x2x32xf32> to vector<1x2x32xf32>
    %289 = vector.shape_cast %288 : vector<1x2x32xf32> to vector<2x32xf32>
    %290 = arith.addf %271, %11 : vector<2x32xf32>
    %291 = arith.mulf %279, %290 : vector<2x32xf32>
    %292 = arith.addf %289, %291 : vector<2x32xf32>
    %293 = math.tanh %292 : vector<2x32xf32>
    %294 = arith.subf %260, %293 : vector<2x32xf32>
    %295 = arith.mulf %287, %294 : vector<2x32xf32>
    %296 = arith.addf %293, %295 : vector<2x32xf32>
    %297 = arith.index_cast %c7_i32 : i32 to index
    %c0_89 = arith.constant 0 : index
    %c0_90 = arith.constant 0 : index
    %298 = vector.load %arg4[%297, %c0_89, %c0_90] : memref<8x2x32xf32, #tpu.memory_space<vmem>>, vector<1x2x32xf32>
    %299 = vector.shape_cast %298 : vector<1x2x32xf32> to vector<2x32xf32>
    %300 = vector.shape_cast %296 : vector<2x32xf32> to vector<1x2x32xf32>
    tpu.vector_store %arg4[%297, %c0_89, %c0_90], %300 {strides = array<i32>} : memref<8x2x32xf32, #tpu.memory_space<vmem>>, vector<1x2x32xf32>,
    %c8_i32 = arith.constant 8 : i32
    %c0_91 = arith.constant 0 : index
    %c0_92 = arith.constant 0 : index
    %301 = vector.load %arg5[%c0_91, %c0_92] : memref<2x32xf32, #tpu.memory_space<vmem>>, vector<2x32xf32>
    tpu.vector_store %arg5[%c0_91, %c0_92], %296 {strides = array<i32>} : memref<2x32xf32, #tpu.memory_space<vmem>>, vector<2x32xf32>,
    return
  }
  func.func @transform_0(%arg0: i32) -> (i32, i32, i32, i32) {
    %c0_i32 = arith.constant 0 : i32
    %c0_i32_0 = arith.constant 0 : i32
    %c0_i32_1 = arith.constant 0 : i32
    %c0_i32_2 = arith.constant 0 : i32
    return %arg0, %c0_i32, %c0_i32_0, %c0_i32_1 : i32, i32, i32, i32
  }
  func.func @transform_1(%arg0: i32) -> (i32, i32, i32) {
    %c0_i32 = arith.constant 0 : i32
    %c0_i32_0 = arith.constant 0 : i32
    %c0_i32_1 = arith.constant 0 : i32
    %c0_i32_2 = arith.constant 0 : i32
    return %c0_i32, %c0_i32_0, %c0_i32_1 : i32, i32, i32
  }
  func.func @transform_2(%arg0: i32) -> (i32, i32) {
    %c0_i32 = arith.constant 0 : i32
    %c0_i32_0 = arith.constant 0 : i32
    %c0_i32_1 = arith.constant 0 : i32
    return %c0_i32, %c0_i32_0 : i32, i32
  }
  func.func @transform_3(%arg0: i32) -> (i32, i32, i32) {
    %c0_i32 = arith.constant 0 : i32
    %c0_i32_0 = arith.constant 0 : i32
    %c0_i32_1 = arith.constant 0 : i32
    return %arg0, %c0_i32, %c0_i32_0 : i32, i32, i32
  }
}

</mosaic_0001>

<llo_original>
// kernel: encoder_forward.2
$region0: #{encoder_forward.2}
  #allocation0 [shape = 'u32[]', space=smem, size = 0x4, offset = 0x4, fixed_abs, tag = 'smem constant byte address 0x4 - core index']
  #allocation1 [shape = 'u32[144,128]{1,0:T(1,128)}', space=vmem, size = 0x12000, scoped, tag = 'internal scratch']
  %s0 = inlined_call_operand.hbm [shape: bf16[8,2,16], index: 0, kind: input, shape index: {}]
  %s1 = inlined_call_operand.hbm [shape: bf16[3,16,32], index: 1, kind: input, shape index: {}]
  %s2 = inlined_call_operand.hbm [shape: f32[3,1,32], index: 2, kind: input, shape index: {}]
  %s3 = inlined_call_operand.hbm [shape: f32[8,3,2,32], index: 3, kind: output, shape index: {}]
  %s4 = sld [smem:[#allocation0]]
  $region34: #{encoder_forward.2} parent=0
    _
  %s6 = ssub.s32 1, %s4
  %s7 = scalar_select 0, %s6, %s4
  $region1: #{encoder_forward.2} parent=0
    #allocation2 [shape = 'u8[4096]{0}', space=vmem, size = 0x1000, scoped, tag = 'input window, operand 0, single buffered']
    #allocation3 [shape = 's32[1]{0}', space=sflag, size = 0x4, scoped, tag = 'scoped memory for encoder_forward.2']
    #allocation4 [shape = 's32[1]{0}', space=sflag, size = 0x4, scoped, tag = 'scoped memory for encoder_forward.2']
    #allocation5 [shape = 'u8[12288]{0}', space=vmem, size = 0x3000, scoped, tag = 'input window, operand 1, single buffered']
    #allocation6 [shape = 's32[1]{0}', space=sflag, size = 0x4, scoped, tag = 'scoped memory for encoder_forward.2']
    #allocation7 [shape = 'u8[1536]{0}', space=vmem, size = 0x800, scoped, tag = 'input window, operand 2, single buffered']
    #allocation8 [shape = 'u8[24576]{0}', space=vmem, size = 0x6000, scoped, tag = 'output window, operand 0, single buffered']
    %8 = vsyncpa [#allocation3], 0
    %9 = vsyncpa [#allocation6], 0
    %10 = vsyncpa [#allocation4], 0
    // Predicated region
    $region2: #{encoder_forward.2} parent=1 // pred_check
      _
    $region3: #{encoder_forward.2} parent=1 // pred_check_branch
      %12 = sbr.rel (0) target = $region5
    $region4: #{encoder_forward.2} parent=1 // pred_region
      %s14 = ssub.s32 128, 128
      %15 = vsyncadd [#allocation3], %s14
      %s16 = sshll.u32 [#allocation2], 4
      %s17 = int_to_ptr.vmem [resolvable:$true] %s16
      %22 = dma.hbm_to_vmem [thread:$0]  %s0, 128, %s17, [#allocation3], 16, 16, 1
    $region5: #{encoder_forward.2} parent=1 // pred_fallthru
      _
    // Predicated region
    $region6: #{encoder_forward.2} parent=1 // pred_check
      _
    $region7: #{encoder_forward.2} parent=1 // pred_check_branch
      %24 = sbr.rel (0) target = $region9
    $region8: #{encoder_forward.2} parent=1 // pred_region
      %s26 = ssub.s32 384, 384
      %27 = vsyncadd [#allocation6], %s26
      %s28 = sshll.u32 [#allocation5], 4
      %s29 = int_to_ptr.vmem [resolvable:$true] %s28
      %34 = dma.hbm_to_vmem [thread:$0]  %s1, 384, %s29, [#allocation6], 64, 64, 4
    $region9: #{encoder_forward.2} parent=1 // pred_fallthru
      _
    // Predicated region
    $region10: #{encoder_forward.2} parent=1 // pred_check
      _
    $region11: #{encoder_forward.2} parent=1 // pred_check_branch
      %36 = sbr.rel (0) target = $region13
    $region12: #{encoder_forward.2} parent=1 // pred_region
      %s38 = ssub.s32 48, 48
      %39 = vsyncadd [#allocation6], %s38
      %s40 = sshll.u32 [#allocation7], 4
      %s41 = int_to_ptr.vmem [resolvable:$true] %s40
      %46 = dma.hbm_to_vmem [thread:$0]  %s2, 48, %s41, [#allocation6], 16, 16, 1
    $region13: #{encoder_forward.2} parent=1 // pred_fallthru
      _
    // Predicated region
    $region14: #{encoder_forward.2} parent=1 // pred_check
      _
    $region15: #{encoder_forward.2} parent=1 // pred_check_branch
      %48 = sbr.rel (0) target = $region17
    $region16: #{encoder_forward.2} parent=1 // pred_region
      %49 = dma.done [#allocation3], 128
    $region17: #{encoder_forward.2} parent=1 // pred_fallthru
      _
    // Predicated region
    $region18: #{encoder_forward.2} parent=1 // pred_check
      _
    $region19: #{encoder_forward.2} parent=1 // pred_check_branch
      %51 = sbr.rel (0) target = $region21
    $region20: #{encoder_forward.2} parent=1 // pred_region
      %52 = dma.done [#allocation6], 384
    $region21: #{encoder_forward.2} parent=1 // pred_fallthru
      _
    // Predicated region
    $region22: #{encoder_forward.2} parent=1 // pred_check
      _
    $region23: #{encoder_forward.2} parent=1 // pred_check_branch
      %54 = sbr.rel (0) target = $region25
    $region24: #{encoder_forward.2} parent=1 // pred_region
      %55 = dma.done [#allocation6], 48
    $region25: #{encoder_forward.2} parent=1 // pred_fallthru
      _
    %v57 = vld [vmem:[#allocation5] sm:$0xf]
    %v58 = vld [vmem:[#allocation5 + $0x4] sm:$0xf]
    %s59 = scalar_lea.vmem [#allocation5], 8
    %v60 = vld [vmem:[%s59] sm:$0xf]
    %v61 = vld [vmem:[%s59 + $0x4] sm:$0xf]
    %s62 = scalar_lea.vmem [#allocation5], 16
    %v63 = vld [vmem:[%s62] sm:$0xf]
    %v64 = vld [vmem:[%s62 + $0x4] sm:$0xf]
    %v65 = vld [vmem:[#allocation7] sm:$0x1]
    %s66 = scalar_lea.vmem [#allocation7], 1
    %v67 = vld [vmem:[%s66] sm:$0x1]
    %s68 = scalar_lea.vmem [#allocation7], 2
    %v69 = vld [vmem:[%s68] sm:$0x1]
    %v70 = vld [vmem:[#allocation2] sm:$0x1]
    %v72 = vlaneseq
    %v73 = vshrl.u32 %v72, 7
    %v74 = vsub.s32 0, %v73
    %v75 = vrot.slane %v65, %v74
    %v79 = vunpack.c.l.b16 %v57
    %v80 = vunpack.c.l.b16 %v58
    %v81 = vpack.c.b16 %v80, %v79
    %vm83 = vcmask 130048
    %v85 = vsel %vm83, %v70, 0
    %87 = vmatprep.subr.bf16.mxu0 0
    %88 = vmatpush1.bf16.msra.mxu0 %v81
    %89 = vmatprep.subr.bf16.mxu0 0
    %90 = vmatpush1.bf16.msra.mxu0 0
    %91 = vmatprep.subr.bf16.mxu0 0
    %92 = vmatpush1.bf16.msra.mxu0 0
    %93 = vmatprep.subr.bf16.mxu0 0
    %94 = vmatpush1.bf16.msra.mxu0 0
    %95 = vmatprep.subr.bf16.mxu0 0
    %96 = vmatpush1.bf16.msra.mxu0 0
    %97 = vmatprep.subr.bf16.mxu0 0
    %98 = vmatpush1.bf16.msra.mxu0 0
    %99 = vmatprep.subr.bf16.mxu0 0
    %100 = vmatpush1.bf16.msra.mxu0 0
    %101 = vmatprep.subr.bf16.mxu0 0
    %102 = vmatpush1.bf16.msra.mxu0 0
    %103 = vmatprep.subr.bf16.mxu0 0
    %104 = vmatpush1.bf16.msra.mxu0 0
    %105 = vmatprep.subr.bf16.mxu0 0
    %106 = vmatpush1.bf16.msra.mxu0 0
    %107 = vmatprep.subr.bf16.mxu0 0
    %108 = vmatpush1.bf16.msra.mxu0 0
    %109 = vmatprep.subr.bf16.mxu0 0
    %110 = vmatpush1.bf16.msra.mxu0 0
    %111 = vmatprep.subr.bf16.mxu0 0
    %112 = vmatpush1.bf16.msra.mxu0 0
    %113 = vmatprep.subr.bf16.mxu0 0
    %114 = vmatpush1.bf16.msra.mxu0 0
    %115 = vmatprep.subr.bf16.mxu0 0
    %116 = vmatpush1.bf16.msra.mxu0 0
    %117 = vmatprep.subr.bf16.mxu0 0
    %118 = vmatpush1.bf16.msra.mxu0 0
    %119 = vmatprep.mubr.bf16.mxu0 0
    %120 = vmatmul.mubr.bf16.gmra.mrb[0].mxu0 %v85
    %v121 = vpop.f32.mrb[0].mxu0
    %v122 = vadd.f32 %v75, %v121
    %v123 = vpop.f32.mrb[0].mxu0
    %v124 = vpop.f32.mrb[0].mxu0
    %v125 = vpop.f32.mrb[0].mxu0
    %126 = vdwg.mxu0
    %vm127 = vcmask 254976
    %128 = vst.msk [vmem:[#allocation8] sm:$0x3] %vm127, %v122
    %v130 = vlaneseq
    %v131 = vshrl.u32 %v130, 7
    %v132 = vsub.s32 0, %v131
    %v133 = vrot.slane %v67, %v132
    %v137 = vunpack.c.l.b16 %v60
    %v138 = vunpack.c.l.b16 %v61
    %v139 = vpack.c.b16 %v138, %v137
    %141 = vmatprep.subr.bf16.mxu0 0
    %142 = vmatpush1.bf16.msra.mxu0 %v139
    %143 = vmatprep.subr.bf16.mxu0 0
    %144 = vmatpush1.bf16.msra.mxu0 0
    %145 = vmatprep.subr.bf16.mxu0 0
    %146 = vmatpush1.bf16.msra.mxu0 0
    %147 = vmatprep.subr.bf16.mxu0 0
    %148 = vmatpush1.bf16.msra.mxu0 0
    %149 = vmatprep.subr.bf16.mxu0 0
    %150 = vmatpush1.bf16.msra.mxu0 0
    %151 = vmatprep.subr.bf16.mxu0 0
    %152 = vmatpush1.bf16.msra.mxu0 0
    %153 = vmatprep.subr.bf16.mxu0 0
    %154 = vmatpush1.bf16.msra.mxu0 0
    %155 = vmatprep.subr.bf16.mxu0 0
    %156 = vmatpush1.bf16.msra.mxu0 0
    %157 = vmatprep.subr.bf16.mxu0 0
    %158 = vmatpush1.bf16.msra.mxu0 0
    %159 = vmatprep.subr.bf16.mxu0 0
    %160 = vmatpush1.bf16.msra.mxu0 0
    %161 = vmatprep.subr.bf16.mxu0 0
    %162 = vmatpush1.bf16.msra.mxu0 0
    %163 = vmatprep.subr.bf16.mxu0 0
    %164 = vmatpush1.bf16.msra.mxu0 0
    %165 = vmatprep.subr.bf16.mxu0 0
    %166 = vmatpush1.bf16.msra.mxu0 0
    %167 = vmatprep.subr.bf16.mxu0 0
    %168 = vmatpush1.bf16.msra.mxu0 0
    %169 = vmatprep.subr.bf16.mxu0 0
    %170 = vmatpush1.bf16.msra.mxu0 0
    %171 = vmatprep.subr.bf16.mxu0 0
    %172 = vmatpush1.bf16.msra.mxu0 0
    %173 = vmatprep.mubr.bf16.mxu0 0
    %174 = vmatmul.mubr.bf16.gmra.mrb[0].mxu0 %v85
    %v175 = vpop.f32.mrb[0].mxu0
    %v176 = vadd.f32 %v133, %v175
    %v177 = vpop.f32.mrb[0].mxu0
    %v178 = vpop.f32.mrb[0].mxu0
    %v179 = vpop.f32.mrb[0].mxu0
    %180 = vdwg.mxu0
    %s181 = scalar_lea.vmem [#allocation8], 2
    %182 = vst.msk [vmem:[%s181] sm:$0x3] %vm127, %v176
    %v184 = vlaneseq
    %v185 = vshrl.u32 %v184, 7
    %v186 = vsub.s32 0, %v185
    %v187 = vrot.slane %v69, %v186
    %v191 = vunpack.c.l.b16 %v63
    %v192 = vunpack.c.l.b16 %v64
    %v193 = vpack.c.b16 %v192, %v191
    %195 = vmatprep.subr.bf16.mxu0 0
    %196 = vmatpush1.bf16.msra.mxu0 %v193
    %197 = vmatprep.subr.bf16.mxu0 0
    %198 = vmatpush1.bf16.msra.mxu0 0
    %199 = vmatprep.subr.bf16.mxu0 0
    %200 = vmatpush1.bf16.msra.mxu0 0
    %201 = vmatprep.subr.bf16.mxu0 0
    %202 = vmatpush1.bf16.msra.mxu0 0
    %203 = vmatprep.subr.bf16.mxu0 0
    %204 = vmatpush1.bf16.msra.mxu0 0
    %205 = vmatprep.subr.bf16.mxu0 0
    %206 = vmatpush1.bf16.msra.mxu0 0
    %207 = vmatprep.subr.bf16.mxu0 0
    %208 = vmatpush1.bf16.msra.mxu0 0
    %209 = vmatprep.subr.bf16.mxu0 0
    %210 = vmatpush1.bf16.msra.mxu0 0
    %211 = vmatprep.subr.bf16.mxu0 0
    %212 = vmatpush1.bf16.msra.mxu0 0
    %213 = vmatprep.subr.bf16.mxu0 0
    %214 = vmatpush1.bf16.msra.mxu0 0
    %215 = vmatprep.subr.bf16.mxu0 0
    %216 = vmatpush1.bf16.msra.mxu0 0
    %217 = vmatprep.subr.bf16.mxu0 0
    %218 = vmatpush1.bf16.msra.mxu0 0
    %219 = vmatprep.subr.bf16.mxu0 0
    %220 = vmatpush1.bf16.msra.mxu0 0
    %221 = vmatprep.subr.bf16.mxu0 0
    %222 = vmatpush1.bf16.msra.mxu0 0
    %223 = vmatprep.subr.bf16.mxu0 0
    %224 = vmatpush1.bf16.msra.mxu0 0
    %225 = vmatprep.subr.bf16.mxu0 0
    %226 = vmatpush1.bf16.msra.mxu0 0
    %227 = vmatprep.mubr.bf16.mxu0 0
    %228 = vmatmul.mubr.bf16.gmra.mrb[0].mxu0 %v85
    %v229 = vpop.f32.mrb[0].mxu0
    %v230 = vadd.f32 %v187, %v229
    %v231 = vpop.f32.mrb[0].mxu0
    %v232 = vpop.f32.mrb[0].mxu0
    %v233 = vpop.f32.mrb[0].mxu0
    %234 = vdwg.mxu0
    %s235 = scalar_lea.vmem [#allocation8], 4
    %236 = vst.msk [vmem:[%s235] sm:$0x3] %vm127, %v230
    %s237 = scalar_lea.vmem [#allocation2], 1
    %v238 = vld [vmem:[%s237] sm:$0x1]
    %v240 = vsel %vm83, %v238, 0
    %242 = vmatprep.subr.bf16.mxu0 0
    %243 = vmatpush1.bf16.msra.mxu0 %v81
    %244 = vmatprep.subr.bf16.mxu0 0
    %245 = vmatpush1.bf16.msra.mxu0 0
    %246 = vmatprep.subr.bf16.mxu0 0
    %247 = vmatpush1.bf16.msra.mxu0 0
    %248 = vmatprep.subr.bf16.mxu0 0
    %249 = vmatpush1.bf16.msra.mxu0 0
    %250 = vmatprep.subr.bf16.mxu0 0
    %251 = vmatpush1.bf16.msra.mxu0 0
    %252 = vmatprep.subr.bf16.mxu0 0
    %253 = vmatpush1.bf16.msra.mxu0 0
    %254 = vmatprep.subr.bf16.mxu0 0
    %255 = vmatpush1.bf16.msra.mxu0 0
    %256 = vmatprep.subr.bf16.mxu0 0
    %257 = vmatpush1.bf16.msra.mxu0 0
    %258 = vmatprep.subr.bf16.mxu0 0
    %259 = vmatpush1.bf16.msra.mxu0 0
    %260 = vmatprep.subr.bf16.mxu0 0
    %261 = vmatpush1.bf16.msra.mxu0 0
    %262 = vmatprep.subr.bf16.mxu0 0
    %263 = vmatpush1.bf16.msra.mxu0 0
    %264 = vmatprep.subr.bf16.mxu0 0
    %265 = vmatpush1.bf16.msra.mxu0 0
    %266 = vmatprep.subr.bf16.mxu0 0
    %267 = vmatpush1.bf16.msra.mxu0 0
    %268 = vmatprep.subr.bf16.mxu0 0
    %269 = vmatpush1.bf16.msra.mxu0 0
    %270 = vmatprep.subr.bf16.mxu0 0
    %271 = vmatpush1.bf16.msra.mxu0 0
    %272 = vmatprep.subr.bf16.mxu0 0
    %273 = vmatpush1.bf16.msra.mxu0 0
    %274 = vmatprep.mubr.bf16.mxu0 0
    %275 = vmatmul.mubr.bf16.gmra.mrb[0].mxu0 %v240
    %v276 = vpop.f32.mrb[0].mxu0
    %v277 = vadd.f32 %v75, %v276
    %v278 = vpop.f32.mrb[0].mxu0
    %v279 = vpop.f32.mrb[0].mxu0
    %v280 = vpop.f32.mrb[0].mxu0
    %281 = vdwg.mxu0
    %s282 = scalar_lea.vmem [#allocation8], 6
    %283 = vst.msk [vmem:[%s282] sm:$0x3] %vm127, %v277
    %284 = vmatprep.subr.bf16.mxu0 0
    %285 = vmatpush1.bf16.msra.mxu0 %v139
    %286 = vmatprep.subr.bf16.mxu0 0
    %287 = vmatpush1.bf16.msra.mxu0 0
    %288 = vmatprep.subr.bf16.mxu0 0
    %289 = vmatpush1.bf16.msra.mxu0 0
    %290 = vmatprep.subr.bf16.mxu0 0
    %291 = vmatpush1.bf16.msra.mxu0 0
    %292 = vmatprep.subr.bf16.mxu0 0
    %293 = vmatpush1.bf16.msra.mxu0 0
    %294 = vmatprep.subr.bf16.mxu0 0
    %295 = vmatpush1.bf16.msra.mxu0 0
    %296 = vmatprep.subr.bf16.mxu0 0
    %297 = vmatpush1.bf16.msra.mxu0 0
    %298 = vmatprep.subr.bf16.mxu0 0
    %299 = vmatpush1.bf16.msra.mxu0 0
    %300 = vmatprep.subr.bf16.mxu0 0
    %301 = vmatpush1.bf16.msra.mxu0 0
    %302 = vmatprep.subr.bf16.mxu0 0
    %303 = vmatpush1.bf16.msra.mxu0 0
    %304 = vmatprep.subr.bf16.mxu0 0
    %305 = vmatpush1.bf16.msra.mxu0 0
    %306 = vmatprep.subr.bf16.mxu0 0
    %307 = vmatpush1.bf16.msra.mxu0 0
    %308 = vmatprep.subr.bf16.mxu0 0
    %309 = vmatpush1.bf16.msra.mxu0 0
    %310 = vmatprep.subr.bf16.mxu0 0
    %311 = vmatpush1.bf16.msra.mxu0 0
    %312 = vmatprep.subr.bf16.mxu0 0
    %313 = vmatpush1.bf16.msra.mxu0 0
    %314 = vmatprep.subr.bf16.mxu0 0
    %315 = vmatpush1.bf16.msra.mxu0 0
    %316 = vmatprep.mubr.bf16.mxu0 0
    %317 = vmatmul.mubr.bf16.gmra.mrb[0].mxu0 %v240
    %v318 = vpop.f32.mrb[0].mxu0
    %v319 = vadd.f32 %v133, %v318
    %v320 = vpop.f32.mrb[0].mxu0
    %v321 = vpop.f32.mrb[0].mxu0
    %v322 = vpop.f32.mrb[0].mxu0
    %323 = vdwg.mxu0
    %s324 = scalar_lea.vmem [#allocation8], 8
    %325 = vst.msk [vmem:[%s324] sm:$0x3] %vm127, %v319
    %326 = vmatprep.subr.bf16.mxu0 0
    %327 = vmatpush1.bf16.msra.mxu0 %v193
    %328 = vmatprep.subr.bf16.mxu0 0
    %329 = vmatpush1.bf16.msra.mxu0 0
    %330 = vmatprep.subr.bf16.mxu0 0
    %331 = vmatpush1.bf16.msra.mxu0 0
    %332 = vmatprep.subr.bf16.mxu0 0
    %333 = vmatpush1.bf16.msra.mxu0 0
    %334 = vmatprep.subr.bf16.mxu0 0
    %335 = vmatpush1.bf16.msra.mxu0 0
    %336 = vmatprep.subr.bf16.mxu0 0
    %337 = vmatpush1.bf16.msra.mxu0 0
    %338 = vmatprep.subr.bf16.mxu0 0
    %339 = vmatpush1.bf16.msra.mxu0 0
    %340 = vmatprep.subr.bf16.mxu0 0
    %341 = vmatpush1.bf16.msra.mxu0 0
    %342 = vmatprep.subr.bf16.mxu0 0
    %343 = vmatpush1.bf16.msra.mxu0 0
    %344 = vmatprep.subr.bf16.mxu0 0
    %345 = vmatpush1.bf16.msra.mxu0 0
    %346 = vmatprep.subr.bf16.mxu0 0
    %347 = vmatpush1.bf16.msra.mxu0 0
    %348 = vmatprep.subr.bf16.mxu0 0
    %349 = vmatpush1.bf16.msra.mxu0 0
    %350 = vmatprep.subr.bf16.mxu0 0
    %351 = vmatpush1.bf16.msra.mxu0 0
    %352 = vmatprep.subr.bf16.mxu0 0
    %353 = vmatpush1.bf16.msra.mxu0 0
    %354 = vmatprep.subr.bf16.mxu0 0
    %355 = vmatpush1.bf16.msra.mxu0 0
    %356 = vmatprep.subr.bf16.mxu0 0
    %357 = vmatpush1.bf16.msra.mxu0 0
    %358 = vmatprep.mubr.bf16.mxu0 0
    %359 = vmatmul.mubr.bf16.gmra.mrb[0].mxu0 %v240
    %v360 = vpop.f32.mrb[0].mxu0
    %v361 = vadd.f32 %v187, %v360
    %v362 = vpop.f32.mrb[0].mxu0
    %v363 = vpop.f32.mrb[0].mxu0
    %v364 = vpop.f32.mrb[0].mxu0
    %365 = vdwg.mxu0
    %s366 = scalar_lea.vmem [#allocation8], 10
    %367 = vst.msk [vmem:[%s366] sm:$0x3] %vm127, %v361
    %s368 = scalar_lea.vmem [#allocation2], 2
    %v369 = vld [vmem:[%s368] sm:$0x1]
    %v371 = vsel %vm83, %v369, 0
    %373 = vmatprep.subr.bf16.mxu0 0
    %374 = vmatpush1.bf16.msra.mxu0 %v81
    %375 = vmatprep.subr.bf16.mxu0 0
    %376 = vmatpush1.bf16.msra.mxu0 0
    %377 = vmatprep.subr.bf16.mxu0 0
    %378 = vmatpush1.bf16.msra.mxu0 0
    %379 = vmatprep.subr.bf16.mxu0 0
    %380 = vmatpush1.bf16.msra.mxu0 0
    %381 = vmatprep.subr.bf16.mxu0 0
    %382 = vmatpush1.bf16.msra.mxu0 0
    %383 = vmatprep.subr.bf16.mxu0 0
    %384 = vmatpush1.bf16.msra.mxu0 0
    %385 = vmatprep.subr.bf16.mxu0 0
    %386 = vmatpush1.bf16.msra.mxu0 0
    %387 = vmatprep.subr.bf16.mxu0 0
    %388 = vmatpush1.bf16.msra.mxu0 0
    %389 = vmatprep.subr.bf16.mxu0 0
    %390 = vmatpush1.bf16.msra.mxu0 0
    %391 = vmatprep.subr.bf16.mxu0 0
    %392 = vmatpush1.bf16.msra.mxu0 0
    %393 = vmatprep.subr.bf16.mxu0 0
    %394 = vmatpush1.bf16.msra.mxu0 0
    %395 = vmatprep.subr.bf16.mxu0 0
    %396 = vmatpush1.bf16.msra.mxu0 0
    %397 = vmatprep.subr.bf16.mxu0 0
    %398 = vmatpush1.bf16.msra.mxu0 0
    %399 = vmatprep.subr.bf16.mxu0 0
    %400 = vmatpush1.bf16.msra.mxu0 0
    %401 = vmatprep.subr.bf16.mxu0 0
    %402 = vmatpush1.bf16.msra.mxu0 0
    %403 = vmatprep.subr.bf16.mxu0 0
    %404 = vmatpush1.bf16.msra.mxu0 0
    %405 = vmatprep.mubr.bf16.mxu0 0
    %406 = vmatmul.mubr.bf16.gmra.mrb[0].mxu0 %v371
    %v407 = vpop.f32.mrb[0].mxu0
    %v408 = vadd.f32 %v75, %v407
    %v409 = vpop.f32.mrb[0].mxu0
    %v410 = vpop.f32.mrb[0].mxu0
    %v411 = vpop.f32.mrb[0].mxu0
    %412 = vdwg.mxu0
    %s413 = scalar_lea.vmem [#allocation8], 12
    %414 = vst.msk [vmem:[%s413] sm:$0x3] %vm127, %v408
    %415 = vmatprep.subr.bf16.mxu0 0
    %416 = vmatpush1.bf16.msra.mxu0 %v139
    %417 = vmatprep.subr.bf16.mxu0 0
    %418 = vmatpush1.bf16.msra.mxu0 0
    %419 = vmatprep.subr.bf16.mxu0 0
    %420 = vmatpush1.bf16.msra.mxu0 0
    %421 = vmatprep.subr.bf16.mxu0 0
    %422 = vmatpush1.bf16.msra.mxu0 0
    %423 = vmatprep.subr.bf16.mxu0 0
    %424 = vmatpush1.bf16.msra.mxu0 0
    %425 = vmatprep.subr.bf16.mxu0 0
    %426 = vmatpush1.bf16.msra.mxu0 0
    %427 = vmatprep.subr.bf16.mxu0 0
    %428 = vmatpush1.bf16.msra.mxu0 0
    %429 = vmatprep.subr.bf16.mxu0 0
    %430 = vmatpush1.bf16.msra.mxu0 0
    %431 = vmatprep.subr.bf16.mxu0 0
    %432 = vmatpush1.bf16.msra.mxu0 0
    %433 = vmatprep.subr.bf16.mxu0 0
    %434 = vmatpush1.bf16.msra.mxu0 0
    %435 = vmatprep.subr.bf16.mxu0 0
    %436 = vmatpush1.bf16.msra.mxu0 0
    %437 = vmatprep.subr.bf16.mxu0 0
    %438 = vmatpush1.bf16.msra.mxu0 0
    %439 = vmatprep.subr.bf16.mxu0 0
    %440 = vmatpush1.bf16.msra.mxu0 0
    %441 = vmatprep.subr.bf16.mxu0 0
    %442 = vmatpush1.bf16.msra.mxu0 0
    %443 = vmatprep.subr.bf16.mxu0 0
    %444 = vmatpush1.bf16.msra.mxu0 0
    %445 = vmatprep.subr.bf16.mxu0 0
    %446 = vmatpush1.bf16.msra.mxu0 0
    %447 = vmatprep.mubr.bf16.mxu0 0
    %448 = vmatmul.mubr.bf16.gmra.mrb[0].mxu0 %v371
    %v449 = vpop.f32.mrb[0].mxu0
    %v450 = vadd.f32 %v133, %v449
    %v451 = vpop.f32.mrb[0].mxu0
    %v452 = vpop.f32.mrb[0].mxu0
    %v453 = vpop.f32.mrb[0].mxu0
    %454 = vdwg.mxu0
    %s455 = scalar_lea.vmem [#allocation8], 14
    %456 = vst.msk [vmem:[%s455] sm:$0x3] %vm127, %v450
    %457 = vmatprep.subr.bf16.mxu0 0
    %458 = vmatpush1.bf16.msra.mxu0 %v193
    %459 = vmatprep.subr.bf16.mxu0 0
    %460 = vmatpush1.bf16.msra.mxu0 0
    %461 = vmatprep.subr.bf16.mxu0 0
    %462 = vmatpush1.bf16.msra.mxu0 0
    %463 = vmatprep.subr.bf16.mxu0 0
    %464 = vmatpush1.bf16.msra.mxu0 0
    %465 = vmatprep.subr.bf16.mxu0 0
    %466 = vmatpush1.bf16.msra.mxu0 0
    %467 = vmatprep.subr.bf16.mxu0 0
    %468 = vmatpush1.bf16.msra.mxu0 0
    %469 = vmatprep.subr.bf16.mxu0 0
    %470 = vmatpush1.bf16.msra.mxu0 0
    %471 = vmatprep.subr.bf16.mxu0 0
    %472 = vmatpush1.bf16.msra.mxu0 0
    %473 = vmatprep.subr.bf16.mxu0 0
    %474 = vmatpush1.bf16.msra.mxu0 0
    %475 = vmatprep.subr.bf16.mxu0 0
    %476 = vmatpush1.bf16.msra.mxu0 0
    %477 = vmatprep.subr.bf16.mxu0 0
    %478 = vmatpush1.bf16.msra.mxu0 0
    %479 = vmatprep.subr.bf16.mxu0 0
    %480 = vmatpush1.bf16.msra.mxu0 0
    %481 = vmatprep.subr.bf16.mxu0 0
    %482 = vmatpush1.bf16.msra.mxu0 0
    %483 = vmatprep.subr.bf16.mxu0 0
    %484 = vmatpush1.bf16.msra.mxu0 0
    %485 = vmatprep.subr.bf16.mxu0 0
    %486 = vmatpush1.bf16.msra.mxu0 0
    %487 = vmatprep.subr.bf16.mxu0 0
    %488 = vmatpush1.bf16.msra.mxu0 0
    %489 = vmatprep.mubr.bf16.mxu0 0
    %490 = vmatmul.mubr.bf16.gmra.mrb[0].mxu0 %v371
    %v491 = vpop.f32.mrb[0].mxu0
    %v492 = vadd.f32 %v187, %v491
    %v493 = vpop.f32.mrb[0].mxu0
    %v494 = vpop.f32.mrb[0].mxu0
    %v495 = vpop.f32.mrb[0].mxu0
    %496 = vdwg.mxu0
    %s497 = scalar_lea.vmem [#allocation8], 16
    %498 = vst.msk [vmem:[%s497] sm:$0x3] %vm127, %v492
    %s499 = scalar_lea.vmem [#allocation2], 3
    %v500 = vld [vmem:[%s499] sm:$0x1]
    %v502 = vsel %vm83, %v500, 0
    %504 = vmatprep.subr.bf16.mxu0 0
    %505 = vmatpush1.bf16.msra.mxu0 %v81
    %506 = vmatprep.subr.bf16.mxu0 0
    %507 = vmatpush1.bf16.msra.mxu0 0
    %508 = vmatprep.subr.bf16.mxu0 0
    %509 = vmatpush1.bf16.msra.mxu0 0
    %510 = vmatprep.subr.bf16.mxu0 0
    %511 = vmatpush1.bf16.msra.mxu0 0
    %512 = vmatprep.subr.bf16.mxu0 0
    %513 = vmatpush1.bf16.msra.mxu0 0
    %514 = vmatprep.subr.bf16.mxu0 0
    %515 = vmatpush1.bf16.msra.mxu0 0
    %516 = vmatprep.subr.bf16.mxu0 0
    %517 = vmatpush1.bf16.msra.mxu0 0
    %518 = vmatprep.subr.bf16.mxu0 0
    %519 = vmatpush1.bf16.msra.mxu0 0
    %520 = vmatprep.subr.bf16.mxu0 0
    %521 = vmatpush1.bf16.msra.mxu0 0
    %522 = vmatprep.subr.bf16.mxu0 0
    %523 = vmatpush1.bf16.msra.mxu0 0
    %524 = vmatprep.subr.bf16.mxu0 0
    %525 = vmatpush1.bf16.msra.mxu0 0
    %526 = vmatprep.subr.bf16.mxu0 0
    %527 = vmatpush1.bf16.msra.mxu0 0
    %528 = vmatprep.subr.bf16.mxu0 0
    %529 = vmatpush1.bf16.msra.mxu0 0
    %530 = vmatprep.subr.bf16.mxu0 0
    %531 = vmatpush1.bf16.msra.mxu0 0
    %532 = vmatprep.subr.bf16.mxu0 0
    %533 = vmatpush1.bf16.msra.mxu0 0
    %534 = vmatprep.subr.bf16.mxu0 0
    %535 = vmatpush1.bf16.msra.mxu0 0
    %536 = vmatprep.mubr.bf16.mxu0 0
    %537 = vmatmul.mubr.bf16.gmra.mrb[0].mxu0 %v502
    %v538 = vpop.f32.mrb[0].mxu0
    %v539 = vadd.f32 %v75, %v538
    %v540 = vpop.f32.mrb[0].mxu0
    %v541 = vpop.f32.mrb[0].mxu0
    %v542 = vpop.f32.mrb[0].mxu0
    %543 = vdwg.mxu0
    %s544 = scalar_lea.vmem [#allocation8], 18
    %545 = vst.msk [vmem:[%s544] sm:$0x3] %vm127, %v539
    %546 = vmatprep.subr.bf16.mxu0 0
    %547 = vmatpush1.bf16.msra.mxu0 %v139
    %548 = vmatprep.subr.bf16.mxu0 0
    %549 = vmatpush1.bf16.msra.mxu0 0
    %550 = vmatprep.subr.bf16.mxu0 0
    %551 = vmatpush1.bf16.msra.mxu0 0
    %552 = vmatprep.subr.bf16.mxu0 0
    %553 = vmatpush1.bf16.msra.mxu0 0
    %554 = vmatprep.subr.bf16.mxu0 0
    %555 = vmatpush1.bf16.msra.mxu0 0
    %556 = vmatprep.subr.bf16.mxu0 0
    %557 = vmatpush1.bf16.msra.mxu0 0
    %558 = vmatprep.subr.bf16.mxu0 0
    %559 = vmatpush1.bf16.msra.mxu0 0
    %560 = vmatprep.subr.bf16.mxu0 0
    %561 = vmatpush1.bf16.msra.mxu0 0
    %562 = vmatprep.subr.bf16.mxu0 0
    %563 = vmatpush1.bf16.msra.mxu0 0
    %564 = vmatprep.subr.bf16.mxu0 0
    %565 = vmatpush1.bf16.msra.mxu0 0
    %566 = vmatprep.subr.bf16.mxu0 0
    %567 = vmatpush1.bf16.msra.mxu0 0
    %568 = vmatprep.subr.bf16.mxu0 0
    %569 = vmatpush1.bf16.msra.mxu0 0
    %570 = vmatprep.subr.bf16.mxu0 0
    %571 = vmatpush1.bf16.msra.mxu0 0
    %572 = vmatprep.subr.bf16.mxu0 0
    %573 = vmatpush1.bf16.msra.mxu0 0
    %574 = vmatprep.subr.bf16.mxu0 0
    %575 = vmatpush1.bf16.msra.mxu0 0
    %576 = vmatprep.subr.bf16.mxu0 0
    %577 = vmatpush1.bf16.msra.mxu0 0
    %578 = vmatprep.mubr.bf16.mxu0 0
    %579 = vmatmul.mubr.bf16.gmra.mrb[0].mxu0 %v502
    %v580 = vpop.f32.mrb[0].mxu0
    %v581 = vadd.f32 %v133, %v580
    %v582 = vpop.f32.mrb[0].mxu0
    %v583 = vpop.f32.mrb[0].mxu0
    %v584 = vpop.f32.mrb[0].mxu0
    %585 = vdwg.mxu0
    %s586 = scalar_lea.vmem [#allocation8], 20
    %587 = vst.msk [vmem:[%s586] sm:$0x3] %vm127, %v581
    %588 = vmatprep.subr.bf16.mxu0 0
    %589 = vmatpush1.bf16.msra.mxu0 %v193
    %590 = vmatprep.subr.bf16.mxu0 0
    %591 = vmatpush1.bf16.msra.mxu0 0
    %592 = vmatprep.subr.bf16.mxu0 0
    %593 = vmatpush1.bf16.msra.mxu0 0
    %594 = vmatprep.subr.bf16.mxu0 0
    %595 = vmatpush1.bf16.msra.mxu0 0
    %596 = vmatprep.subr.bf16.mxu0 0
    %597 = vmatpush1.bf16.msra.mxu0 0
    %598 = vmatprep.subr.bf16.mxu0 0
    %599 = vmatpush1.bf16.msra.mxu0 0
    %600 = vmatprep.subr.bf16.mxu0 0
    %601 = vmatpush1.bf16.msra.mxu0 0
    %602 = vmatprep.subr.bf16.mxu0 0
    %603 = vmatpush1.bf16.msra.mxu0 0
    %604 = vmatprep.subr.bf16.mxu0 0
    %605 = vmatpush1.bf16.msra.mxu0 0
    %606 = vmatprep.subr.bf16.mxu0 0
    %607 = vmatpush1.bf16.msra.mxu0 0
    %608 = vmatprep.subr.bf16.mxu0 0
    %609 = vmatpush1.bf16.msra.mxu0 0
    %610 = vmatprep.subr.bf16.mxu0 0
    %611 = vmatpush1.bf16.msra.mxu0 0
    %612 = vmatprep.subr.bf16.mxu0 0
    %613 = vmatpush1.bf16.msra.mxu0 0
    %614 = vmatprep.subr.bf16.mxu0 0
    %615 = vmatpush1.bf16.msra.mxu0 0
    %616 = vmatprep.subr.bf16.mxu0 0
    %617 = vmatpush1.bf16.msra.mxu0 0
    %618 = vmatprep.subr.bf16.mxu0 0
    %619 = vmatpush1.bf16.msra.mxu0 0
    %620 = vmatprep.mubr.bf16.mxu0 0
    %621 = vmatmul.mubr.bf16.gmra.mrb[0].mxu0 %v502
    %v622 = vpop.f32.mrb[0].mxu0
    %v623 = vadd.f32 %v187, %v622
    %v624 = vpop.f32.mrb[0].mxu0
    %v625 = vpop.f32.mrb[0].mxu0
    %v626 = vpop.f32.mrb[0].mxu0
    %627 = vdwg.mxu0
    %s628 = scalar_lea.vmem [#allocation8], 22
    %629 = vst.msk [vmem:[%s628] sm:$0x3] %vm127, %v623
    %s630 = scalar_lea.vmem [#allocation2], 4
    %v631 = vld [vmem:[%s630] sm:$0x1]
    %v633 = vsel %vm83, %v631, 0
    %635 = vmatprep.subr.bf16.mxu0 0
    %636 = vmatpush1.bf16.msra.mxu0 %v81
    %637 = vmatprep.subr.bf16.mxu0 0
    %638 = vmatpush1.bf16.msra.mxu0 0
    %639 = vmatprep.subr.bf16.mxu0 0
    %640 = vmatpush1.bf16.msra.mxu0 0
    %641 = vmatprep.subr.bf16.mxu0 0
    %642 = vmatpush1.bf16.msra.mxu0 0
    %643 = vmatprep.subr.bf16.mxu0 0
    %644 = vmatpush1.bf16.msra.mxu0 0
    %645 = vmatprep.subr.bf16.mxu0 0
    %646 = vmatpush1.bf16.msra.mxu0 0
    %647 = vmatprep.subr.bf16.mxu0 0
    %648 = vmatpush1.bf16.msra.mxu0 0
    %649 = vmatprep.subr.bf16.mxu0 0
    %650 = vmatpush1.bf16.msra.mxu0 0
    %651 = vmatprep.subr.bf16.mxu0 0
    %652 = vmatpush1.bf16.msra.mxu0 0
    %653 = vmatprep.subr.bf16.mxu0 0
    %654 = vmatpush1.bf16.msra.mxu0 0
    %655 = vmatprep.subr.bf16.mxu0 0
    %656 = vmatpush1.bf16.msra.mxu0 0
    %657 = vmatprep.subr.bf16.mxu0 0
    %658 = vmatpush1.bf16.msra.mxu0 0
    %659 = vmatprep.subr.bf16.mxu0 0
    %660 = vmatpush1.bf16.msra.mxu0 0
    %661 = vmatprep.subr.bf16.mxu0 0
    %662 = vmatpush1.bf16.msra.mxu0 0
    %663 = vmatprep.subr.bf16.mxu0 0
    %664 = vmatpush1.bf16.msra.mxu0 0
    %665 = vmatprep.subr.bf16.mxu0 0
    %666 = vmatpush1.bf16.msra.mxu0 0
    %667 = vmatprep.mubr.bf16.mxu0 0
    %668 = vmatmul.mubr.bf16.gmra.mrb[0].mxu0 %v633
    %v669 = vpop.f32.mrb[0].mxu0
    %v670 = vadd.f32 %v75, %v669
    %v671 = vpop.f32.mrb[0].mxu0
    %v672 = vpop.f32.mrb[0].mxu0
    %v673 = vpop.f32.mrb[0].mxu0
    %674 = vdwg.mxu0
    %s675 = scalar_lea.vmem [#allocation8], 24
    %676 = vst.msk [vmem:[%s675] sm:$0x3] %vm127, %v670
    %677 = vmatprep.subr.bf16.mxu0 0
    %678 = vmatpush1.bf16.msra.mxu0 %v139
    %679 = vmatprep.subr.bf16.mxu0 0
    %680 = vmatpush1.bf16.msra.mxu0 0
    %681 = vmatprep.subr.bf16.mxu0 0
    %682 = vmatpush1.bf16.msra.mxu0 0
    %683 = vmatprep.subr.bf16.mxu0 0
    %684 = vmatpush1.bf16.msra.mxu0 0
    %685 = vmatprep.subr.bf16.mxu0 0
    %686 = vmatpush1.bf16.msra.mxu0 0
    %687 = vmatprep.subr.bf16.mxu0 0
    %688 = vmatpush1.bf16.msra.mxu0 0
    %689 = vmatprep.subr.bf16.mxu0 0
    %690 = vmatpush1.bf16.msra.mxu0 0
    %691 = vmatprep.subr.bf16.mxu0 0
    %692 = vmatpush1.bf16.msra.mxu0 0
    %693 = vmatprep.subr.bf16.mxu0 0
    %694 = vmatpush1.bf16.msra.mxu0 0
    %695 = vmatprep.subr.bf16.mxu0 0
    %696 = vmatpush1.bf16.msra.mxu0 0
    %697 = vmatprep.subr.bf16.mxu0 0
    %698 = vmatpush1.bf16.msra.mxu0 0
    %699 = vmatprep.subr.bf16.mxu0 0
    %700 = vmatpush1.bf16.msra.mxu0 0
    %701 = vmatprep.subr.bf16.mxu0 0
    %702 = vmatpush1.bf16.msra.mxu0 0
    %703 = vmatprep.subr.bf16.mxu0 0
    %704 = vmatpush1.bf16.msra.mxu0 0
    %705 = vmatprep.subr.bf16.mxu0 0
    %706 = vmatpush1.bf16.msra.mxu0 0
    %707 = vmatprep.subr.bf16.mxu0 0
    %708 = vmatpush1.bf16.msra.mxu0 0
    %709 = vmatprep.mubr.bf16.mxu0 0
    %710 = vmatmul.mubr.bf16.gmra.mrb[0].mxu0 %v633
    %v711 = vpop.f32.mrb[0].mxu0
    %v712 = vadd.f32 %v133, %v711
    %v713 = vpop.f32.mrb[0].mxu0
    %v714 = vpop.f32.mrb[0].mxu0
    %v715 = vpop.f32.mrb[0].mxu0
    %716 = vdwg.mxu0
    %s717 = scalar_lea.vmem [#allocation8], 26
    %718 = vst.msk [vmem:[%s717] sm:$0x3] %vm127, %v712
    %719 = vmatprep.subr.bf16.mxu0 0
    %720 = vmatpush1.bf16.msra.mxu0 %v193
    %721 = vmatprep.subr.bf16.mxu0 0
    %722 = vmatpush1.bf16.msra.mxu0 0
    %723 = vmatprep.subr.bf16.mxu0 0
    %724 = vmatpush1.bf16.msra.mxu0 0
    %725 = vmatprep.subr.bf16.mxu0 0
    %726 = vmatpush1.bf16.msra.mxu0 0
    %727 = vmatprep.subr.bf16.mxu0 0
    %728 = vmatpush1.bf16.msra.mxu0 0
    %729 = vmatprep.subr.bf16.mxu0 0
    %730 = vmatpush1.bf16.msra.mxu0 0
    %731 = vmatprep.subr.bf16.mxu0 0
    %732 = vmatpush1.bf16.msra.mxu0 0
    %733 = vmatprep.subr.bf16.mxu0 0
    %734 = vmatpush1.bf16.msra.mxu0 0
    %735 = vmatprep.subr.bf16.mxu0 0
    %736 = vmatpush1.bf16.msra.mxu0 0
    %737 = vmatprep.subr.bf16.mxu0 0
    %738 = vmatpush1.bf16.msra.mxu0 0
    %739 = vmatprep.subr.bf16.mxu0 0
    %740 = vmatpush1.bf16.msra.mxu0 0
    %741 = vmatprep.subr.bf16.mxu0 0
    %742 = vmatpush1.bf16.msra.mxu0 0
    %743 = vmatprep.subr.bf16.mxu0 0
    %744 = vmatpush1.bf16.msra.mxu0 0
    %745 = vmatprep.subr.bf16.mxu0 0
    %746 = vmatpush1.bf16.msra.mxu0 0
    %747 = vmatprep.subr.bf16.mxu0 0
    %748 = vmatpush1.bf16.msra.mxu0 0
    %749 = vmatprep.subr.bf16.mxu0 0
    %750 = vmatpush1.bf16.msra.mxu0 0
    %751 = vmatprep.mubr.bf16.mxu0 0
    %752 = vmatmul.mubr.bf16.gmra.mrb[0].mxu0 %v633
    %v753 = vpop.f32.mrb[0].mxu0
    %v754 = vadd.f32 %v187, %v753
    %v755 = vpop.f32.mrb[0].mxu0
    %v756 = vpop.f32.mrb[0].mxu0
    %v757 = vpop.f32.mrb[0].mxu0
    %758 = vdwg.mxu0
    %s759 = scalar_lea.vmem [#allocation8], 28
    %760 = vst.msk [vmem:[%s759] sm:$0x3] %vm127, %v754
    %s761 = scalar_lea.vmem [#allocation2], 5
    %v762 = vld [vmem:[%s761] sm:$0x1]
    %v764 = vsel %vm83, %v762, 0
    %766 = vmatprep.subr.bf16.mxu0 0
    %767 = vmatpush1.bf16.msra.mxu0 %v81
    %768 = vmatprep.subr.bf16.mxu0 0
    %769 = vmatpush1.bf16.msra.mxu0 0
    %770 = vmatprep.subr.bf16.mxu0 0
    %771 = vmatpush1.bf16.msra.mxu0 0
    %772 = vmatprep.subr.bf16.mxu0 0
    %773 = vmatpush1.bf16.msra.mxu0 0
    %774 = vmatprep.subr.bf16.mxu0 0
    %775 = vmatpush1.bf16.msra.mxu0 0
    %776 = vmatprep.subr.bf16.mxu0 0
    %777 = vmatpush1.bf16.msra.mxu0 0
    %778 = vmatprep.subr.bf16.mxu0 0
    %779 = vmatpush1.bf16.msra.mxu0 0
    %780 = vmatprep.subr.bf16.mxu0 0
    %781 = vmatpush1.bf16.msra.mxu0 0
    %782 = vmatprep.subr.bf16.mxu0 0
    %783 = vmatpush1.bf16.msra.mxu0 0
    %784 = vmatprep.subr.bf16.mxu0 0
    %785 = vmatpush1.bf16.msra.mxu0 0
    %786 = vmatprep.subr.bf16.mxu0 0
    %787 = vmatpush1.bf16.msra.mxu0 0
    %788 = vmatprep.subr.bf16.mxu0 0
    %789 = vmatpush1.bf16.msra.mxu0 0
    %790 = vmatprep.subr.bf16.mxu0 0
    %791 = vmatpush1.bf16.msra.mxu0 0
    %792 = vmatprep.subr.bf16.mxu0 0
    %793 = vmatpush1.bf16.msra.mxu0 0
    %794 = vmatprep.subr.bf16.mxu0 0
    %795 = vmatpush1.bf16.msra.mxu0 0
    %796 = vmatprep.subr.bf16.mxu0 0
    %797 = vmatpush1.bf16.msra.mxu0 0
    %798 = vmatprep.mubr.bf16.mxu0 0
    %799 = vmatmul.mubr.bf16.gmra.mrb[0].mxu0 %v764
    %v800 = vpop.f32.mrb[0].mxu0
    %v801 = vadd.f32 %v75, %v800
    %v802 = vpop.f32.mrb[0].mxu0
    %v803 = vpop.f32.mrb[0].mxu0
    %v804 = vpop.f32.mrb[0].mxu0
    %805 = vdwg.mxu0
    %s806 = scalar_lea.vmem [#allocation8], 30
    %807 = vst.msk [vmem:[%s806] sm:$0x3] %vm127, %v801
    %808 = vmatprep.subr.bf16.mxu0 0
    %809 = vmatpush1.bf16.msra.mxu0 %v139
    %810 = vmatprep.subr.bf16.mxu0 0
    %811 = vmatpush1.bf16.msra.mxu0 0
    %812 = vmatprep.subr.bf16.mxu0 0
    %813 = vmatpush1.bf16.msra.mxu0 0
    %814 = vmatprep.subr.bf16.mxu0 0
    %815 = vmatpush1.bf16.msra.mxu0 0
    %816 = vmatprep.subr.bf16.mxu0 0
    %817 = vmatpush1.bf16.msra.mxu0 0
    %818 = vmatprep.subr.bf16.mxu0 0
    %819 = vmatpush1.bf16.msra.mxu0 0
    %820 = vmatprep.subr.bf16.mxu0 0
    %821 = vmatpush1.bf16.msra.mxu0 0
    %822 = vmatprep.subr.bf16.mxu0 0
    %823 = vmatpush1.bf16.msra.mxu0 0
    %824 = vmatprep.subr.bf16.mxu0 0
    %825 = vmatpush1.bf16.msra.mxu0 0
    %826 = vmatprep.subr.bf16.mxu0 0
    %827 = vmatpush1.bf16.msra.mxu0 0
    %828 = vmatprep.subr.bf16.mxu0 0
    %829 = vmatpush1.bf16.msra.mxu0 0
    %830 = vmatprep.subr.bf16.mxu0 0
    %831 = vmatpush1.bf16.msra.mxu0 0
    %832 = vmatprep.subr.bf16.mxu0 0
    %833 = vmatpush1.bf16.msra.mxu0 0
    %834 = vmatprep.subr.bf16.mxu0 0
    %835 = vmatpush1.bf16.msra.mxu0 0
    %836 = vmatprep.subr.bf16.mxu0 0
    %837 = vmatpush1.bf16.msra.mxu0 0
    %838 = vmatprep.subr.bf16.mxu0 0
    %839 = vmatpush1.bf16.msra.mxu0 0
    %840 = vmatprep.mubr.bf16.mxu0 0
    %841 = vmatmul.mubr.bf16.gmra.mrb[0].mxu0 %v764
    %v842 = vpop.f32.mrb[0].mxu0
    %v843 = vadd.f32 %v133, %v842
    %v844 = vpop.f32.mrb[0].mxu0
    %v845 = vpop.f32.mrb[0].mxu0
    %v846 = vpop.f32.mrb[0].mxu0
    %847 = vdwg.mxu0
    %s848 = scalar_lea.vmem [#allocation8], 32
    %849 = vst.msk [vmem:[%s848] sm:$0x3] %vm127, %v843
    %850 = vmatprep.subr.bf16.mxu0 0
    %851 = vmatpush1.bf16.msra.mxu0 %v193
    %852 = vmatprep.subr.bf16.mxu0 0
    %853 = vmatpush1.bf16.msra.mxu0 0
    %854 = vmatprep.subr.bf16.mxu0 0
    %855 = vmatpush1.bf16.msra.mxu0 0
    %856 = vmatprep.subr.bf16.mxu0 0
    %857 = vmatpush1.bf16.msra.mxu0 0
    %858 = vmatprep.subr.bf16.mxu0 0
    %859 = vmatpush1.bf16.msra.mxu0 0
    %860 = vmatprep.subr.bf16.mxu0 0
    %861 = vmatpush1.bf16.msra.mxu0 0
    %862 = vmatprep.subr.bf16.mxu0 0
    %863 = vmatpush1.bf16.msra.mxu0 0
    %864 = vmatprep.subr.bf16.mxu0 0
    %865 = vmatpush1.bf16.msra.mxu0 0
    %866 = vmatprep.subr.bf16.mxu0 0
    %867 = vmatpush1.bf16.msra.mxu0 0
    %868 = vmatprep.subr.bf16.mxu0 0
    %869 = vmatpush1.bf16.msra.mxu0 0
    %870 = vmatprep.subr.bf16.mxu0 0
    %871 = vmatpush1.bf16.msra.mxu0 0
    %872 = vmatprep.subr.bf16.mxu0 0
    %873 = vmatpush1.bf16.msra.mxu0 0
    %874 = vmatprep.subr.bf16.mxu0 0
    %875 = vmatpush1.bf16.msra.mxu0 0
    %876 = vmatprep.subr.bf16.mxu0 0
    %877 = vmatpush1.bf16.msra.mxu0 0
    %878 = vmatprep.subr.bf16.mxu0 0
    %879 = vmatpush1.bf16.msra.mxu0 0
    %880 = vmatprep.subr.bf16.mxu0 0
    %881 = vmatpush1.bf16.msra.mxu0 0
    %882 = vmatprep.mubr.bf16.mxu0 0
    %883 = vmatmul.mubr.bf16.gmra.mrb[0].mxu0 %v764
    %v884 = vpop.f32.mrb[0].mxu0
    %v885 = vadd.f32 %v187, %v884
    %v886 = vpop.f32.mrb[0].mxu0
    %v887 = vpop.f32.mrb[0].mxu0
    %v888 = vpop.f32.mrb[0].mxu0
    %889 = vdwg.mxu0
    %s890 = scalar_lea.vmem [#allocation8], 34
    %891 = vst.msk [vmem:[%s890] sm:$0x3] %vm127, %v885
    %s892 = scalar_lea.vmem [#allocation2], 6
    %v893 = vld [vmem:[%s892] sm:$0x1]
    %v895 = vsel %vm83, %v893, 0
    %897 = vmatprep.subr.bf16.mxu0 0
    %898 = vmatpush1.bf16.msra.mxu0 %v81
    %899 = vmatprep.subr.bf16.mxu0 0
    %900 = vmatpush1.bf16.msra.mxu0 0
    %901 = vmatprep.subr.bf16.mxu0 0
    %902 = vmatpush1.bf16.msra.mxu0 0
    %903 = vmatprep.subr.bf16.mxu0 0
    %904 = vmatpush1.bf16.msra.mxu0 0
    %905 = vmatprep.subr.bf16.mxu0 0
    %906 = vmatpush1.bf16.msra.mxu0 0
    %907 = vmatprep.subr.bf16.mxu0 0
    %908 = vmatpush1.bf16.msra.mxu0 0
    %909 = vmatprep.subr.bf16.mxu0 0
    %910 = vmatpush1.bf16.msra.mxu0 0
    %911 = vmatprep.subr.bf16.mxu0 0
    %912 = vmatpush1.bf16.msra.mxu0 0
    %913 = vmatprep.subr.bf16.mxu0 0
    %914 = vmatpush1.bf16.msra.mxu0 0
    %915 = vmatprep.subr.bf16.mxu0 0
    %916 = vmatpush1.bf16.msra.mxu0 0
    %917 = vmatprep.subr.bf16.mxu0 0
    %918 = vmatpush1.bf16.msra.mxu0 0
    %919 = vmatprep.subr.bf16.mxu0 0
    %920 = vmatpush1.bf16.msra.mxu0 0
    %921 = vmatprep.subr.bf16.mxu0 0
    %922 = vmatpush1.bf16.msra.mxu0 0
    %923 = vmatprep.subr.bf16.mxu0 0
    %924 = vmatpush1.bf16.msra.mxu0 0
    %925 = vmatprep.subr.bf16.mxu0 0
    %926 = vmatpush1.bf16.msra.mxu0 0
    %927 = vmatprep.subr.bf16.mxu0 0
    %928 = vmatpush1.bf16.msra.mxu0 0
    %929 = vmatprep.mubr.bf16.mxu0 0
    %930 = vmatmul.mubr.bf16.gmra.mrb[0].mxu0 %v895
    %v931 = vpop.f32.mrb[0].mxu0
    %v932 = vadd.f32 %v75, %v931
    %v933 = vpop.f32.mrb[0].mxu0
    %v934 = vpop.f32.mrb[0].mxu0
    %v935 = vpop.f32.mrb[0].mxu0
    %936 = vdwg.mxu0
    %s937 = scalar_lea.vmem [#allocation8], 36
    %938 = vst.msk [vmem:[%s937] sm:$0x3] %vm127, %v932
    %939 = vmatprep.subr.bf16.mxu0 0
    %940 = vmatpush1.bf16.msra.mxu0 %v139
    %941 = vmatprep.subr.bf16.mxu0 0
    %942 = vmatpush1.bf16.msra.mxu0 0
    %943 = vmatprep.subr.bf16.mxu0 0
    %944 = vmatpush1.bf16.msra.mxu0 0
    %945 = vmatprep.subr.bf16.mxu0 0
    %946 = vmatpush1.bf16.msra.mxu0 0
    %947 = vmatprep.subr.bf16.mxu0 0
    %948 = vmatpush1.bf16.msra.mxu0 0
    %949 = vmatprep.subr.bf16.mxu0 0
    %950 = vmatpush1.bf16.msra.mxu0 0
    %951 = vmatprep.subr.bf16.mxu0 0
    %952 = vmatpush1.bf16.msra.mxu0 0
    %953 = vmatprep.subr.bf16.mxu0 0
    %954 = vmatpush1.bf16.msra.mxu0 0
    %955 = vmatprep.subr.bf16.mxu0 0
    %956 = vmatpush1.bf16.msra.mxu0 0
    %957 = vmatprep.subr.bf16.mxu0 0
    %958 = vmatpush1.bf16.msra.mxu0 0
    %959 = vmatprep.subr.bf16.mxu0 0
    %960 = vmatpush1.bf16.msra.mxu0 0
    %961 = vmatprep.subr.bf16.mxu0 0
    %962 = vmatpush1.bf16.msra.mxu0 0
    %963 = vmatprep.subr.bf16.mxu0 0
    %964 = vmatpush1.bf16.msra.mxu0 0
    %965 = vmatprep.subr.bf16.mxu0 0
    %966 = vmatpush1.bf16.msra.mxu0 0
    %967 = vmatprep.subr.bf16.mxu0 0
    %968 = vmatpush1.bf16.msra.mxu0 0
    %969 = vmatprep.subr.bf16.mxu0 0
    %970 = vmatpush1.bf16.msra.mxu0 0
    %971 = vmatprep.mubr.bf16.mxu0 0
    %972 = vmatmul.mubr.bf16.gmra.mrb[0].mxu0 %v895
    %v973 = vpop.f32.mrb[0].mxu0
    %v974 = vadd.f32 %v133, %v973
    %v975 = vpop.f32.mrb[0].mxu0
    %v976 = vpop.f32.mrb[0].mxu0
    %v977 = vpop.f32.mrb[0].mxu0
    %978 = vdwg.mxu0
    %s979 = scalar_lea.vmem [#allocation8], 38
    %980 = vst.msk [vmem:[%s979] sm:$0x3] %vm127, %v974
    %981 = vmatprep.subr.bf16.mxu0 0
    %982 = vmatpush1.bf16.msra.mxu0 %v193
    %983 = vmatprep.subr.bf16.mxu0 0
    %984 = vmatpush1.bf16.msra.mxu0 0
    %985 = vmatprep.subr.bf16.mxu0 0
    %986 = vmatpush1.bf16.msra.mxu0 0
    %987 = vmatprep.subr.bf16.mxu0 0
    %988 = vmatpush1.bf16.msra.mxu0 0
    %989 = vmatprep.subr.bf16.mxu0 0
    %990 = vmatpush1.bf16.msra.mxu0 0
    %991 = vmatprep.subr.bf16.mxu0 0
    %992 = vmatpush1.bf16.msra.mxu0 0
    %993 = vmatprep.subr.bf16.mxu0 0
    %994 = vmatpush1.bf16.msra.mxu0 0
    %995 = vmatprep.subr.bf16.mxu0 0
    %996 = vmatpush1.bf16.msra.mxu0 0
    %997 = vmatprep.subr.bf16.mxu0 0
    %998 = vmatpush1.bf16.msra.mxu0 0
    %999 = vmatprep.subr.bf16.mxu0 0
    %1000 = vmatpush1.bf16.msra.mxu0 0
    %1001 = vmatprep.subr.bf16.mxu0 0
    %1002 = vmatpush1.bf16.msra.mxu0 0
    %1003 = vmatprep.subr.bf16.mxu0 0
    %1004 = vmatpush1.bf16.msra.mxu0 0
    %1005 = vmatprep.subr.bf16.mxu0 0
    %1006 = vmatpush1.bf16.msra.mxu0 0
    %1007 = vmatprep.subr.bf16.mxu0 0
    %1008 = vmatpush1.bf16.msra.mxu0 0
    %1009 = vmatprep.subr.bf16.mxu0 0
    %1010 = vmatpush1.bf16.msra.mxu0 0
    %1011 = vmatprep.subr.bf16.mxu0 0
    %1012 = vmatpush1.bf16.msra.mxu0 0
    %1013 = vmatprep.mubr.bf16.mxu0 0
    %1014 = vmatmul.mubr.bf16.gmra.mrb[0].mxu0 %v895
    %v1015 = vpop.f32.mrb[0].mxu0
    %v1016 = vadd.f32 %v187, %v1015
    %v1017 = vpop.f32.mrb[0].mxu0
    %v1018 = vpop.f32.mrb[0].mxu0
    %v1019 = vpop.f32.mrb[0].mxu0
    %1020 = vdwg.mxu0
    %s1021 = scalar_lea.vmem [#allocation8], 40
    %1022 = vst.msk [vmem:[%s1021] sm:$0x3] %vm127, %v1016
    %s1023 = scalar_lea.vmem [#allocation2], 7
    %v1024 = vld [vmem:[%s1023] sm:$0x1]
    %v1026 = vsel %vm83, %v1024, 0
    %1028 = vmatprep.subr.bf16.mxu0 0
    %1029 = vmatpush1.bf16.msra.mxu0 %v81
    %1030 = vmatprep.subr.bf16.mxu0 0
    %1031 = vmatpush1.bf16.msra.mxu0 0
    %1032 = vmatprep.subr.bf16.mxu0 0
    %1033 = vmatpush1.bf16.msra.mxu0 0
    %1034 = vmatprep.subr.bf16.mxu0 0
    %1035 = vmatpush1.bf16.msra.mxu0 0
    %1036 = vmatprep.subr.bf16.mxu0 0
    %1037 = vmatpush1.bf16.msra.mxu0 0
    %1038 = vmatprep.subr.bf16.mxu0 0
    %1039 = vmatpush1.bf16.msra.mxu0 0
    %1040 = vmatprep.subr.bf16.mxu0 0
    %1041 = vmatpush1.bf16.msra.mxu0 0
    %1042 = vmatprep.subr.bf16.mxu0 0
    %1043 = vmatpush1.bf16.msra.mxu0 0
    %1044 = vmatprep.subr.bf16.mxu0 0
    %1045 = vmatpush1.bf16.msra.mxu0 0
    %1046 = vmatprep.subr.bf16.mxu0 0
    %1047 = vmatpush1.bf16.msra.mxu0 0
    %1048 = vmatprep.subr.bf16.mxu0 0
    %1049 = vmatpush1.bf16.msra.mxu0 0
    %1050 = vmatprep.subr.bf16.mxu0 0
    %1051 = vmatpush1.bf16.msra.mxu0 0
    %1052 = vmatprep.subr.bf16.mxu0 0
    %1053 = vmatpush1.bf16.msra.mxu0 0
    %1054 = vmatprep.subr.bf16.mxu0 0
    %1055 = vmatpush1.bf16.msra.mxu0 0
    %1056 = vmatprep.subr.bf16.mxu0 0
    %1057 = vmatpush1.bf16.msra.mxu0 0
    %1058 = vmatprep.subr.bf16.mxu0 0
    %1059 = vmatpush1.bf16.msra.mxu0 0
    %1060 = vmatprep.mubr.bf16.mxu0 0
    %1061 = vmatmul.mubr.bf16.gmra.mrb[0].mxu0 %v1026
    %v1062 = vpop.f32.mrb[0].mxu0
    %v1063 = vadd.f32 %v75, %v1062
    %v1064 = vpop.f32.mrb[0].mxu0
    %v1065 = vpop.f32.mrb[0].mxu0
    %v1066 = vpop.f32.mrb[0].mxu0
    %1067 = vdwg.mxu0
    %s1068 = scalar_lea.vmem [#allocation8], 42
    %1069 = vst.msk [vmem:[%s1068] sm:$0x3] %vm127, %v1063
    %1070 = vmatprep.subr.bf16.mxu0 0
    %1071 = vmatpush1.bf16.msra.mxu0 %v139
    %1072 = vmatprep.subr.bf16.mxu0 0
    %1073 = vmatpush1.bf16.msra.mxu0 0
    %1074 = vmatprep.subr.bf16.mxu0 0
    %1075 = vmatpush1.bf16.msra.mxu0 0
    %1076 = vmatprep.subr.bf16.mxu0 0
    %1077 = vmatpush1.bf16.msra.mxu0 0
    %1078 = vmatprep.subr.bf16.mxu0 0
    %1079 = vmatpush1.bf16.msra.mxu0 0
    %1080 = vmatprep.subr.bf16.mxu0 0
    %1081 = vmatpush1.bf16.msra.mxu0 0
    %1082 = vmatprep.subr.bf16.mxu0 0
    %1083 = vmatpush1.bf16.msra.mxu0 0
    %1084 = vmatprep.subr.bf16.mxu0 0
    %1085 = vmatpush1.bf16.msra.mxu0 0
    %1086 = vmatprep.subr.bf16.mxu0 0
    %1087 = vmatpush1.bf16.msra.mxu0 0
    %1088 = vmatprep.subr.bf16.mxu0 0
    %1089 = vmatpush1.bf16.msra.mxu0 0
    %1090 = vmatprep.subr.bf16.mxu0 0
    %1091 = vmatpush1.bf16.msra.mxu0 0
    %1092 = vmatprep.subr.bf16.mxu0 0
    %1093 = vmatpush1.bf16.msra.mxu0 0
    %1094 = vmatprep.subr.bf16.mxu0 0
    %1095 = vmatpush1.bf16.msra.mxu0 0
    %1096 = vmatprep.subr.bf16.mxu0 0
    %1097 = vmatpush1.bf16.msra.mxu0 0
    %1098 = vmatprep.subr.bf16.mxu0 0
    %1099 = vmatpush1.bf16.msra.mxu0 0
    %1100 = vmatprep.subr.bf16.mxu0 0
    %1101 = vmatpush1.bf16.msra.mxu0 0
    %1102 = vmatprep.mubr.bf16.mxu0 0
    %1103 = vmatmul.mubr.bf16.gmra.mrb[0].mxu0 %v1026
    %v1104 = vpop.f32.mrb[0].mxu0
    %v1105 = vadd.f32 %v133, %v1104
    %v1106 = vpop.f32.mrb[0].mxu0
    %v1107 = vpop.f32.mrb[0].mxu0
    %v1108 = vpop.f32.mrb[0].mxu0
    %1109 = vdwg.mxu0
    %s1110 = scalar_lea.vmem [#allocation8], 44
    %1111 = vst.msk [vmem:[%s1110] sm:$0x3] %vm127, %v1105
    %1112 = vmatprep.subr.bf16.mxu0 0
    %1113 = vmatpush1.bf16.msra.mxu0 %v193
    %1114 = vmatprep.subr.bf16.mxu0 0
    %1115 = vmatpush1.bf16.msra.mxu0 0
    %1116 = vmatprep.subr.bf16.mxu0 0
    %1117 = vmatpush1.bf16.msra.mxu0 0
    %1118 = vmatprep.subr.bf16.mxu0 0
    %1119 = vmatpush1.bf16.msra.mxu0 0
    %1120 = vmatprep.subr.bf16.mxu0 0
    %1121 = vmatpush1.bf16.msra.mxu0 0
    %1122 = vmatprep.subr.bf16.mxu0 0
    %1123 = vmatpush1.bf16.msra.mxu0 0
    %1124 = vmatprep.subr.bf16.mxu0 0
    %1125 = vmatpush1.bf16.msra.mxu0 0
    %1126 = vmatprep.subr.bf16.mxu0 0
    %1127 = vmatpush1.bf16.msra.mxu0 0
    %1128 = vmatprep.subr.bf16.mxu0 0
    %1129 = vmatpush1.bf16.msra.mxu0 0
    %1130 = vmatprep.subr.bf16.mxu0 0
    %1131 = vmatpush1.bf16.msra.mxu0 0
    %1132 = vmatprep.subr.bf16.mxu0 0
    %1133 = vmatpush1.bf16.msra.mxu0 0
    %1134 = vmatprep.subr.bf16.mxu0 0
    %1135 = vmatpush1.bf16.msra.mxu0 0
    %1136 = vmatprep.subr.bf16.mxu0 0
    %1137 = vmatpush1.bf16.msra.mxu0 0
    %1138 = vmatprep.subr.bf16.mxu0 0
    %1139 = vmatpush1.bf16.msra.mxu0 0
    %1140 = vmatprep.subr.bf16.mxu0 0
    %1141 = vmatpush1.bf16.msra.mxu0 0
    %1142 = vmatprep.subr.bf16.mxu0 0
    %1143 = vmatpush1.bf16.msra.mxu0 0
    %1144 = vmatprep.mubr.bf16.mxu0 0
    %1145 = vmatmul.mubr.bf16.gmra.mrb[0].mxu0 %v1026
    %v1146 = vpop.f32.mrb[0].mxu0
    %v1147 = vadd.f32 %v187, %v1146
    %v1148 = vpop.f32.mrb[0].mxu0
    %v1149 = vpop.f32.mrb[0].mxu0
    %v1150 = vpop.f32.mrb[0].mxu0
    %1151 = vdwg.mxu0
    %s1152 = scalar_lea.vmem [#allocation8], 46
    %1153 = vst.msk [vmem:[%s1152] sm:$0x3] %vm127, %v1147
    // Predicated region
    $region26: #{encoder_forward.2} parent=1 // pred_check
      _
    $region27: #{encoder_forward.2} parent=1 // pred_check_branch
      %1155 = sbr.rel (0) target = $region29
    $region28: #{encoder_forward.2} parent=1 // pred_region
      %s1157 = ssub.s32 768, 768
      %1158 = vsyncadd [#allocation4], %s1157
      %s1159 = sshll.u32 [#allocation8], 4
      %s1160 = int_to_ptr.vmem [resolvable:$true] %s1159
      %1165 = dma.vmem_to_hbm [thread:$0]  %s1160, 768, %s3, [#allocation4], 32, 32, 2
    $region29: #{encoder_forward.2} parent=1 // pred_fallthru
      _
    // Predicated region
    $region30: #{encoder_forward.2} parent=1 // pred_check
      _
    $region31: #{encoder_forward.2} parent=1 // pred_check_branch
      %1167 = sbr.rel (0) target = $region33
    $region32: #{encoder_forward.2} parent=1 // pred_region
      %1168 = dma.done [#allocation4], 768
    $region33: #{encoder_forward.2} parent=1 // pred_fallthru
      _
    %1169 = vsyncpa [#allocation3], 1
    %1170 = vsyncpa [#allocation6], 1
    %1171 = vsyncpa [#allocation4], 1

// kernel: encoder_forward.3
$region0: #{encoder_forward.3}
  #allocation0 [shape = 'u32[]', space=smem, size = 0x4, offset = 0x4, fixed_abs, tag = 'smem constant byte address 0x4 - core index']
  #allocation1 [shape = 'u32[144,128]{1,0:T(1,128)}', space=vmem, size = 0x12000, scoped, tag = 'internal scratch']
  #allocation2 [shape = 'f32[2,32]{1,0:T(2,128)}', space=vmem, size = 0x400, scoped, tag = 'scratch operand']
  %s0 = inlined_call_operand.hbm [shape: f32[8,3,2,32], index: 0, kind: input, shape index: {}]
  %s1 = inlined_call_operand.hbm [shape: bf16[3,32,32], index: 1, kind: input, shape index: {}]
  %s2 = inlined_call_operand.hbm [shape: f32[1,32], index: 2, kind: input, shape index: {}]
  %s3 = inlined_call_operand.hbm [shape: f32[8,2,32], index: 3, kind: output, shape index: {}]
  %s4 = sld [smem:[#allocation0]]
  $region38: #{encoder_forward.3} parent=0
    _
  %s6 = ssub.s32 1, %s4
  %s7 = scalar_select 0, %s6, %s4
  $region1: #{encoder_forward.3} parent=0
    #allocation3 [shape = 'u8[24576]{0}', space=vmem, size = 0x6000, scoped, tag = 'input window, operand 0, single buffered']
    #allocation4 [shape = 's32[1]{0}', space=sflag, size = 0x4, scoped, tag = 'scoped memory for encoder_forward.3']
    #allocation5 [shape = 's32[1]{0}', space=sflag, size = 0x4, scoped, tag = 'scoped memory for encoder_forward.3']
    #allocation6 [shape = 'u8[24576]{0}', space=vmem, size = 0x6000, scoped, tag = 'input window, operand 1, single buffered']
    #allocation7 [shape = 's32[1]{0}', space=sflag, size = 0x4, scoped, tag = 'scoped memory for encoder_forward.3']
    #allocation8 [shape = 'u8[512]{0}', space=vmem, size = 0x400, scoped, tag = 'input window, operand 2, single buffered']
    #allocation9 [shape = 'u8[8192]{0}', space=vmem, size = 0x2000, scoped, tag = 'output window, operand 0, single buffered']
    %8 = vsyncpa [#allocation4], 0
    %9 = vsyncpa [#allocation7], 0
    %10 = vsyncpa [#allocation5], 0
    // Predicated region
    $region2: #{encoder_forward.3} parent=1 // pred_check
      _
    $region3: #{encoder_forward.3} parent=1 // pred_check_branch
      %12 = sbr.rel (0) target = $region5
    $region4: #{encoder_forward.3} parent=1 // pred_region
      %s14 = ssub.s32 768, 768
      %15 = vsyncadd [#allocation4], %s14
      %s16 = sshll.u32 [#allocation3], 4
      %s17 = int_to_ptr.vmem [resolvable:$true] %s16
      %22 = dma.hbm_to_vmem [thread:$0]  %s0, 768, %s17, [#allocation4], 32, 32, 2
    $region5: #{encoder_forward.3} parent=1 // pred_fallthru
      _
    // Predicated region
    $region6: #{encoder_forward.3} parent=1 // pred_check
      _
    $region7: #{encoder_forward.3} parent=1 // pred_check_branch
      %24 = sbr.rel (0) target = $region9
    $region8: #{encoder_forward.3} parent=1 // pred_region
      %s26 = ssub.s32 768, 768
      %27 = vsyncadd [#allocation7], %s26
      %s28 = sshll.u32 [#allocation6], 4
      %s29 = int_to_ptr.vmem [resolvable:$true] %s28
      %34 = dma.hbm_to_vmem [thread:$0]  %s1, 768, %s29, [#allocation7], 64, 64, 4
    $region9: #{encoder_forward.3} parent=1 // pred_fallthru
      _
    // Predicated region
    $region10: #{encoder_forward.3} parent=1 // pred_check
      _
    $region11: #{encoder_forward.3} parent=1 // pred_check_branch
      %36 = sbr.rel (0) target = $region13
    $region12: #{encoder_forward.3} parent=1 // pred_region
      %s38 = ssub.s32 16, 16
      %39 = vsyncadd [#allocation7], %s38
      %s41 = sshll.u32 [#allocation8], 4
      %s42 = int_to_ptr.vmem [resolvable:$true] %s41
      %44 = dma.hbm_to_vmem [thread:$0]  %s2, 16, %s42, [#allocation7]
    $region13: #{encoder_forward.3} parent=1 // pred_fallthru
      _
    // Predicated region
    $region14: #{encoder_forward.3} parent=1 // pred_check
      _
    $region15: #{encoder_forward.3} parent=1 // pred_check_branch
      %46 = sbr.rel (0) target = $region17
    $region16: #{encoder_forward.3} parent=1 // pred_region
      %47 = dma.done [#allocation4], 768
    $region17: #{encoder_forward.3} parent=1 // pred_fallthru
      _
    // Predicated region
    $region18: #{encoder_forward.3} parent=1 // pred_check
      _
    $region19: #{encoder_forward.3} parent=1 // pred_check_branch
      %49 = sbr.rel (0) target = $region21
    $region20: #{encoder_forward.3} parent=1 // pred_region
      %50 = dma.done [#allocation7], 768
    $region21: #{encoder_forward.3} parent=1 // pred_fallthru
      _
    // Predicated region
    $region22: #{encoder_forward.3} parent=1 // pred_check
      _
    $region23: #{encoder_forward.3} parent=1 // pred_check_branch
      %52 = sbr.rel (0) target = $region25
    $region24: #{encoder_forward.3} parent=1 // pred_region
      %53 = dma.done [#allocation7], 16
    $region25: #{encoder_forward.3} parent=1 // pred_fallthru
      _
    %p55 = scmp.eq.s32.totalorder 0, 0
    // Predicated region
    $region26: #{encoder_forward.3} parent=1 // pred_check
      %p56 = pneg %p55
    $region27: #{encoder_forward.3} parent=1 // pred_check_branch
      %58 = sbr.rel (%p56) target = $region29
    $region28: #{encoder_forward.3} parent=1 // pred_region
      %vm59 = vcmask 254976
      %60 = vst.msk [vmem:[#allocation2] sm:$0x3] %vm59, 0.0
    $region29: #{encoder_forward.3} parent=1 // pred_fallthru
      _
    %v61 = vld [vmem:[#allocation6] sm:$0xf]
    %v62 = vld [vmem:[#allocation6 + $0x4] sm:$0xf]
    %v63 = vld [vmem:[#allocation6 + $0x8] sm:$0xf]
    %v64 = vld [vmem:[#allocation6 + $0xc] sm:$0xf]
    %s65 = scalar_lea.vmem [#allocation6], 16
    %v66 = vld [vmem:[%s65] sm:$0xf]
    %v67 = vld [vmem:[%s65 + $0x4] sm:$0xf]
    %v68 = vld [vmem:[%s65 + $0x8] sm:$0xf]
    %v69 = vld [vmem:[%s65 + $0xc] sm:$0xf]
    %s70 = scalar_lea.vmem [#allocation6], 32
    %v71 = vld [vmem:[%s70] sm:$0xf]
    %v72 = vld [vmem:[%s70 + $0x4] sm:$0xf]
    %v73 = vld [vmem:[%s70 + $0x8] sm:$0xf]
    %v74 = vld [vmem:[%s70 + $0xc] sm:$0xf]
    %v75 = vld [vmem:[#allocation8] sm:$0x1]
    %v77 = vlaneseq
    %v78 = vshrl.u32 %v77, 7
    %v79 = vsub.s32 0, %v78
    %v80 = vrot.slane %v75, %v79
    %v82 = vld [vmem:[#allocation2] sm:$0x3]
    %v83 = vld [vmem:[#allocation3] sm:$0x3]
    %v84 = vld [vmem:[#allocation3 + $0x2] sm:$0x3]
    %v85 = vld [vmem:[#allocation3 + $0x4] sm:$0x3]
    %v86 = vpack.c.bf16 %v82, %v82
    %v91 = vunpack.c.l.b16 %v61
    %v92 = vunpack.c.l.b16 %v62
    %v93 = vunpack.c.l.b16 %v63
    %v94 = vunpack.c.l.b16 %v64
    %v95 = vpack.c.b16 %v92, %v91
    %v96 = vpack.c.b16 %v94, %v93
    %vm99 = vcmask 261120
    %v101 = vsel %vm99, %v86, 0
    %103 = vmatprep.subr.bf16.mxu0 0
    %104 = vmatpush1.bf16.msra.mxu0 %v95
    %105 = vmatprep.subr.bf16.mxu0 0
    %106 = vmatpush1.bf16.msra.mxu0 %v96
    %107 = vmatprep.subr.bf16.mxu0 0
    %108 = vmatpush1.bf16.msra.mxu0 0
    %109 = vmatprep.subr.bf16.mxu0 0
    %110 = vmatpush1.bf16.msra.mxu0 0
    %111 = vmatprep.subr.bf16.mxu0 0
    %112 = vmatpush1.bf16.msra.mxu0 0
    %113 = vmatprep.subr.bf16.mxu0 0
    %114 = vmatpush1.bf16.msra.mxu0 0
    %115 = vmatprep.subr.bf16.mxu0 0
    %116 = vmatpush1.bf16.msra.mxu0 0
    %117 = vmatprep.subr.bf16.mxu0 0
    %118 = vmatpush1.bf16.msra.mxu0 0
    %119 = vmatprep.subr.bf16.mxu0 0
    %120 = vmatpush1.bf16.msra.mxu0 0
    %121 = vmatprep.subr.bf16.mxu0 0
    %122 = vmatpush1.bf16.msra.mxu0 0
    %123 = vmatprep.subr.bf16.mxu0 0
    %124 = vmatpush1.bf16.msra.mxu0 0
    %125 = vmatprep.subr.bf16.mxu0 0
    %126 = vmatpush1.bf16.msra.mxu0 0
    %127 = vmatprep.subr.bf16.mxu0 0
    %128 = vmatpush1.bf16.msra.mxu0 0
    %129 = vmatprep.subr.bf16.mxu0 0
    %130 = vmatpush1.bf16.msra.mxu0 0
    %131 = vmatprep.subr.bf16.mxu0 0
    %132 = vmatpush1.bf16.msra.mxu0 0
    %133 = vmatprep.subr.bf16.mxu0 0
    %134 = vmatpush1.bf16.msra.mxu0 0
    %135 = vmatprep.mubr.bf16.mxu0 0
    %136 = vmatmul.mubr.bf16.gmra.mrb[0].mxu0 %v101
    %v137 = vpop.f32.mrb[0].mxu0
    %v138 = vadd.f32 0.0, %v137
    %v139 = vpop.f32.mrb[0].mxu0
    %v140 = vpop.f32.mrb[0].mxu0
    %v141 = vpop.f32.mrb[0].mxu0
    %142 = vdwg.mxu0
    %v147 = vunpack.c.l.b16 %v66
    %v148 = vunpack.c.l.b16 %v67
    %v149 = vunpack.c.l.b16 %v68
    %v150 = vunpack.c.l.b16 %v69
    %v151 = vpack.c.b16 %v148, %v147
    %v152 = vpack.c.b16 %v150, %v149
    %155 = vmatprep.subr.bf16.mxu0 0
    %156 = vmatpush1.bf16.msra.mxu0 %v151
    %157 = vmatprep.subr.bf16.mxu0 0
    %158 = vmatpush1.bf16.msra.mxu0 %v152
    %159 = vmatprep.subr.bf16.mxu0 0
    %160 = vmatpush1.bf16.msra.mxu0 0
    %161 = vmatprep.subr.bf16.mxu0 0
    %162 = vmatpush1.bf16.msra.mxu0 0
    %163 = vmatprep.subr.bf16.mxu0 0
    %164 = vmatpush1.bf16.msra.mxu0 0
    %165 = vmatprep.subr.bf16.mxu0 0
    %166 = vmatpush1.bf16.msra.mxu0 0
    %167 = vmatprep.subr.bf16.mxu0 0
    %168 = vmatpush1.bf16.msra.mxu0 0
    %169 = vmatprep.subr.bf16.mxu0 0
    %170 = vmatpush1.bf16.msra.mxu0 0
    %171 = vmatprep.subr.bf16.mxu0 0
    %172 = vmatpush1.bf16.msra.mxu0 0
    %173 = vmatprep.subr.bf16.mxu0 0
    %174 = vmatpush1.bf16.msra.mxu0 0
    %175 = vmatprep.subr.bf16.mxu0 0
    %176 = vmatpush1.bf16.msra.mxu0 0
    %177 = vmatprep.subr.bf16.mxu0 0
    %178 = vmatpush1.bf16.msra.mxu0 0
    %179 = vmatprep.subr.bf16.mxu0 0
    %180 = vmatpush1.bf16.msra.mxu0 0
    %181 = vmatprep.subr.bf16.mxu0 0
    %182 = vmatpush1.bf16.msra.mxu0 0
    %183 = vmatprep.subr.bf16.mxu0 0
    %184 = vmatpush1.bf16.msra.mxu0 0
    %185 = vmatprep.subr.bf16.mxu0 0
    %186 = vmatpush1.bf16.msra.mxu0 0
    %187 = vmatprep.mubr.bf16.mxu0 0
    %188 = vmatmul.mubr.bf16.gmra.mrb[0].mxu0 %v101
    %v189 = vpop.f32.mrb[0].mxu0
    %v190 = vadd.f32 0.0, %v189
    %v191 = vpop.f32.mrb[0].mxu0
    %v192 = vpop.f32.mrb[0].mxu0
    %v193 = vpop.f32.mrb[0].mxu0
    %194 = vdwg.mxu0
    %v195 = vadd.f32 %v83, %v138
    %v196 = vxor.u32 %v195, 2147483648
    %v197 = vmul.f32 %v196, 1.442695
    %v198 = vpow.pop %v197
    %v199 = vadd.f32 %v198, 1.0
    %v200 = vrcp.pop %v199
    %v201 = vmul.f32 1.0, %v200
    %v202 = vadd.f32 %v84, %v190
    %v203 = vxor.u32 %v202, 2147483648
    %v204 = vmul.f32 %v203, 1.442695
    %v205 = vpow.pop %v204
    %v206 = vadd.f32 %v205, 1.0
    %v207 = vrcp.pop %v206
    %v208 = vmul.f32 1.0, %v207
    %v213 = vunpack.c.l.b16 %v71
    %v214 = vunpack.c.l.b16 %v72
    %v215 = vunpack.c.l.b16 %v73
    %v216 = vunpack.c.l.b16 %v74
    %v217 = vpack.c.b16 %v214, %v213
    %v218 = vpack.c.b16 %v216, %v215
    %221 = vmatprep.subr.bf16.mxu0 0
    %222 = vmatpush1.bf16.msra.mxu0 %v217
    %223 = vmatprep.subr.bf16.mxu0 0
    %224 = vmatpush1.bf16.msra.mxu0 %v218
    %225 = vmatprep.subr.bf16.mxu0 0
    %226 = vmatpush1.bf16.msra.mxu0 0
    %227 = vmatprep.subr.bf16.mxu0 0
    %228 = vmatpush1.bf16.msra.mxu0 0
    %229 = vmatprep.subr.bf16.mxu0 0
    %230 = vmatpush1.bf16.msra.mxu0 0
    %231 = vmatprep.subr.bf16.mxu0 0
    %232 = vmatpush1.bf16.msra.mxu0 0
    %233 = vmatprep.subr.bf16.mxu0 0
    %234 = vmatpush1.bf16.msra.mxu0 0
    %235 = vmatprep.subr.bf16.mxu0 0
    %236 = vmatpush1.bf16.msra.mxu0 0
    %237 = vmatprep.subr.bf16.mxu0 0
    %238 = vmatpush1.bf16.msra.mxu0 0
    %239 = vmatprep.subr.bf16.mxu0 0
    %240 = vmatpush1.bf16.msra.mxu0 0
    %241 = vmatprep.subr.bf16.mxu0 0
    %242 = vmatpush1.bf16.msra.mxu0 0
    %243 = vmatprep.subr.bf16.mxu0 0
    %244 = vmatpush1.bf16.msra.mxu0 0
    %245 = vmatprep.subr.bf16.mxu0 0
    %246 = vmatpush1.bf16.msra.mxu0 0
    %247 = vmatprep.subr.bf16.mxu0 0
    %248 = vmatpush1.bf16.msra.mxu0 0
    %249 = vmatprep.subr.bf16.mxu0 0
    %250 = vmatpush1.bf16.msra.mxu0 0
    %251 = vmatprep.subr.bf16.mxu0 0
    %252 = vmatpush1.bf16.msra.mxu0 0
    %253 = vmatprep.mubr.bf16.mxu0 0
    %254 = vmatmul.mubr.bf16.gmra.mrb[0].mxu0 %v101
    %v255 = vpop.f32.mrb[0].mxu0
    %v256 = vadd.f32 %v80, %v255
    %v257 = vpop.f32.mrb[0].mxu0
    %v258 = vpop.f32.mrb[0].mxu0
    %v259 = vpop.f32.mrb[0].mxu0
    %260 = vdwg.mxu0
    %v261 = vmul.f32 %v201, %v256
    %v262 = vadd.f32 %v85, %v261
    %v263 = vtanh.pop %v262
    %v264 = vsub.f32 %v82, %v263
    %v265 = vmul.f32 %v208, %v264
    %v266 = vadd.f32 %v263, %v265
    %vm267 = vcmask 254976
    %268 = vst.msk [vmem:[#allocation9] sm:$0x3] %vm267, %v266
    %s269 = scalar_lea.vmem [#allocation3], 6
    %v270 = vld [vmem:[%s269] sm:$0x3]
    %v271 = vld [vmem:[%s269 + $0x2] sm:$0x3]
    %v272 = vld [vmem:[%s269 + $0x4] sm:$0x3]
    %v273 = vpack.c.bf16 %v266, %v266
    %v275 = vsel %vm99, %v273, 0
    %277 = vmatprep.subr.bf16.mxu0 0
    %278 = vmatpush1.bf16.msra.mxu0 %v95
    %279 = vmatprep.subr.bf16.mxu0 0
    %280 = vmatpush1.bf16.msra.mxu0 %v96
    %281 = vmatprep.subr.bf16.mxu0 0
    %282 = vmatpush1.bf16.msra.mxu0 0
    %283 = vmatprep.subr.bf16.mxu0 0
    %284 = vmatpush1.bf16.msra.mxu0 0
    %285 = vmatprep.subr.bf16.mxu0 0
    %286 = vmatpush1.bf16.msra.mxu0 0
    %287 = vmatprep.subr.bf16.mxu0 0
    %288 = vmatpush1.bf16.msra.mxu0 0
    %289 = vmatprep.subr.bf16.mxu0 0
    %290 = vmatpush1.bf16.msra.mxu0 0
    %291 = vmatprep.subr.bf16.mxu0 0
    %292 = vmatpush1.bf16.msra.mxu0 0
    %293 = vmatprep.subr.bf16.mxu0 0
    %294 = vmatpush1.bf16.msra.mxu0 0
    %295 = vmatprep.subr.bf16.mxu0 0
    %296 = vmatpush1.bf16.msra.mxu0 0
    %297 = vmatprep.subr.bf16.mxu0 0
    %298 = vmatpush1.bf16.msra.mxu0 0
    %299 = vmatprep.subr.bf16.mxu0 0
    %300 = vmatpush1.bf16.msra.mxu0 0
    %301 = vmatprep.subr.bf16.mxu0 0
    %302 = vmatpush1.bf16.msra.mxu0 0
    %303 = vmatprep.subr.bf16.mxu0 0
    %304 = vmatpush1.bf16.msra.mxu0 0
    %305 = vmatprep.subr.bf16.mxu0 0
    %306 = vmatpush1.bf16.msra.mxu0 0
    %307 = vmatprep.subr.bf16.mxu0 0
    %308 = vmatpush1.bf16.msra.mxu0 0
    %309 = vmatprep.mubr.bf16.mxu0 0
    %310 = vmatmul.mubr.bf16.gmra.mrb[0].mxu0 %v275
    %v311 = vpop.f32.mrb[0].mxu0
    %v312 = vadd.f32 0.0, %v311
    %v313 = vpop.f32.mrb[0].mxu0
    %v314 = vpop.f32.mrb[0].mxu0
    %v315 = vpop.f32.mrb[0].mxu0
    %316 = vdwg.mxu0
    %317 = vmatprep.subr.bf16.mxu0 0
    %318 = vmatpush1.bf16.msra.mxu0 %v151
    %319 = vmatprep.subr.bf16.mxu0 0
    %320 = vmatpush1.bf16.msra.mxu0 %v152
    %321 = vmatprep.subr.bf16.mxu0 0
    %322 = vmatpush1.bf16.msra.mxu0 0
    %323 = vmatprep.subr.bf16.mxu0 0
    %324 = vmatpush1.bf16.msra.mxu0 0
    %325 = vmatprep.subr.bf16.mxu0 0
    %326 = vmatpush1.bf16.msra.mxu0 0
    %327 = vmatprep.subr.bf16.mxu0 0
    %328 = vmatpush1.bf16.msra.mxu0 0
    %329 = vmatprep.subr.bf16.mxu0 0
    %330 = vmatpush1.bf16.msra.mxu0 0
    %331 = vmatprep.subr.bf16.mxu0 0
    %332 = vmatpush1.bf16.msra.mxu0 0
    %333 = vmatprep.subr.bf16.mxu0 0
    %334 = vmatpush1.bf16.msra.mxu0 0
    %335 = vmatprep.subr.bf16.mxu0 0
    %336 = vmatpush1.bf16.msra.mxu0 0
    %337 = vmatprep.subr.bf16.mxu0 0
    %338 = vmatpush1.bf16.msra.mxu0 0
    %339 = vmatprep.subr.bf16.mxu0 0
    %340 = vmatpush1.bf16.msra.mxu0 0
    %341 = vmatprep.subr.bf16.mxu0 0
    %342 = vmatpush1.bf16.msra.mxu0 0
    %343 = vmatprep.subr.bf16.mxu0 0
    %344 = vmatpush1.bf16.msra.mxu0 0
    %345 = vmatprep.subr.bf16.mxu0 0
    %346 = vmatpush1.bf16.msra.mxu0 0
    %347 = vmatprep.subr.bf16.mxu0 0
    %348 = vmatpush1.bf16.msra.mxu0 0
    %349 = vmatprep.mubr.bf16.mxu0 0
    %350 = vmatmul.mubr.bf16.gmra.mrb[0].mxu0 %v275
    %v351 = vpop.f32.mrb[0].mxu0
    %v352 = vadd.f32 0.0, %v351
    %v353 = vpop.f32.mrb[0].mxu0
    %v354 = vpop.f32.mrb[0].mxu0
    %v355 = vpop.f32.mrb[0].mxu0
    %356 = vdwg.mxu0
    %v357 = vadd.f32 %v270, %v312
    %v358 = vxor.u32 %v357, 2147483648
    %v359 = vmul.f32 %v358, 1.442695
    %v360 = vpow.pop %v359
    %v361 = vadd.f32 %v360, 1.0
    %v362 = vrcp.pop %v361
    %v363 = vmul.f32 1.0, %v362
    %v364 = vadd.f32 %v271, %v352
    %v365 = vxor.u32 %v364, 2147483648
    %v366 = vmul.f32 %v365, 1.442695
    %v367 = vpow.pop %v366
    %v368 = vadd.f32 %v367, 1.0
    %v369 = vrcp.pop %v368
    %v370 = vmul.f32 1.0, %v369
    %371 = vmatprep.subr.bf16.mxu0 0
    %372 = vmatpush1.bf16.msra.mxu0 %v217
    %373 = vmatprep.subr.bf16.mxu0 0
    %374 = vmatpush1.bf16.msra.mxu0 %v218
    %375 = vmatprep.subr.bf16.mxu0 0
    %376 = vmatpush1.bf16.msra.mxu0 0
    %377 = vmatprep.subr.bf16.mxu0 0
    %378 = vmatpush1.bf16.msra.mxu0 0
    %379 = vmatprep.subr.bf16.mxu0 0
    %380 = vmatpush1.bf16.msra.mxu0 0
    %381 = vmatprep.subr.bf16.mxu0 0
    %382 = vmatpush1.bf16.msra.mxu0 0
    %383 = vmatprep.subr.bf16.mxu0 0
    %384 = vmatpush1.bf16.msra.mxu0 0
    %385 = vmatprep.subr.bf16.mxu0 0
    %386 = vmatpush1.bf16.msra.mxu0 0
    %387 = vmatprep.subr.bf16.mxu0 0
    %388 = vmatpush1.bf16.msra.mxu0 0
    %389 = vmatprep.subr.bf16.mxu0 0
    %390 = vmatpush1.bf16.msra.mxu0 0
    %391 = vmatprep.subr.bf16.mxu0 0
    %392 = vmatpush1.bf16.msra.mxu0 0
    %393 = vmatprep.subr.bf16.mxu0 0
    %394 = vmatpush1.bf16.msra.mxu0 0
    %395 = vmatprep.subr.bf16.mxu0 0
    %396 = vmatpush1.bf16.msra.mxu0 0
    %397 = vmatprep.subr.bf16.mxu0 0
    %398 = vmatpush1.bf16.msra.mxu0 0
    %399 = vmatprep.subr.bf16.mxu0 0
    %400 = vmatpush1.bf16.msra.mxu0 0
    %401 = vmatprep.subr.bf16.mxu0 0
    %402 = vmatpush1.bf16.msra.mxu0 0
    %403 = vmatprep.mubr.bf16.mxu0 0
    %404 = vmatmul.mubr.bf16.gmra.mrb[0].mxu0 %v275
    %v405 = vpop.f32.mrb[0].mxu0
    %v406 = vadd.f32 %v80, %v405
    %v407 = vpop.f32.mrb[0].mxu0
    %v408 = vpop.f32.mrb[0].mxu0
    %v409 = vpop.f32.mrb[0].mxu0
    %410 = vdwg.mxu0
    %v411 = vmul.f32 %v363, %v406
    %v412 = vadd.f32 %v272, %v411
    %v413 = vtanh.pop %v412
    %v414 = vsub.f32 %v266, %v413
    %v415 = vmul.f32 %v370, %v414
    %v416 = vadd.f32 %v413, %v415
    %s417 = scalar_lea.vmem [#allocation9], 2
    %418 = vst.msk [vmem:[%s417] sm:$0x3] %vm267, %v416
    %s419 = scalar_lea.vmem [#allocation3], 12
    %v420 = vld [vmem:[%s419] sm:$0x3]
    %v421 = vld [vmem:[%s419 + $0x2] sm:$0x3]
    %v422 = vld [vmem:[%s419 + $0x4] sm:$0x3]
    %v423 = vpack.c.bf16 %v416, %v416
    %v425 = vsel %vm99, %v423, 0
    %427 = vmatprep.subr.bf16.mxu0 0
    %428 = vmatpush1.bf16.msra.mxu0 %v95
    %429 = vmatprep.subr.bf16.mxu0 0
    %430 = vmatpush1.bf16.msra.mxu0 %v96
    %431 = vmatprep.subr.bf16.mxu0 0
    %432 = vmatpush1.bf16.msra.mxu0 0
    %433 = vmatprep.subr.bf16.mxu0 0
    %434 = vmatpush1.bf16.msra.mxu0 0
    %435 = vmatprep.subr.bf16.mxu0 0
    %436 = vmatpush1.bf16.msra.mxu0 0
    %437 = vmatprep.subr.bf16.mxu0 0
    %438 = vmatpush1.bf16.msra.mxu0 0
    %439 = vmatprep.subr.bf16.mxu0 0
    %440 = vmatpush1.bf16.msra.mxu0 0
    %441 = vmatprep.subr.bf16.mxu0 0
    %442 = vmatpush1.bf16.msra.mxu0 0
    %443 = vmatprep.subr.bf16.mxu0 0
    %444 = vmatpush1.bf16.msra.mxu0 0
    %445 = vmatprep.subr.bf16.mxu0 0
    %446 = vmatpush1.bf16.msra.mxu0 0
    %447 = vmatprep.subr.bf16.mxu0 0
    %448 = vmatpush1.bf16.msra.mxu0 0
    %449 = vmatprep.subr.bf16.mxu0 0
    %450 = vmatpush1.bf16.msra.mxu0 0
    %451 = vmatprep.subr.bf16.mxu0 0
    %452 = vmatpush1.bf16.msra.mxu0 0
    %453 = vmatprep.subr.bf16.mxu0 0
    %454 = vmatpush1.bf16.msra.mxu0 0
    %455 = vmatprep.subr.bf16.mxu0 0
    %456 = vmatpush1.bf16.msra.mxu0 0
    %457 = vmatprep.subr.bf16.mxu0 0
    %458 = vmatpush1.bf16.msra.mxu0 0
    %459 = vmatprep.mubr.bf16.mxu0 0
    %460 = vmatmul.mubr.bf16.gmra.mrb[0].mxu0 %v425
    %v461 = vpop.f32.mrb[0].mxu0
    %v462 = vadd.f32 0.0, %v461
    %v463 = vpop.f32.mrb[0].mxu0
    %v464 = vpop.f32.mrb[0].mxu0
    %v465 = vpop.f32.mrb[0].mxu0
    %466 = vdwg.mxu0
    %467 = vmatprep.subr.bf16.mxu0 0
    %468 = vmatpush1.bf16.msra.mxu0 %v151
    %469 = vmatprep.subr.bf16.mxu0 0
    %470 = vmatpush1.bf16.msra.mxu0 %v152
    %471 = vmatprep.subr.bf16.mxu0 0
    %472 = vmatpush1.bf16.msra.mxu0 0
    %473 = vmatprep.subr.bf16.mxu0 0
    %474 = vmatpush1.bf16.msra.mxu0 0
    %475 = vmatprep.subr.bf16.mxu0 0
    %476 = vmatpush1.bf16.msra.mxu0 0
    %477 = vmatprep.subr.bf16.mxu0 0
    %478 = vmatpush1.bf16.msra.mxu0 0
    %479 = vmatprep.subr.bf16.mxu0 0
    %480 = vmatpush1.bf16.msra.mxu0 0
    %481 = vmatprep.subr.bf16.mxu0 0
    %482 = vmatpush1.bf16.msra.mxu0 0
    %483 = vmatprep.subr.bf16.mxu0 0
    %484 = vmatpush1.bf16.msra.mxu0 0
    %485 = vmatprep.subr.bf16.mxu0 0
    %486 = vmatpush1.bf16.msra.mxu0 0
    %487 = vmatprep.subr.bf16.mxu0 0
    %488 = vmatpush1.bf16.msra.mxu0 0
    %489 = vmatprep.subr.bf16.mxu0 0
    %490 = vmatpush1.bf16.msra.mxu0 0
    %491 = vmatprep.subr.bf16.mxu0 0
    %492 = vmatpush1.bf16.msra.mxu0 0
    %493 = vmatprep.subr.bf16.mxu0 0
    %494 = vmatpush1.bf16.msra.mxu0 0
    %495 = vmatprep.subr.bf16.mxu0 0
    %496 = vmatpush1.bf16.msra.mxu0 0
    %497 = vmatprep.subr.bf16.mxu0 0
    %498 = vmatpush1.bf16.msra.mxu0 0
    %499 = vmatprep.mubr.bf16.mxu0 0
    %500 = vmatmul.mubr.bf16.gmra.mrb[0].mxu0 %v425
    %v501 = vpop.f32.mrb[0].mxu0
    %v502 = vadd.f32 0.0, %v501
    %v503 = vpop.f32.mrb[0].mxu0
    %v504 = vpop.f32.mrb[0].mxu0
    %v505 = vpop.f32.mrb[0].mxu0
    %506 = vdwg.mxu0
    %v507 = vadd.f32 %v420, %v462
    %v508 = vxor.u32 %v507, 2147483648
    %v509 = vmul.f32 %v508, 1.442695
    %v510 = vpow.pop %v509
    %v511 = vadd.f32 %v510, 1.0
    %v512 = vrcp.pop %v511
    %v513 = vmul.f32 1.0, %v512
    %v514 = vadd.f32 %v421, %v502
    %v515 = vxor.u32 %v514, 2147483648
    %v516 = vmul.f32 %v515, 1.442695
    %v517 = vpow.pop %v516
    %v518 = vadd.f32 %v517, 1.0
    %v519 = vrcp.pop %v518
    %v520 = vmul.f32 1.0, %v519
    %521 = vmatprep.subr.bf16.mxu0 0
    %522 = vmatpush1.bf16.msra.mxu0 %v217
    %523 = vmatprep.subr.bf16.mxu0 0
    %524 = vmatpush1.bf16.msra.mxu0 %v218
    %525 = vmatprep.subr.bf16.mxu0 0
    %526 = vmatpush1.bf16.msra.mxu0 0
    %527 = vmatprep.subr.bf16.mxu0 0
    %528 = vmatpush1.bf16.msra.mxu0 0
    %529 = vmatprep.subr.bf16.mxu0 0
    %530 = vmatpush1.bf16.msra.mxu0 0
    %531 = vmatprep.subr.bf16.mxu0 0
    %532 = vmatpush1.bf16.msra.mxu0 0
    %533 = vmatprep.subr.bf16.mxu0 0
    %534 = vmatpush1.bf16.msra.mxu0 0
    %535 = vmatprep.subr.bf16.mxu0 0
    %536 = vmatpush1.bf16.msra.mxu0 0
    %537 = vmatprep.subr.bf16.mxu0 0
    %538 = vmatpush1.bf16.msra.mxu0 0
    %539 = vmatprep.subr.bf16.mxu0 0
    %540 = vmatpush1.bf16.msra.mxu0 0
    %541 = vmatprep.subr.bf16.mxu0 0
    %542 = vmatpush1.bf16.msra.mxu0 0
    %543 = vmatprep.subr.bf16.mxu0 0
    %544 = vmatpush1.bf16.msra.mxu0 0
    %545 = vmatprep.subr.bf16.mxu0 0
    %546 = vmatpush1.bf16.msra.mxu0 0
    %547 = vmatprep.subr.bf16.mxu0 0
    %548 = vmatpush1.bf16.msra.mxu0 0
    %549 = vmatprep.subr.bf16.mxu0 0
    %550 = vmatpush1.bf16.msra.mxu0 0
    %551 = vmatprep.subr.bf16.mxu0 0
    %552 = vmatpush1.bf16.msra.mxu0 0
    %553 = vmatprep.mubr.bf16.mxu0 0
    %554 = vmatmul.mubr.bf16.gmra.mrb[0].mxu0 %v425
    %v555 = vpop.f32.mrb[0].mxu0
    %v556 = vadd.f32 %v80, %v555
    %v557 = vpop.f32.mrb[0].mxu0
    %v558 = vpop.f32.mrb[0].mxu0
    %v559 = vpop.f32.mrb[0].mxu0
    %560 = vdwg.mxu0
    %v561 = vmul.f32 %v513, %v556
    %v562 = vadd.f32 %v422, %v561
    %v563 = vtanh.pop %v562
    %v564 = vsub.f32 %v416, %v563
    %v565 = vmul.f32 %v520, %v564
    %v566 = vadd.f32 %v563, %v565
    %s567 = scalar_lea.vmem [#allocation9], 4
    %568 = vst.msk [vmem:[%s567] sm:$0x3] %vm267, %v566
    %s569 = scalar_lea.vmem [#allocation3], 18
    %v570 = vld [vmem:[%s569] sm:$0x3]
    %v571 = vld [vmem:[%s569 + $0x2] sm:$0x3]
    %v572 = vld [vmem:[%s569 + $0x4] sm:$0x3]
    %v573 = vpack.c.bf16 %v566, %v566
    %v575 = vsel %vm99, %v573, 0
    %577 = vmatprep.subr.bf16.mxu0 0
    %578 = vmatpush1.bf16.msra.mxu0 %v95
    %579 = vmatprep.subr.bf16.mxu0 0
    %580 = vmatpush1.bf16.msra.mxu0 %v96
    %581 = vmatprep.subr.bf16.mxu0 0
    %582 = vmatpush1.bf16.msra.mxu0 0
    %583 = vmatprep.subr.bf16.mxu0 0
    %584 = vmatpush1.bf16.msra.mxu0 0
    %585 = vmatprep.subr.bf16.mxu0 0
    %586 = vmatpush1.bf16.msra.mxu0 0
    %587 = vmatprep.subr.bf16.mxu0 0
    %588 = vmatpush1.bf16.msra.mxu0 0
    %589 = vmatprep.subr.bf16.mxu0 0
    %590 = vmatpush1.bf16.msra.mxu0 0
    %591 = vmatprep.subr.bf16.mxu0 0
    %592 = vmatpush1.bf16.msra.mxu0 0
    %593 = vmatprep.subr.bf16.mxu0 0
    %594 = vmatpush1.bf16.msra.mxu0 0
    %595 = vmatprep.subr.bf16.mxu0 0
    %596 = vmatpush1.bf16.msra.mxu0 0
    %597 = vmatprep.subr.bf16.mxu0 0
    %598 = vmatpush1.bf16.msra.mxu0 0
    %599 = vmatprep.subr.bf16.mxu0 0
    %600 = vmatpush1.bf16.msra.mxu0 0
    %601 = vmatprep.subr.bf16.mxu0 0
    %602 = vmatpush1.bf16.msra.mxu0 0
    %603 = vmatprep.subr.bf16.mxu0 0
    %604 = vmatpush1.bf16.msra.mxu0 0
    %605 = vmatprep.subr.bf16.mxu0 0
    %606 = vmatpush1.bf16.msra.mxu0 0
    %607 = vmatprep.subr.bf16.mxu0 0
    %608 = vmatpush1.bf16.msra.mxu0 0
    %609 = vmatprep.mubr.bf16.mxu0 0
    %610 = vmatmul.mubr.bf16.gmra.mrb[0].mxu0 %v575
    %v611 = vpop.f32.mrb[0].mxu0
    %v612 = vadd.f32 0.0, %v611
    %v613 = vpop.f32.mrb[0].mxu0
    %v614 = vpop.f32.mrb[0].mxu0
    %v615 = vpop.f32.mrb[0].mxu0
    %616 = vdwg.mxu0
    %617 = vmatprep.subr.bf16.mxu0 0
    %618 = vmatpush1.bf16.msra.mxu0 %v151
    %619 = vmatprep.subr.bf16.mxu0 0
    %620 = vmatpush1.bf16.msra.mxu0 %v152
    %621 = vmatprep.subr.bf16.mxu0 0
    %622 = vmatpush1.bf16.msra.mxu0 0
    %623 = vmatprep.subr.bf16.mxu0 0
    %624 = vmatpush1.bf16.msra.mxu0 0
    %625 = vmatprep.subr.bf16.mxu0 0
    %626 = vmatpush1.bf16.msra.mxu0 0
    %627 = vmatprep.subr.bf16.mxu0 0
    %628 = vmatpush1.bf16.msra.mxu0 0
    %629 = vmatprep.subr.bf16.mxu0 0
    %630 = vmatpush1.bf16.msra.mxu0 0
    %631 = vmatprep.subr.bf16.mxu0 0
    %632 = vmatpush1.bf16.msra.mxu0 0
    %633 = vmatprep.subr.bf16.mxu0 0
    %634 = vmatpush1.bf16.msra.mxu0 0
    %635 = vmatprep.subr.bf16.mxu0 0
    %636 = vmatpush1.bf16.msra.mxu0 0
    %637 = vmatprep.subr.bf16.mxu0 0
    %638 = vmatpush1.bf16.msra.mxu0 0
    %639 = vmatprep.subr.bf16.mxu0 0
    %640 = vmatpush1.bf16.msra.mxu0 0
    %641 = vmatprep.subr.bf16.mxu0 0
    %642 = vmatpush1.bf16.msra.mxu0 0
    %643 = vmatprep.subr.bf16.mxu0 0
    %644 = vmatpush1.bf16.msra.mxu0 0
    %645 = vmatprep.subr.bf16.mxu0 0
    %646 = vmatpush1.bf16.msra.mxu0 0
    %647 = vmatprep.subr.bf16.mxu0 0
    %648 = vmatpush1.bf16.msra.mxu0 0
    %649 = vmatprep.mubr.bf16.mxu0 0
    %650 = vmatmul.mubr.bf16.gmra.mrb[0].mxu0 %v575
    %v651 = vpop.f32.mrb[0].mxu0
    %v652 = vadd.f32 0.0, %v651
    %v653 = vpop.f32.mrb[0].mxu0
    %v654 = vpop.f32.mrb[0].mxu0
    %v655 = vpop.f32.mrb[0].mxu0
    %656 = vdwg.mxu0
    %v657 = vadd.f32 %v570, %v612
    %v658 = vxor.u32 %v657, 2147483648
    %v659 = vmul.f32 %v658, 1.442695
    %v660 = vpow.pop %v659
    %v661 = vadd.f32 %v660, 1.0
    %v662 = vrcp.pop %v661
    %v663 = vmul.f32 1.0, %v662
    %v664 = vadd.f32 %v571, %v652
    %v665 = vxor.u32 %v664, 2147483648
    %v666 = vmul.f32 %v665, 1.442695
    %v667 = vpow.pop %v666
    %v668 = vadd.f32 %v667, 1.0
    %v669 = vrcp.pop %v668
    %v670 = vmul.f32 1.0, %v669
    %671 = vmatprep.subr.bf16.mxu0 0
    %672 = vmatpush1.bf16.msra.mxu0 %v217
    %673 = vmatprep.subr.bf16.mxu0 0
    %674 = vmatpush1.bf16.msra.mxu0 %v218
    %675 = vmatprep.subr.bf16.mxu0 0
    %676 = vmatpush1.bf16.msra.mxu0 0
    %677 = vmatprep.subr.bf16.mxu0 0
    %678 = vmatpush1.bf16.msra.mxu0 0
    %679 = vmatprep.subr.bf16.mxu0 0
    %680 = vmatpush1.bf16.msra.mxu0 0
    %681 = vmatprep.subr.bf16.mxu0 0
    %682 = vmatpush1.bf16.msra.mxu0 0
    %683 = vmatprep.subr.bf16.mxu0 0
    %684 = vmatpush1.bf16.msra.mxu0 0
    %685 = vmatprep.subr.bf16.mxu0 0
    %686 = vmatpush1.bf16.msra.mxu0 0
    %687 = vmatprep.subr.bf16.mxu0 0
    %688 = vmatpush1.bf16.msra.mxu0 0
    %689 = vmatprep.subr.bf16.mxu0 0
    %690 = vmatpush1.bf16.msra.mxu0 0
    %691 = vmatprep.subr.bf16.mxu0 0
    %692 = vmatpush1.bf16.msra.mxu0 0
    %693 = vmatprep.subr.bf16.mxu0 0
    %694 = vmatpush1.bf16.msra.mxu0 0
    %695 = vmatprep.subr.bf16.mxu0 0
    %696 = vmatpush1.bf16.msra.mxu0 0
    %697 = vmatprep.subr.bf16.mxu0 0
    %698 = vmatpush1.bf16.msra.mxu0 0
    %699 = vmatprep.subr.bf16.mxu0 0
    %700 = vmatpush1.bf16.msra.mxu0 0
    %701 = vmatprep.subr.bf16.mxu0 0
    %702 = vmatpush1.bf16.msra.mxu0 0
    %703 = vmatprep.mubr.bf16.mxu0 0
    %704 = vmatmul.mubr.bf16.gmra.mrb[0].mxu0 %v575
    %v705 = vpop.f32.mrb[0].mxu0
    %v706 = vadd.f32 %v80, %v705
    %v707 = vpop.f32.mrb[0].mxu0
    %v708 = vpop.f32.mrb[0].mxu0
    %v709 = vpop.f32.mrb[0].mxu0
    %710 = vdwg.mxu0
    %v711 = vmul.f32 %v663, %v706
    %v712 = vadd.f32 %v572, %v711
    %v713 = vtanh.pop %v712
    %v714 = vsub.f32 %v566, %v713
    %v715 = vmul.f32 %v670, %v714
    %v716 = vadd.f32 %v713, %v715
    %s717 = scalar_lea.vmem [#allocation9], 6
    %718 = vst.msk [vmem:[%s717] sm:$0x3] %vm267, %v716
    %s719 = scalar_lea.vmem [#allocation3], 24
    %v720 = vld [vmem:[%s719] sm:$0x3]
    %v721 = vld [vmem:[%s719 + $0x2] sm:$0x3]
    %v722 = vld [vmem:[%s719 + $0x4] sm:$0x3]
    %v723 = vpack.c.bf16 %v716, %v716
    %v725 = vsel %vm99, %v723, 0
    %727 = vmatprep.subr.bf16.mxu0 0
    %728 = vmatpush1.bf16.msra.mxu0 %v95
    %729 = vmatprep.subr.bf16.mxu0 0
    %730 = vmatpush1.bf16.msra.mxu0 %v96
    %731 = vmatprep.subr.bf16.mxu0 0
    %732 = vmatpush1.bf16.msra.mxu0 0
    %733 = vmatprep.subr.bf16.mxu0 0
    %734 = vmatpush1.bf16.msra.mxu0 0
    %735 = vmatprep.subr.bf16.mxu0 0
    %736 = vmatpush1.bf16.msra.mxu0 0
    %737 = vmatprep.subr.bf16.mxu0 0
    %738 = vmatpush1.bf16.msra.mxu0 0
    %739 = vmatprep.subr.bf16.mxu0 0
    %740 = vmatpush1.bf16.msra.mxu0 0
    %741 = vmatprep.subr.bf16.mxu0 0
    %742 = vmatpush1.bf16.msra.mxu0 0
    %743 = vmatprep.subr.bf16.mxu0 0
    %744 = vmatpush1.bf16.msra.mxu0 0
    %745 = vmatprep.subr.bf16.mxu0 0
    %746 = vmatpush1.bf16.msra.mxu0 0
    %747 = vmatprep.subr.bf16.mxu0 0
    %748 = vmatpush1.bf16.msra.mxu0 0
    %749 = vmatprep.subr.bf16.mxu0 0
    %750 = vmatpush1.bf16.msra.mxu0 0
    %751 = vmatprep.subr.bf16.mxu0 0
    %752 = vmatpush1.bf16.msra.mxu0 0
    %753 = vmatprep.subr.bf16.mxu0 0
    %754 = vmatpush1.bf16.msra.mxu0 0
    %755 = vmatprep.subr.bf16.mxu0 0
    %756 = vmatpush1.bf16.msra.mxu0 0
    %757 = vmatprep.subr.bf16.mxu0 0
    %758 = vmatpush1.bf16.msra.mxu0 0
    %759 = vmatprep.mubr.bf16.mxu0 0
    %760 = vmatmul.mubr.bf16.gmra.mrb[0].mxu0 %v725
    %v761 = vpop.f32.mrb[0].mxu0
    %v762 = vadd.f32 0.0, %v761
    %v763 = vpop.f32.mrb[0].mxu0
    %v764 = vpop.f32.mrb[0].mxu0
    %v765 = vpop.f32.mrb[0].mxu0
    %766 = vdwg.mxu0
    %767 = vmatprep.subr.bf16.mxu0 0
    %768 = vmatpush1.bf16.msra.mxu0 %v151
    %769 = vmatprep.subr.bf16.mxu0 0
    %770 = vmatpush1.bf16.msra.mxu0 %v152
    %771 = vmatprep.subr.bf16.mxu0 0
    %772 = vmatpush1.bf16.msra.mxu0 0
    %773 = vmatprep.subr.bf16.mxu0 0
    %774 = vmatpush1.bf16.msra.mxu0 0
    %775 = vmatprep.subr.bf16.mxu0 0
    %776 = vmatpush1.bf16.msra.mxu0 0
    %777 = vmatprep.subr.bf16.mxu0 0
    %778 = vmatpush1.bf16.msra.mxu0 0
    %779 = vmatprep.subr.bf16.mxu0 0
    %780 = vmatpush1.bf16.msra.mxu0 0
    %781 = vmatprep.subr.bf16.mxu0 0
    %782 = vmatpush1.bf16.msra.mxu0 0
    %783 = vmatprep.subr.bf16.mxu0 0
    %784 = vmatpush1.bf16.msra.mxu0 0
    %785 = vmatprep.subr.bf16.mxu0 0
    %786 = vmatpush1.bf16.msra.mxu0 0
    %787 = vmatprep.subr.bf16.mxu0 0
    %788 = vmatpush1.bf16.msra.mxu0 0
    %789 = vmatprep.subr.bf16.mxu0 0
    %790 = vmatpush1.bf16.msra.mxu0 0
    %791 = vmatprep.subr.bf16.mxu0 0
    %792 = vmatpush1.bf16.msra.mxu0 0
    %793 = vmatprep.subr.bf16.mxu0 0
    %794 = vmatpush1.bf16.msra.mxu0 0
    %795 = vmatprep.subr.bf16.mxu0 0
    %796 = vmatpush1.bf16.msra.mxu0 0
    %797 = vmatprep.subr.bf16.mxu0 0
    %798 = vmatpush1.bf16.msra.mxu0 0
    %799 = vmatprep.mubr.bf16.mxu0 0
    %800 = vmatmul.mubr.bf16.gmra.mrb[0].mxu0 %v725
    %v801 = vpop.f32.mrb[0].mxu0
    %v802 = vadd.f32 0.0, %v801
    %v803 = vpop.f32.mrb[0].mxu0
    %v804 = vpop.f32.mrb[0].mxu0
    %v805 = vpop.f32.mrb[0].mxu0
    %806 = vdwg.mxu0
    %v807 = vadd.f32 %v720, %v762
    %v808 = vxor.u32 %v807, 2147483648
    %v809 = vmul.f32 %v808, 1.442695
    %v810 = vpow.pop %v809
    %v811 = vadd.f32 %v810, 1.0
    %v812 = vrcp.pop %v811
    %v813 = vmul.f32 1.0, %v812
    %v814 = vadd.f32 %v721, %v802
    %v815 = vxor.u32 %v814, 2147483648
    %v816 = vmul.f32 %v815, 1.442695
    %v817 = vpow.pop %v816
    %v818 = vadd.f32 %v817, 1.0
    %v819 = vrcp.pop %v818
    %v820 = vmul.f32 1.0, %v819
    %821 = vmatprep.subr.bf16.mxu0 0
    %822 = vmatpush1.bf16.msra.mxu0 %v217
    %823 = vmatprep.subr.bf16.mxu0 0
    %824 = vmatpush1.bf16.msra.mxu0 %v218
    %825 = vmatprep.subr.bf16.mxu0 0
    %826 = vmatpush1.bf16.msra.mxu0 0
    %827 = vmatprep.subr.bf16.mxu0 0
    %828 = vmatpush1.bf16.msra.mxu0 0
    %829 = vmatprep.subr.bf16.mxu0 0
    %830 = vmatpush1.bf16.msra.mxu0 0
    %831 = vmatprep.subr.bf16.mxu0 0
    %832 = vmatpush1.bf16.msra.mxu0 0
    %833 = vmatprep.subr.bf16.mxu0 0
    %834 = vmatpush1.bf16.msra.mxu0 0
    %835 = vmatprep.subr.bf16.mxu0 0
    %836 = vmatpush1.bf16.msra.mxu0 0
    %837 = vmatprep.subr.bf16.mxu0 0
    %838 = vmatpush1.bf16.msra.mxu0 0
    %839 = vmatprep.subr.bf16.mxu0 0
    %840 = vmatpush1.bf16.msra.mxu0 0
    %841 = vmatprep.subr.bf16.mxu0 0
    %842 = vmatpush1.bf16.msra.mxu0 0
    %843 = vmatprep.subr.bf16.mxu0 0
    %844 = vmatpush1.bf16.msra.mxu0 0
    %845 = vmatprep.subr.bf16.mxu0 0
    %846 = vmatpush1.bf16.msra.mxu0 0
    %847 = vmatprep.subr.bf16.mxu0 0
    %848 = vmatpush1.bf16.msra.mxu0 0
    %849 = vmatprep.subr.bf16.mxu0 0
    %850 = vmatpush1.bf16.msra.mxu0 0
    %851 = vmatprep.subr.bf16.mxu0 0
    %852 = vmatpush1.bf16.msra.mxu0 0
    %853 = vmatprep.mubr.bf16.mxu0 0
    %854 = vmatmul.mubr.bf16.gmra.mrb[0].mxu0 %v725
    %v855 = vpop.f32.mrb[0].mxu0
    %v856 = vadd.f32 %v80, %v855
    %v857 = vpop.f32.mrb[0].mxu0
    %v858 = vpop.f32.mrb[0].mxu0
    %v859 = vpop.f32.mrb[0].mxu0
    %860 = vdwg.mxu0
    %v861 = vmul.f32 %v813, %v856
    %v862 = vadd.f32 %v722, %v861
    %v863 = vtanh.pop %v862
    %v864 = vsub.f32 %v716, %v863
    %v865 = vmul.f32 %v820, %v864
    %v866 = vadd.f32 %v863, %v865
    %s867 = scalar_lea.vmem [#allocation9], 8
    %868 = vst.msk [vmem:[%s867] sm:$0x3] %vm267, %v866
    %s869 = scalar_lea.vmem [#allocation3], 30
    %v870 = vld [vmem:[%s869] sm:$0x3]
    %v871 = vld [vmem:[%s869 + $0x2] sm:$0x3]
    %v872 = vld [vmem:[%s869 + $0x4] sm:$0x3]
    %v873 = vpack.c.bf16 %v866, %v866
    %v875 = vsel %vm99, %v873, 0
    %877 = vmatprep.subr.bf16.mxu0 0
    %878 = vmatpush1.bf16.msra.mxu0 %v95
    %879 = vmatprep.subr.bf16.mxu0 0
    %880 = vmatpush1.bf16.msra.mxu0 %v96
    %881 = vmatprep.subr.bf16.mxu0 0
    %882 = vmatpush1.bf16.msra.mxu0 0
    %883 = vmatprep.subr.bf16.mxu0 0
    %884 = vmatpush1.bf16.msra.mxu0 0
    %885 = vmatprep.subr.bf16.mxu0 0
    %886 = vmatpush1.bf16.msra.mxu0 0
    %887 = vmatprep.subr.bf16.mxu0 0
    %888 = vmatpush1.bf16.msra.mxu0 0
    %889 = vmatprep.subr.bf16.mxu0 0
    %890 = vmatpush1.bf16.msra.mxu0 0
    %891 = vmatprep.subr.bf16.mxu0 0
    %892 = vmatpush1.bf16.msra.mxu0 0
    %893 = vmatprep.subr.bf16.mxu0 0
    %894 = vmatpush1.bf16.msra.mxu0 0
    %895 = vmatprep.subr.bf16.mxu0 0
    %896 = vmatpush1.bf16.msra.mxu0 0
    %897 = vmatprep.subr.bf16.mxu0 0
    %898 = vmatpush1.bf16.msra.mxu0 0
    %899 = vmatprep.subr.bf16.mxu0 0
    %900 = vmatpush1.bf16.msra.mxu0 0
    %901 = vmatprep.subr.bf16.mxu0 0
    %902 = vmatpush1.bf16.msra.mxu0 0
    %903 = vmatprep.subr.bf16.mxu0 0
    %904 = vmatpush1.bf16.msra.mxu0 0
    %905 = vmatprep.subr.bf16.mxu0 0
    %906 = vmatpush1.bf16.msra.mxu0 0
    %907 = vmatprep.subr.bf16.mxu0 0
    %908 = vmatpush1.bf16.msra.mxu0 0
    %909 = vmatprep.mubr.bf16.mxu0 0
    %910 = vmatmul.mubr.bf16.gmra.mrb[0].mxu0 %v875
    %v911 = vpop.f32.mrb[0].mxu0
    %v912 = vadd.f32 0.0, %v911
    %v913 = vpop.f32.mrb[0].mxu0
    %v914 = vpop.f32.mrb[0].mxu0
    %v915 = vpop.f32.mrb[0].mxu0
    %916 = vdwg.mxu0
    %917 = vmatprep.subr.bf16.mxu0 0
    %918 = vmatpush1.bf16.msra.mxu0 %v151
    %919 = vmatprep.subr.bf16.mxu0 0
    %920 = vmatpush1.bf16.msra.mxu0 %v152
    %921 = vmatprep.subr.bf16.mxu0 0
    %922 = vmatpush1.bf16.msra.mxu0 0
    %923 = vmatprep.subr.bf16.mxu0 0
    %924 = vmatpush1.bf16.msra.mxu0 0
    %925 = vmatprep.subr.bf16.mxu0 0
    %926 = vmatpush1.bf16.msra.mxu0 0
    %927 = vmatprep.subr.bf16.mxu0 0
    %928 = vmatpush1.bf16.msra.mxu0 0
    %929 = vmatprep.subr.bf16.mxu0 0
    %930 = vmatpush1.bf16.msra.mxu0 0
    %931 = vmatprep.subr.bf16.mxu0 0
    %932 = vmatpush1.bf16.msra.mxu0 0
    %933 = vmatprep.subr.bf16.mxu0 0
    %934 = vmatpush1.bf16.msra.mxu0 0
    %935 = vmatprep.subr.bf16.mxu0 0
    %936 = vmatpush1.bf16.msra.mxu0 0
    %937 = vmatprep.subr.bf16.mxu0 0
    %938 = vmatpush1.bf16.msra.mxu0 0
    %939 = vmatprep.subr.bf16.mxu0 0
    %940 = vmatpush1.bf16.msra.mxu0 0
    %941 = vmatprep.subr.bf16.mxu0 0
    %942 = vmatpush1.bf16.msra.mxu0 0
    %943 = vmatprep.subr.bf16.mxu0 0
    %944 = vmatpush1.bf16.msra.mxu0 0
    %945 = vmatprep.subr.bf16.mxu0 0
    %946 = vmatpush1.bf16.msra.mxu0 0
    %947 = vmatprep.subr.bf16.mxu0 0
    %948 = vmatpush1.bf16.msra.mxu0 0
    %949 = vmatprep.mubr.bf16.mxu0 0
    %950 = vmatmul.mubr.bf16.gmra.mrb[0].mxu0 %v875
    %v951 = vpop.f32.mrb[0].mxu0
    %v952 = vadd.f32 0.0, %v951
    %v953 = vpop.f32.mrb[0].mxu0
    %v954 = vpop.f32.mrb[0].mxu0
    %v955 = vpop.f32.mrb[0].mxu0
    %956 = vdwg.mxu0
    %v957 = vadd.f32 %v870, %v912
    %v958 = vxor.u32 %v957, 2147483648
    %v959 = vmul.f32 %v958, 1.442695
    %v960 = vpow.pop %v959
    %v961 = vadd.f32 %v960, 1.0
    %v962 = vrcp.pop %v961
    %v963 = vmul.f32 1.0, %v962
    %v964 = vadd.f32 %v871, %v952
    %v965 = vxor.u32 %v964, 2147483648
    %v966 = vmul.f32 %v965, 1.442695
    %v967 = vpow.pop %v966
    %v968 = vadd.f32 %v967, 1.0
    %v969 = vrcp.pop %v968
    %v970 = vmul.f32 1.0, %v969
    %971 = vmatprep.subr.bf16.mxu0 0
    %972 = vmatpush1.bf16.msra.mxu0 %v217
    %973 = vmatprep.subr.bf16.mxu0 0
    %974 = vmatpush1.bf16.msra.mxu0 %v218
    %975 = vmatprep.subr.bf16.mxu0 0
    %976 = vmatpush1.bf16.msra.mxu0 0
    %977 = vmatprep.subr.bf16.mxu0 0
    %978 = vmatpush1.bf16.msra.mxu0 0
    %979 = vmatprep.subr.bf16.mxu0 0
    %980 = vmatpush1.bf16.msra.mxu0 0
    %981 = vmatprep.subr.bf16.mxu0 0
    %982 = vmatpush1.bf16.msra.mxu0 0
    %983 = vmatprep.subr.bf16.mxu0 0
    %984 = vmatpush1.bf16.msra.mxu0 0
    %985 = vmatprep.subr.bf16.mxu0 0
    %986 = vmatpush1.bf16.msra.mxu0 0
    %987 = vmatprep.subr.bf16.mxu0 0
    %988 = vmatpush1.bf16.msra.mxu0 0
    %989 = vmatprep.subr.bf16.mxu0 0
    %990 = vmatpush1.bf16.msra.mxu0 0
    %991 = vmatprep.subr.bf16.mxu0 0
    %992 = vmatpush1.bf16.msra.mxu0 0
    %993 = vmatprep.subr.bf16.mxu0 0
    %994 = vmatpush1.bf16.msra.mxu0 0
    %995 = vmatprep.subr.bf16.mxu0 0
    %996 = vmatpush1.bf16.msra.mxu0 0
    %997 = vmatprep.subr.bf16.mxu0 0
    %998 = vmatpush1.bf16.msra.mxu0 0
    %999 = vmatprep.subr.bf16.mxu0 0
    %1000 = vmatpush1.bf16.msra.mxu0 0
    %1001 = vmatprep.subr.bf16.mxu0 0
    %1002 = vmatpush1.bf16.msra.mxu0 0
    %1003 = vmatprep.mubr.bf16.mxu0 0
    %1004 = vmatmul.mubr.bf16.gmra.mrb[0].mxu0 %v875
    %v1005 = vpop.f32.mrb[0].mxu0
    %v1006 = vadd.f32 %v80, %v1005
    %v1007 = vpop.f32.mrb[0].mxu0
    %v1008 = vpop.f32.mrb[0].mxu0
    %v1009 = vpop.f32.mrb[0].mxu0
    %1010 = vdwg.mxu0
    %v1011 = vmul.f32 %v963, %v1006
    %v1012 = vadd.f32 %v872, %v1011
    %v1013 = vtanh.pop %v1012
    %v1014 = vsub.f32 %v866, %v1013
    %v1015 = vmul.f32 %v970, %v1014
    %v1016 = vadd.f32 %v1013, %v1015
    %s1017 = scalar_lea.vmem [#allocation9], 10
    %1018 = vst.msk [vmem:[%s1017] sm:$0x3] %vm267, %v1016
    %s1019 = scalar_lea.vmem [#allocation3], 36
    %v1020 = vld [vmem:[%s1019] sm:$0x3]
    %v1021 = vld [vmem:[%s1019 + $0x2] sm:$0x3]
    %v1022 = vld [vmem:[%s1019 + $0x4] sm:$0x3]
    %v1023 = vpack.c.bf16 %v1016, %v1016
    %v1025 = vsel %vm99, %v1023, 0
    %1027 = vmatprep.subr.bf16.mxu0 0
    %1028 = vmatpush1.bf16.msra.mxu0 %v95
    %1029 = vmatprep.subr.bf16.mxu0 0
    %1030 = vmatpush1.bf16.msra.mxu0 %v96
    %1031 = vmatprep.subr.bf16.mxu0 0
    %1032 = vmatpush1.bf16.msra.mxu0 0
    %1033 = vmatprep.subr.bf16.mxu0 0
    %1034 = vmatpush1.bf16.msra.mxu0 0
    %1035 = vmatprep.subr.bf16.mxu0 0
    %1036 = vmatpush1.bf16.msra.mxu0 0
    %1037 = vmatprep.subr.bf16.mxu0 0
    %1038 = vmatpush1.bf16.msra.mxu0 0
    %1039 = vmatprep.subr.bf16.mxu0 0
    %1040 = vmatpush1.bf16.msra.mxu0 0
    %1041 = vmatprep.subr.bf16.mxu0 0
    %1042 = vmatpush1.bf16.msra.mxu0 0
    %1043 = vmatprep.subr.bf16.mxu0 0
    %1044 = vmatpush1.bf16.msra.mxu0 0
    %1045 = vmatprep.subr.bf16.mxu0 0
    %1046 = vmatpush1.bf16.msra.mxu0 0
    %1047 = vmatprep.subr.bf16.mxu0 0
    %1048 = vmatpush1.bf16.msra.mxu0 0
    %1049 = vmatprep.subr.bf16.mxu0 0
    %1050 = vmatpush1.bf16.msra.mxu0 0
    %1051 = vmatprep.subr.bf16.mxu0 0
    %1052 = vmatpush1.bf16.msra.mxu0 0
    %1053 = vmatprep.subr.bf16.mxu0 0
    %1054 = vmatpush1.bf16.msra.mxu0 0
    %1055 = vmatprep.subr.bf16.mxu0 0
    %1056 = vmatpush1.bf16.msra.mxu0 0
    %1057 = vmatprep.subr.bf16.mxu0 0
    %1058 = vmatpush1.bf16.msra.mxu0 0
    %1059 = vmatprep.mubr.bf16.mxu0 0
    %1060 = vmatmul.mubr.bf16.gmra.mrb[0].mxu0 %v1025
    %v1061 = vpop.f32.mrb[0].mxu0
    %v1062 = vadd.f32 0.0, %v1061
    %v1063 = vpop.f32.mrb[0].mxu0
    %v1064 = vpop.f32.mrb[0].mxu0
    %v1065 = vpop.f32.mrb[0].mxu0
    %1066 = vdwg.mxu0
    %1067 = vmatprep.subr.bf16.mxu0 0
    %1068 = vmatpush1.bf16.msra.mxu0 %v151
    %1069 = vmatprep.subr.bf16.mxu0 0
    %1070 = vmatpush1.bf16.msra.mxu0 %v152
    %1071 = vmatprep.subr.bf16.mxu0 0
    %1072 = vmatpush1.bf16.msra.mxu0 0
    %1073 = vmatprep.subr.bf16.mxu0 0
    %1074 = vmatpush1.bf16.msra.mxu0 0
    %1075 = vmatprep.subr.bf16.mxu0 0
    %1076 = vmatpush1.bf16.msra.mxu0 0
    %1077 = vmatprep.subr.bf16.mxu0 0
    %1078 = vmatpush1.bf16.msra.mxu0 0
    %1079 = vmatprep.subr.bf16.mxu0 0
    %1080 = vmatpush1.bf16.msra.mxu0 0
    %1081 = vmatprep.subr.bf16.mxu0 0
    %1082 = vmatpush1.bf16.msra.mxu0 0
    %1083 = vmatprep.subr.bf16.mxu0 0
    %1084 = vmatpush1.bf16.msra.mxu0 0
    %1085 = vmatprep.subr.bf16.mxu0 0
    %1086 = vmatpush1.bf16.msra.mxu0 0
    %1087 = vmatprep.subr.bf16.mxu0 0
    %1088 = vmatpush1.bf16.msra.mxu0 0
    %1089 = vmatprep.subr.bf16.mxu0 0
    %1090 = vmatpush1.bf16.msra.mxu0 0
    %1091 = vmatprep.subr.bf16.mxu0 0
    %1092 = vmatpush1.bf16.msra.mxu0 0
    %1093 = vmatprep.subr.bf16.mxu0 0
    %1094 = vmatpush1.bf16.msra.mxu0 0
    %1095 = vmatprep.subr.bf16.mxu0 0
    %1096 = vmatpush1.bf16.msra.mxu0 0
    %1097 = vmatprep.subr.bf16.mxu0 0
    %1098 = vmatpush1.bf16.msra.mxu0 0
    %1099 = vmatprep.mubr.bf16.mxu0 0
    %1100 = vmatmul.mubr.bf16.gmra.mrb[0].mxu0 %v1025
    %v1101 = vpop.f32.mrb[0].mxu0
    %v1102 = vadd.f32 0.0, %v1101
    %v1103 = vpop.f32.mrb[0].mxu0
    %v1104 = vpop.f32.mrb[0].mxu0
    %v1105 = vpop.f32.mrb[0].mxu0
    %1106 = vdwg.mxu0
    %v1107 = vadd.f32 %v1020, %v1062
    %v1108 = vxor.u32 %v1107, 2147483648
    %v1109 = vmul.f32 %v1108, 1.442695
    %v1110 = vpow.pop %v1109
    %v1111 = vadd.f32 %v1110, 1.0
    %v1112 = vrcp.pop %v1111
    %v1113 = vmul.f32 1.0, %v1112
    %v1114 = vadd.f32 %v1021, %v1102
    %v1115 = vxor.u32 %v1114, 2147483648
    %v1116 = vmul.f32 %v1115, 1.442695
    %v1117 = vpow.pop %v1116
    %v1118 = vadd.f32 %v1117, 1.0
    %v1119 = vrcp.pop %v1118
    %v1120 = vmul.f32 1.0, %v1119
    %1121 = vmatprep.subr.bf16.mxu0 0
    %1122 = vmatpush1.bf16.msra.mxu0 %v217
    %1123 = vmatprep.subr.bf16.mxu0 0
    %1124 = vmatpush1.bf16.msra.mxu0 %v218
    %1125 = vmatprep.subr.bf16.mxu0 0
    %1126 = vmatpush1.bf16.msra.mxu0 0
    %1127 = vmatprep.subr.bf16.mxu0 0
    %1128 = vmatpush1.bf16.msra.mxu0 0
    %1129 = vmatprep.subr.bf16.mxu0 0
    %1130 = vmatpush1.bf16.msra.mxu0 0
    %1131 = vmatprep.subr.bf16.mxu0 0
    %1132 = vmatpush1.bf16.msra.mxu0 0
    %1133 = vmatprep.subr.bf16.mxu0 0
    %1134 = vmatpush1.bf16.msra.mxu0 0
    %1135 = vmatprep.subr.bf16.mxu0 0
    %1136 = vmatpush1.bf16.msra.mxu0 0
    %1137 = vmatprep.subr.bf16.mxu0 0
    %1138 = vmatpush1.bf16.msra.mxu0 0
    %1139 = vmatprep.subr.bf16.mxu0 0
    %1140 = vmatpush1.bf16.msra.mxu0 0
    %1141 = vmatprep.subr.bf16.mxu0 0
    %1142 = vmatpush1.bf16.msra.mxu0 0
    %1143 = vmatprep.subr.bf16.mxu0 0
    %1144 = vmatpush1.bf16.msra.mxu0 0
    %1145 = vmatprep.subr.bf16.mxu0 0
    %1146 = vmatpush1.bf16.msra.mxu0 0
    %1147 = vmatprep.subr.bf16.mxu0 0
    %1148 = vmatpush1.bf16.msra.mxu0 0
    %1149 = vmatprep.subr.bf16.mxu0 0
    %1150 = vmatpush1.bf16.msra.mxu0 0
    %1151 = vmatprep.subr.bf16.mxu0 0
    %1152 = vmatpush1.bf16.msra.mxu0 0
    %1153 = vmatprep.mubr.bf16.mxu0 0
    %1154 = vmatmul.mubr.bf16.gmra.mrb[0].mxu0 %v1025
    %v1155 = vpop.f32.mrb[0].mxu0
    %v1156 = vadd.f32 %v80, %v1155
    %v1157 = vpop.f32.mrb[0].mxu0
    %v1158 = vpop.f32.mrb[0].mxu0
    %v1159 = vpop.f32.mrb[0].mxu0
    %1160 = vdwg.mxu0
    %v1161 = vmul.f32 %v1113, %v1156
    %v1162 = vadd.f32 %v1022, %v1161
    %v1163 = vtanh.pop %v1162
    %v1164 = vsub.f32 %v1016, %v1163
    %v1165 = vmul.f32 %v1120, %v1164
    %v1166 = vadd.f32 %v1163, %v1165
    %s1167 = scalar_lea.vmem [#allocation9], 12
    %1168 = vst.msk [vmem:[%s1167] sm:$0x3] %vm267, %v1166
    %s1169 = scalar_lea.vmem [#allocation3], 42
    %v1170 = vld [vmem:[%s1169] sm:$0x3]
    %v1171 = vld [vmem:[%s1169 + $0x2] sm:$0x3]
    %v1172 = vld [vmem:[%s1169 + $0x4] sm:$0x3]
    %v1173 = vpack.c.bf16 %v1166, %v1166
    %v1175 = vsel %vm99, %v1173, 0
    %1177 = vmatprep.subr.bf16.mxu0 0
    %1178 = vmatpush1.bf16.msra.mxu0 %v95
    %1179 = vmatprep.subr.bf16.mxu0 0
    %1180 = vmatpush1.bf16.msra.mxu0 %v96
    %1181 = vmatprep.subr.bf16.mxu0 0
    %1182 = vmatpush1.bf16.msra.mxu0 0
    %1183 = vmatprep.subr.bf16.mxu0 0
    %1184 = vmatpush1.bf16.msra.mxu0 0
    %1185 = vmatprep.subr.bf16.mxu0 0
    %1186 = vmatpush1.bf16.msra.mxu0 0
    %1187 = vmatprep.subr.bf16.mxu0 0
    %1188 = vmatpush1.bf16.msra.mxu0 0
    %1189 = vmatprep.subr.bf16.mxu0 0
    %1190 = vmatpush1.bf16.msra.mxu0 0
    %1191 = vmatprep.subr.bf16.mxu0 0
    %1192 = vmatpush1.bf16.msra.mxu0 0
    %1193 = vmatprep.subr.bf16.mxu0 0
    %1194 = vmatpush1.bf16.msra.mxu0 0
    %1195 = vmatprep.subr.bf16.mxu0 0
    %1196 = vmatpush1.bf16.msra.mxu0 0
    %1197 = vmatprep.subr.bf16.mxu0 0
    %1198 = vmatpush1.bf16.msra.mxu0 0
    %1199 = vmatprep.subr.bf16.mxu0 0
    %1200 = vmatpush1.bf16.msra.mxu0 0
    %1201 = vmatprep.subr.bf16.mxu0 0
    %1202 = vmatpush1.bf16.msra.mxu0 0
    %1203 = vmatprep.subr.bf16.mxu0 0
    %1204 = vmatpush1.bf16.msra.mxu0 0
    %1205 = vmatprep.subr.bf16.mxu0 0
    %1206 = vmatpush1.bf16.msra.mxu0 0
    %1207 = vmatprep.subr.bf16.mxu0 0
    %1208 = vmatpush1.bf16.msra.mxu0 0
    %1209 = vmatprep.mubr.bf16.mxu0 0
    %1210 = vmatmul.mubr.bf16.gmra.mrb[0].mxu0 %v1175
    %v1211 = vpop.f32.mrb[0].mxu0
    %v1212 = vadd.f32 0.0, %v1211
    %v1213 = vpop.f32.mrb[0].mxu0
    %v1214 = vpop.f32.mrb[0].mxu0
    %v1215 = vpop.f32.mrb[0].mxu0
    %1216 = vdwg.mxu0
    %1217 = vmatprep.subr.bf16.mxu0 0
    %1218 = vmatpush1.bf16.msra.mxu0 %v151
    %1219 = vmatprep.subr.bf16.mxu0 0
    %1220 = vmatpush1.bf16.msra.mxu0 %v152
    %1221 = vmatprep.subr.bf16.mxu0 0
    %1222 = vmatpush1.bf16.msra.mxu0 0
    %1223 = vmatprep.subr.bf16.mxu0 0
    %1224 = vmatpush1.bf16.msra.mxu0 0
    %1225 = vmatprep.subr.bf16.mxu0 0
    %1226 = vmatpush1.bf16.msra.mxu0 0
    %1227 = vmatprep.subr.bf16.mxu0 0
    %1228 = vmatpush1.bf16.msra.mxu0 0
    %1229 = vmatprep.subr.bf16.mxu0 0
    %1230 = vmatpush1.bf16.msra.mxu0 0
    %1231 = vmatprep.subr.bf16.mxu0 0
    %1232 = vmatpush1.bf16.msra.mxu0 0
    %1233 = vmatprep.subr.bf16.mxu0 0
    %1234 = vmatpush1.bf16.msra.mxu0 0
    %1235 = vmatprep.subr.bf16.mxu0 0
    %1236 = vmatpush1.bf16.msra.mxu0 0
    %1237 = vmatprep.subr.bf16.mxu0 0
    %1238 = vmatpush1.bf16.msra.mxu0 0
    %1239 = vmatprep.subr.bf16.mxu0 0
    %1240 = vmatpush1.bf16.msra.mxu0 0
    %1241 = vmatprep.subr.bf16.mxu0 0
    %1242 = vmatpush1.bf16.msra.mxu0 0
    %1243 = vmatprep.subr.bf16.mxu0 0
    %1244 = vmatpush1.bf16.msra.mxu0 0
    %1245 = vmatprep.subr.bf16.mxu0 0
    %1246 = vmatpush1.bf16.msra.mxu0 0
    %1247 = vmatprep.subr.bf16.mxu0 0
    %1248 = vmatpush1.bf16.msra.mxu0 0
    %1249 = vmatprep.mubr.bf16.mxu0 0
    %1250 = vmatmul.mubr.bf16.gmra.mrb[0].mxu0 %v1175
    %v1251 = vpop.f32.mrb[0].mxu0
    %v1252 = vadd.f32 0.0, %v1251
    %v1253 = vpop.f32.mrb[0].mxu0
    %v1254 = vpop.f32.mrb[0].mxu0
    %v1255 = vpop.f32.mrb[0].mxu0
    %1256 = vdwg.mxu0
    %v1257 = vadd.f32 %v1170, %v1212
    %v1258 = vxor.u32 %v1257, 2147483648
    %v1259 = vmul.f32 %v1258, 1.442695
    %v1260 = vpow.pop %v1259
    %v1261 = vadd.f32 %v1260, 1.0
    %v1262 = vrcp.pop %v1261
    %v1263 = vmul.f32 1.0, %v1262
    %v1264 = vadd.f32 %v1171, %v1252
    %v1265 = vxor.u32 %v1264, 2147483648
    %v1266 = vmul.f32 %v1265, 1.442695
    %v1267 = vpow.pop %v1266
    %v1268 = vadd.f32 %v1267, 1.0
    %v1269 = vrcp.pop %v1268
    %v1270 = vmul.f32 1.0, %v1269
    %1271 = vmatprep.subr.bf16.mxu0 0
    %1272 = vmatpush1.bf16.msra.mxu0 %v217
    %1273 = vmatprep.subr.bf16.mxu0 0
    %1274 = vmatpush1.bf16.msra.mxu0 %v218
    %1275 = vmatprep.subr.bf16.mxu0 0
    %1276 = vmatpush1.bf16.msra.mxu0 0
    %1277 = vmatprep.subr.bf16.mxu0 0
    %1278 = vmatpush1.bf16.msra.mxu0 0
    %1279 = vmatprep.subr.bf16.mxu0 0
    %1280 = vmatpush1.bf16.msra.mxu0 0
    %1281 = vmatprep.subr.bf16.mxu0 0
    %1282 = vmatpush1.bf16.msra.mxu0 0
    %1283 = vmatprep.subr.bf16.mxu0 0
    %1284 = vmatpush1.bf16.msra.mxu0 0
    %1285 = vmatprep.subr.bf16.mxu0 0
    %1286 = vmatpush1.bf16.msra.mxu0 0
    %1287 = vmatprep.subr.bf16.mxu0 0
    %1288 = vmatpush1.bf16.msra.mxu0 0
    %1289 = vmatprep.subr.bf16.mxu0 0
    %1290 = vmatpush1.bf16.msra.mxu0 0
    %1291 = vmatprep.subr.bf16.mxu0 0
    %1292 = vmatpush1.bf16.msra.mxu0 0
    %1293 = vmatprep.subr.bf16.mxu0 0
    %1294 = vmatpush1.bf16.msra.mxu0 0
    %1295 = vmatprep.subr.bf16.mxu0 0
    %1296 = vmatpush1.bf16.msra.mxu0 0
    %1297 = vmatprep.subr.bf16.mxu0 0
    %1298 = vmatpush1.bf16.msra.mxu0 0
    %1299 = vmatprep.subr.bf16.mxu0 0
    %1300 = vmatpush1.bf16.msra.mxu0 0
    %1301 = vmatprep.subr.bf16.mxu0 0
    %1302 = vmatpush1.bf16.msra.mxu0 0
    %1303 = vmatprep.mubr.bf16.mxu0 0
    %1304 = vmatmul.mubr.bf16.gmra.mrb[0].mxu0 %v1175
    %v1305 = vpop.f32.mrb[0].mxu0
    %v1306 = vadd.f32 %v80, %v1305
    %v1307 = vpop.f32.mrb[0].mxu0
    %v1308 = vpop.f32.mrb[0].mxu0
    %v1309 = vpop.f32.mrb[0].mxu0
    %1310 = vdwg.mxu0
    %v1311 = vmul.f32 %v1263, %v1306
    %v1312 = vadd.f32 %v1172, %v1311
    %v1313 = vtanh.pop %v1312
    %v1314 = vsub.f32 %v1166, %v1313
    %v1315 = vmul.f32 %v1270, %v1314
    %v1316 = vadd.f32 %v1313, %v1315
    %s1317 = scalar_lea.vmem [#allocation9], 14
    %1318 = vst.msk [vmem:[%s1317] sm:$0x3] %vm267, %v1316
    %1319 = vst.msk [vmem:[#allocation2] sm:$0x3] %vm267, %v1316
    // Predicated region
    $region30: #{encoder_forward.3} parent=1 // pred_check
      _
    $region31: #{encoder_forward.3} parent=1 // pred_check_branch
      %1321 = sbr.rel (0) target = $region33
    $region32: #{encoder_forward.3} parent=1 // pred_region
      %s1323 = ssub.s32 256, 256
      %1324 = vsyncadd [#allocation5], %s1323
      %s1325 = sshll.u32 [#allocation9], 4
      %s1326 = int_to_ptr.vmem [resolvable:$true] %s1325
      %1331 = dma.vmem_to_hbm [thread:$0]  %s1326, 256, %s3, [#allocation5], 32, 32, 2
    $region33: #{encoder_forward.3} parent=1 // pred_fallthru
      _
    // Predicated region
    $region34: #{encoder_forward.3} parent=1 // pred_check
      _
    $region35: #{encoder_forward.3} parent=1 // pred_check_branch
      %1333 = sbr.rel (0) target = $region37
    $region36: #{encoder_forward.3} parent=1 // pred_region
      %1334 = dma.done [#allocation5], 256
    $region37: #{encoder_forward.3} parent=1 // pred_fallthru
      _
    %1335 = vsyncpa [#allocation4], 1
    %1336 = vsyncpa [#allocation7], 1
    %1337 = vsyncpa [#allocation5], 1

</llo_original>
